<compile_context>
chip_gen: v7x
topology: tpu7x:2x2x1
jax: 0.10.0
libtpu: 0.0.40
codegen_flags: <defaults>
</compile_context>

<pallas_src>
import functools

import jax
import jax.numpy as jnp
from jax.experimental import pallas as pl
from jax.experimental.pallas import tpu as pltpu


def _round_up(x, m):
    return ((x + m - 1) // m) * m


def _align_k(k):
    # Contraction (channel) dim: make it MXU-friendly.  <128 -> pad to a full
    # lane tile; >=128 -> just keep it sublane-aligned.
    return 128 if k < 128 else _round_up(k, 8)


def _vmem_budget_bytes():
    cap = 64 << 20
    try:
        cap = int(getattr(pltpu.get_tpu_info(), "vmem_capacity_bytes", cap))
    except Exception:
        pass
    # ~75% of physical VMEM, capped at 100 MiB: ~96 MiB on v5e/v6e (128 MiB),
    # ~48 MiB on v7x (64 MiB) -- leaves headroom for compiler scratch.
    return int(min(cap * 3 // 4, 100 << 20))


# ----------------------------------------------------------------------------
# Fused conv(stride==1) + folded BN kernel.
# ----------------------------------------------------------------------------
def _fused_conv_bn_kernel(x_ref, w_ref, scale_ref, bias_ref, o_ref, *,
                          kh, kw, dilation, th, wo_t):
    # x_ref:     (1, Hp, Wp, C_in)       full padded image (VMEM resident)
    # w_ref:     (kh*kw, C_in, C_out_p)  resident flattened conv weight
    # scale_ref: (1, C_out_p) f32        gamma / sqrt(var + eps)
    # bias_ref:  (1, C_out_p) f32        beta - mean * scale
    # o_ref:     (1, th, wo_t, C_out_p)  output row-tile
    hb = pl.program_id(1)
    c_in = x_ref.shape[-1]
    n_out = o_ref.shape[-1]
    row_base = hb * th
    if th % 8 == 0:
        row_base = pl.multiple_of(row_base, th)

    acc = None
    for i in range(kh):
        for j in range(kw):
            patch = x_ref[0,
                          pl.ds(row_base + i * dilation, th),
                          pl.ds(j * dilation, wo_t),
                          :]
            patch = patch.reshape(th * wo_t, c_in)
            part = jnp.dot(patch, w_ref[i * kw + j],
                           preferred_element_type=jnp.float32)
            acc = part if acc is None else acc + part

    out = acc * scale_ref[...] + bias_ref[...]
    o_ref[0] = out.reshape(th, wo_t, n_out).astype(o_ref.dtype)


def _fused_conv_bn(x_nhwc, weight, scale, bias, out_dtype, *,
                   kh, kw, padding, dilation, h_out, w_out,
                   mxu_dtype, vmem_budget):
    """Fully fused conv(stride=1)+BN.  Returns NHWC output or None (no fit)."""
    n, h, w, c_in = x_nhwc.shape
    c_out = weight.shape[0]
    c_in_p = _align_k(c_in)
    n_pad = _round_up(c_out, 128)
    in_item = jnp.dtype(mxu_dtype).itemsize
    out_item = jnp.dtype(out_dtype).itemsize
    size_budget = (vmem_budget * 9) // 10

    wo_t = _round_up(w_out, 8)                 # lane-friendly W tile
    wp_t = wo_t + dilation * (kw - 1)
    halo = dilation * (kh - 1)

    # -------- pick the output-row tile th from the VMEM budget ---------------
    slab_row = _round_up(wp_t, 8) * c_in_p * in_item      # one padded input row
    w_bytes = 2 * kh * kw * c_in_p * n_pad * in_item + 16 * n_pad
    fixed = w_bytes + 2 * (h_out + halo) * slab_row       # resident W + slab x2
    row_out = wo_t * n_pad * (2 * out_item + 2 * 4)       # out dbl-buf + f32 acc
    row_in = 2 * wo_t * c_in_p * 4                        # on-chip patch temps
    per_th = row_out + row_in + 2 * slab_row              # tile-rounding slack
    avail = size_budget - fixed
    if avail < per_th:
        return None                                        # fall back to im2col
    th = int(min(h_out, max(1, avail // per_th)))
    if n == 1 and th >= h_out and h_out >= 2:
        th = (h_out + 1) // 2                  # >=2 grid steps for 2-TC chips
    ho_pad = _round_up(h_out, th)
    n_hb = ho_pad // th
    hp_t = ho_pad + halo

    # -------- pad input (conv zero-padding + tile rounding + channel pad) ----
    pad_h_hi = hp_t - h - padding
    pad_w_hi = wp_t - w - padding
    if pad_h_hi < 0 or pad_w_hi < 0:
        return None
    xp = jnp.pad(x_nhwc, ((0, 0), (padding, pad_h_hi),
                          (padding, pad_w_hi), (0, c_in_p - c_in)))
    xp = xp.astype(mxu_dtype)

    # weight (C_out, C_in, kh, kw) -> (kh*kw, C_in_p, C_out_p)
    w_mat = jnp.transpose(weight, (2, 3, 1, 0))
    w_mat = jnp.pad(w_mat, ((0, 0), (0, 0),
                            (0, c_in_p - c_in), (0, n_pad - c_out)))
    w_mat = w_mat.reshape(kh * kw, c_in_p, n_pad).astype(mxu_dtype)
    scale_p = jnp.pad(scale, (0, n_pad - c_out)).reshape(1, n_pad)
    bias_p = jnp.pad(bias, (0, n_pad - c_out)).reshape(1, n_pad)

    kernel = functools.partial(_fused_conv_bn_kernel, kh=kh, kw=kw,
                               dilation=dilation, th=th, wo_t=wo_t)
    cost = pl.CostEstimate(
        flops=2 * n * ho_pad * wo_t * n_pad * kh * kw * c_in_p,
        transcendentals=0,
        bytes_accessed=(n * hp_t * wp_t * c_in_p * in_item
                        + kh * kw * c_in_p * n_pad * in_item
                        + n * ho_pad * wo_t * n_pad * out_item))

    out = pl.pallas_call(
        kernel,
        out_shape=jax.ShapeDtypeStruct((n, ho_pad, wo_t, n_pad), out_dtype),
        grid_spec=pltpu.PrefetchScalarGridSpec(
            num_scalar_prefetch=0,
            grid=(n, n_hb),
            in_specs=[
                pl.BlockSpec((1, hp_t, wp_t, c_in_p), lambda b, hb: (b, 0, 0, 0)),
                pl.BlockSpec((kh * kw, c_in_p, n_pad), lambda b, hb: (0, 0, 0)),
                pl.BlockSpec((1, n_pad), lambda b, hb: (0, 0)),
                pl.BlockSpec((1, n_pad), lambda b, hb: (0, 0)),
            ],
            out_specs=pl.BlockSpec((1, th, wo_t, n_pad),
                                   lambda b, hb: (b, hb, 0, 0)),
        ),
        compiler_params=pltpu.CompilerParams(
            dimension_semantics=("parallel", "parallel"),
            vmem_limit_bytes=vmem_budget),
        cost_estimate=cost,
    )(xp, w_mat, scale_p, bias_p)
    return out[:, :h_out, :w_out, :c_out]


# ----------------------------------------------------------------------------
# GEMM (+ folded BN) kernels: patches (M, K) @ W (K, C_out) * scale + bias.
# ----------------------------------------------------------------------------
def _gemm_bn_kernel(a_ref, w_ref, scale_ref, bias_ref, o_ref):
    acc = jnp.dot(a_ref[...], w_ref[...], preferred_element_type=jnp.float32)
    o_ref[...] = (acc * scale_ref[...] + bias_ref[...]).astype(o_ref.dtype)


def _gemm_bn_acc_kernel(a_ref, w_ref, scale_ref, bias_ref, o_ref, acc_ref):
    k = pl.program_id(2)

    @pl.when(k == 0)
    def _():
        acc_ref[...] = jnp.zeros_like(acc_ref)

    acc_ref[...] += jnp.dot(a_ref[...], w_ref[...],
                            preferred_element_type=jnp.float32)

    @pl.when(k == pl.num_programs(2) - 1)
    def _():
        o_ref[...] = (acc_ref[...] * scale_ref[...]
                      + bias_ref[...]).astype(o_ref.dtype)


def _gemm_bn(patches, w_mat, scale, bias, out_dtype, *, mxu_dtype, vmem_budget):
    m, k = patches.shape
    c_out = w_mat.shape[1]
    k_p = _align_k(k)
    n_pad = _round_up(c_out, 128)
    in_item = jnp.dtype(mxu_dtype).itemsize
    out_item = jnp.dtype(out_dtype).itemsize
    size_budget = (vmem_budget * 9) // 10

    patches = patches.astype(mxu_dtype)
    w_mat = w_mat.astype(mxu_dtype)
    if k_p != k:
        patches = jnp.pad(patches, ((0, 0), (0, k_p - k)))
    if k_p != k or n_pad != c_out:
        w_mat = jnp.pad(w_mat, ((0, k_p - k), (0, n_pad - c_out)))
    scale_p = jnp.pad(scale, (0, n_pad - c_out)).reshape(1, n_pad)
    bias_p = jnp.pad(bias, (0, n_pad - c_out)).reshape(1, n_pad)

    w_bytes = k_p * n_pad * in_item
    if 2 * w_bytes <= size_budget // 3:
        # ---- weight resident in VMEM, single pass over the activations ------
        per_row = (2 * _round_up(k_p, 128) * in_item     # A double-buffer
                   + 2 * n_pad * out_item                # out double-buffer
                   + 3 * n_pad * 4)                      # f32 intermediates
        tm = ((size_budget - 2 * w_bytes) // per_row) // 16 * 16
        tm = int(max(16, min(tm, 2048, _round_up(m, 16))))
        m_pad = _round_up(m, tm)
        if m_pad != m:
            patches = jnp.pad(patches, ((0, m_pad - m), (0, 0)))
        cost = pl.CostEstimate(
            flops=2 * m_pad * k_p * n_pad, transcendentals=0,
            bytes_accessed=(m_pad * k_p * in_item + w_bytes
                            + m_pad * n_pad * out_item))
        out = pl.pallas_call(
            _gemm_bn_kernel,
            out_shape=jax.ShapeDtypeStruct((m_pad, n_pad), out_dtype),
            grid_spec=pltpu.PrefetchScalarGridSpec(
                num_scalar_prefetch=0,
                grid=(m_pad // tm,),
                in_specs=[
                    pl.BlockSpec((tm, k_p), lambda i: (i, 0)),
                    pl.BlockSpec((k_p, n_pad), lambda i: (0, 0)),
                    pl.BlockSpec((1, n_pad), lambda i: (0, 0)),
                    pl.BlockSpec((1, n_pad), lambda i: (0, 0)),
                ],
                out_specs=pl.BlockSpec((tm, n_pad), lambda i: (i, 0)),
            ),
            compiler_params=pltpu.CompilerParams(
                dimension_semantics=("parallel",),
                vmem_limit_bytes=vmem_budget),
            cost_estimate=cost,
        )(patches, w_mat, scale_p, bias_p)
        return out[:m, :c_out]

    # ---- fallback: tile K / C_out with an f32 accumulator across K ----------
    def pick_tile(total, cands):
        for c in cands:
            if c <= total and total % c == 0:
                return c
        return cands[-1]

    k128 = _round_up(k_p, 128)
    tk = pick_tile(k128, (2048, 1024, 768, 512, 384, 256, 128))
    tn = pick_tile(n_pad, (512, 384, 256, 128))
    tm = int(min(1024, _round_up(m, 16)))
    m_pad = _round_up(m, tm)
    k_pad = k128
    if m_pad != m or k_pad != k_p:
        patches = jnp.pad(patches, ((0, m_pad - m), (0, k_pad - k_p)))
    if k_pad != k_p:
        w_mat = jnp.pad(w_mat, ((0, k_pad - k_p), (0, 0)))
    grid = (m_pad // tm, n_pad // tn, k_pad // tk)
    cost = pl.CostEstimate(
        flops=2 * m_pad * k_pad * n_pad, transcendentals=0,
        bytes_accessed=(grid[1] * m_pad * k_pad * in_item     # A re-read per N tile
                        + k_pad * n_pad * in_item
                        + m_pad * n_pad * out_item))
    out = pl.pallas_call(
        _gemm_bn_acc_kernel,
        out_shape=jax.ShapeDtypeStruct((m_pad, n_pad), out_dtype),
        grid_spec=pltpu.PrefetchScalarGridSpec(
            num_scalar_prefetch=0,
            grid=grid,
            in_specs=[
                pl.BlockSpec((tm, tk), lambda i, j, kk: (i, kk)),
                pl.BlockSpec((tk, tn), lambda i, j, kk: (kk, j)),
                pl.BlockSpec((1, tn), lambda i, j, kk: (0, j)),
                pl.BlockSpec((1, tn), lambda i, j, kk: (0, j)),
            ],
            out_specs=pl.BlockSpec((tm, tn), lambda i, j, kk: (i, j)),
            scratch_shapes=[pltpu.VMEM((tm, tn), jnp.float32)],
        ),
        compiler_params=pltpu.CompilerParams(
            dimension_semantics=("parallel", "parallel", "arbitrary"),
            vmem_limit_bytes=vmem_budget),
        cost_estimate=cost,
    )(patches, w_mat, scale_p, bias_p)
    return out[:m, :c_out]


# ----------------------------------------------------------------------------
# im2col fallback (only for stride>1 non-1x1 convs or oversized images).
# ----------------------------------------------------------------------------
def _im2col_nhwc(x_nhwc, kh, kw, stride, padding, dilation):
    n, h, w, c = x_nhwc.shape
    xp = jnp.pad(x_nhwc, ((0, 0), (padding, padding), (padding, padding), (0, 0)))
    h_out = (h + 2 * padding - dilation * (kh - 1) - 1) // stride + 1
    w_out = (w + 2 * padding - dilation * (kw - 1) - 1) // stride + 1
    cols = []
    for i in range(kh):
        for j in range(kw):
            ii, jj = i * dilation, j * dilation
            cols.append(xp[:,
                           ii: ii + stride * (h_out - 1) + 1: stride,
                           jj: jj + stride * (w_out - 1) + 1: stride,
                           :])
    patches = jnp.stack(cols, axis=3).reshape(n * h_out * w_out, kh * kw * c)
    return patches, h_out, w_out


# ----------------------------------------------------------------------------
# Public entry point: BasicConv2d forward = bn(conv(x))  (no relu in forward).
# ----------------------------------------------------------------------------
def basic_conv2d(x, weight, gamma, beta, running_mean, running_var, *,
                 stride=1, padding=0, dilation=1, eps=1e-5,
                 data_format="NCHW", use_bf16=True):
    if data_format == "NCHW":
        n, c_in, h, w = x.shape
        x_nhwc = jnp.transpose(x, (0, 2, 3, 1))
    elif data_format == "NHWC":
        n, h, w, c_in = x.shape
        x_nhwc = x
    else:
        raise ValueError(data_format)

    c_out, _, kh, kw = weight.shape
    out_dtype = x.dtype
    mxu_dtype = jnp.bfloat16 if use_bf16 else x.dtype
    vmem_budget = _vmem_budget_bytes()

    # Folded BatchNorm (eval mode, running statistics) in f32.
    inv_std = 1.0 / jnp.sqrt(running_var.astype(jnp.float32) + eps)
    scale = gamma.astype(jnp.float32) * inv_std
    bias = beta.astype(jnp.float32) - running_mean.astype(jnp.float32) * scale

    h_out = (h + 2 * padding - dilation * (kh - 1) - 1) // stride + 1
    w_out = (w + 2 * padding - dilation * (kw - 1) - 1) // stride + 1

    if kh == 1 and kw == 1:
        # 1x1 conv: plain GEMM over (N*Ho*Wo, C_in), no patch materialization.
        xp = x_nhwc
        if padding:
            xp = jnp.pad(xp, ((0, 0), (padding, padding),
                              (padding, padding), (0, 0)))
        if stride != 1:
            xp = xp[:, ::stride, ::stride, :]
        patches = xp.reshape(n * h_out * w_out, c_in)
        w_mat = weight.reshape(c_out, c_in).T
        out2d = _gemm_bn(patches, w_mat, scale, bias, out_dtype,
                         mxu_dtype=mxu_dtype, vmem_budget=vmem_budget)
        out_nhwc = out2d.reshape(n, h_out, w_out, c_out)
    else:
        out_nhwc = None
        if stride == 1:
            out_nhwc = _fused_conv_bn(
                x_nhwc, weight, scale, bias, out_dtype,
                kh=kh, kw=kw, padding=padding, dilation=dilation,
                h_out=h_out, w_out=w_out,
                mxu_dtype=mxu_dtype, vmem_budget=vmem_budget)
        if out_nhwc is None:
            patches, _, _ = _im2col_nhwc(x_nhwc, kh, kw, stride, padding,
                                         dilation)
            w_mat = jnp.transpose(weight, (2, 3, 1, 0)).reshape(
                kh * kw * c_in, c_out)
            out2d = _gemm_bn(patches, w_mat, scale, bias, out_dtype,
                             mxu_dtype=mxu_dtype, vmem_budget=vmem_budget)
            out_nhwc = out2d.reshape(n, h_out, w_out, c_out)

    if data_format == "NCHW":
        return jnp.transpose(out_nhwc, (0, 3, 1, 2))
    return out_nhwc


def _reference(x, weight, gamma, beta, running_mean, running_var,
               *, stride, padding, dilation, eps=1e-5):
    y = jax.lax.conv_general_dilated(
        x, weight,
        window_strides=(stride, stride),
        padding=[(padding, padding), (padding, padding)],
        rhs_dilation=(dilation, dilation),
        dimension_numbers=("NCHW", "OIHW", "NCHW"),
    )
    s = (gamma / jnp.sqrt(running_var + eps)).reshape(1, -1, 1, 1)
    b = (beta - running_mean * gamma / jnp.sqrt(running_var + eps)).reshape(1, -1, 1, 1)
    return y * s + b


if __name__ == "__main__":
    key = jax.random.PRNGKey(0)
    ks = jax.random.split(key, 8)

    N, C_in, H, W = 2, 4, 16, 16
    C_out = 8

    x = jax.random.normal(ks[0], (N, C_in, H, W), dtype=jnp.float32)
    gamma = 1.0 + 0.1 * jax.random.normal(ks[1], (C_out,), dtype=jnp.float32)
    beta = 0.1 * jax.random.normal(ks[2], (C_out,), dtype=jnp.float32)
    running_mean = 0.1 * jax.random.normal(ks[3], (C_out,), dtype=jnp.float32)
    running_var = jnp.abs(jax.random.normal(ks[4], (C_out,), dtype=jnp.float32)) + 0.5

    # --- 3x3, pad=1: fully fused conv+BN path --------------------------------
    w3 = 0.1 * jax.random.normal(ks[5], (C_out, C_in, 3, 3), dtype=jnp.float32)
    fn3 = jax.jit(functools.partial(basic_conv2d, stride=1, padding=1, dilation=1))
    out3 = jax.block_until_ready(fn3(x, w3, gamma, beta, running_mean, running_var))
    ref3 = _reference(x, w3, gamma, beta, running_mean, running_var,
                      stride=1, padding=1, dilation=1)
    assert out3.shape == ref3.shape == (N, C_out, H, W)
    assert jnp.allclose(out3, ref3, atol=5e-2, rtol=5e-2), (
        float(jnp.max(jnp.abs(out3 - ref3))))

    # --- 1x1: weight-resident single-pass GEMM path (no im2col) --------------
    w1 = 0.1 * jax.random.normal(ks[6], (C_out, C_in, 1, 1), dtype=jnp.float32)
    fn1 = jax.jit(functools.partial(basic_conv2d, stride=1, padding=0, dilation=1))
    out1 = jax.block_until_ready(fn1(x, w1, gamma, beta, running_mean, running_var))
    ref1 = _reference(x, w1, gamma, beta, running_mean, running_var,
                      stride=1, padding=0, dilation=1)
    assert out1.shape == ref1.shape == (N, C_out, H, W)
    assert jnp.allclose(out1, ref1, atol=5e-2, rtol=5e-2), (
        float(jnp.max(jnp.abs(out1 - ref1))))

    print("KERNEL_OK")
</pallas_src>

<mosaic_0001>
module attributes {stable_mosaic.version = 11 : i64} {
  func.func @_fused_conv_bn_kernel(%arg0: i32, %arg1: i32, %arg2: memref<1x18x18x128xbf16, #tpu.memory_space<vmem>>, %arg3: memref<9x128x128xbf16, #tpu.memory_space<vmem>>, %arg4: memref<1x128xf32, #tpu.memory_space<vmem>>, %arg5: memref<1x128xf32, #tpu.memory_space<vmem>>, %arg6: memref<1x16x16x128xf32, #tpu.memory_space<vmem>>) attributes {dimension_semantics = [#tpu.dimension_semantics<parallel>, #tpu.dimension_semantics<parallel>], iteration_bounds = array<i64: 2, 1>, scalar_prefetch = 0 : i64, scratch_operands = 0 : i64, tpu.core_type = #tpu.core_type<tc>, window_params = [{transform_indices = @transform_0, window_bounds = array<i64: 1, 18, 18, 128>}, {pipeline_mode = #tpu.pipeline_mode<synchronous>, transform_indices = @transform_1, window_bounds = array<i64: 9, 128, 128>}, {pipeline_mode = #tpu.pipeline_mode<synchronous>, transform_indices = @transform_2, window_bounds = array<i64: 1, 128>}, {pipeline_mode = #tpu.pipeline_mode<synchronous>, transform_indices = @transform_3, window_bounds = array<i64: 1, 128>}, {transform_indices = @transform_4, window_bounds = array<i64: 1, 16, 16, 128>}]} {
    %c16_i32 = arith.constant 16 : i32
    %0 = arith.muli %arg1, %c16_i32 : i32
    %1 = tpu.assume_multiple %0, 16 : i32
    %c0_i32 = arith.constant 0 : i32
    %2 = arith.addi %1, %c0_i32 : i32
    %c0 = arith.constant 0 : index
    %3 = arith.index_cast %2 : i32 to index
    %c0_0 = arith.constant 0 : index
    %c0_1 = arith.constant 0 : index
    %4 = vector.load %arg2[%c0, %3, %c0_0, %c0_1] : memref<1x18x18x128xbf16, #tpu.memory_space<vmem>>, vector<1x16x16x128xbf16>
    %5 = vector.shape_cast %4 : vector<1x16x16x128xbf16> to vector<16x16x128xbf16>
    %6 = vector.shape_cast %5 : vector<16x16x128xbf16> to vector<256x128xbf16>
    %c0_2 = arith.constant 0 : index
    %c0_3 = arith.constant 0 : index
    %c0_4 = arith.constant 0 : index
    %7 = vector.load %arg3[%c0_2, %c0_3, %c0_4] : memref<9x128x128xbf16, #tpu.memory_space<vmem>>, vector<1x128x128xbf16>
    %8 = vector.shape_cast %7 : vector<1x128x128xbf16> to vector<128x128xbf16>
    %cst = arith.constant dense<0.000000e+00> : vector<256x128xf32>
    %9 = tpu.matmul %6, %8, %cst {dimension_numbers = #tpu.dot_dimension_numbers<[1], [0], [0], [1], [0, 0, 1, 1], [], []>} : vector<256x128xbf16>, vector<128x128xbf16>, vector<256x128xf32> -> vector<256x128xf32>
    %c0_i32_5 = arith.constant 0 : i32
    %10 = arith.addi %1, %c0_i32_5 : i32
    %c0_6 = arith.constant 0 : index
    %11 = arith.index_cast %10 : i32 to index
    %c1 = arith.constant 1 : index
    %c0_7 = arith.constant 0 : index
    %12 = vector.load %arg2[%c0_6, %11, %c1, %c0_7] : memref<1x18x18x128xbf16, #tpu.memory_space<vmem>>, vector<1x16x16x128xbf16>
    %13 = vector.shape_cast %12 : vector<1x16x16x128xbf16> to vector<16x16x128xbf16>
    %14 = vector.shape_cast %13 : vector<16x16x128xbf16> to vector<256x128xbf16>
    %c1_8 = arith.constant 1 : index
    %c0_9 = arith.constant 0 : index
    %c0_10 = arith.constant 0 : index
    %15 = vector.load %arg3[%c1_8, %c0_9, %c0_10] : memref<9x128x128xbf16, #tpu.memory_space<vmem>>, vector<1x128x128xbf16>
    %16 = vector.shape_cast %15 : vector<1x128x128xbf16> to vector<128x128xbf16>
    %cst_11 = arith.constant dense<0.000000e+00> : vector<256x128xf32>
    %17 = tpu.matmul %14, %16, %cst_11 {dimension_numbers = #tpu.dot_dimension_numbers<[1], [0], [0], [1], [0, 0, 1, 1], [], []>} : vector<256x128xbf16>, vector<128x128xbf16>, vector<256x128xf32> -> vector<256x128xf32>
    %18 = arith.addf %9, %17 : vector<256x128xf32>
    %c0_i32_12 = arith.constant 0 : i32
    %19 = arith.addi %1, %c0_i32_12 : i32
    %c0_13 = arith.constant 0 : index
    %20 = arith.index_cast %19 : i32 to index
    %c2 = arith.constant 2 : index
    %c0_14 = arith.constant 0 : index
    %21 = vector.load %arg2[%c0_13, %20, %c2, %c0_14] : memref<1x18x18x128xbf16, #tpu.memory_space<vmem>>, vector<1x16x16x128xbf16>
    %22 = vector.shape_cast %21 : vector<1x16x16x128xbf16> to vector<16x16x128xbf16>
    %23 = vector.shape_cast %22 : vector<16x16x128xbf16> to vector<256x128xbf16>
    %c2_15 = arith.constant 2 : index
    %c0_16 = arith.constant 0 : index
    %c0_17 = arith.constant 0 : index
    %24 = vector.load %arg3[%c2_15, %c0_16, %c0_17] : memref<9x128x128xbf16, #tpu.memory_space<vmem>>, vector<1x128x128xbf16>
    %25 = vector.shape_cast %24 : vector<1x128x128xbf16> to vector<128x128xbf16>
    %cst_18 = arith.constant dense<0.000000e+00> : vector<256x128xf32>
    %26 = tpu.matmul %23, %25, %cst_18 {dimension_numbers = #tpu.dot_dimension_numbers<[1], [0], [0], [1], [0, 0, 1, 1], [], []>} : vector<256x128xbf16>, vector<128x128xbf16>, vector<256x128xf32> -> vector<256x128xf32>
    %27 = arith.addf %18, %26 : vector<256x128xf32>
    %c1_i32 = arith.constant 1 : i32
    %28 = arith.addi %1, %c1_i32 : i32
    %c0_19 = arith.constant 0 : index
    %29 = arith.index_cast %28 : i32 to index
    %c0_20 = arith.constant 0 : index
    %c0_21 = arith.constant 0 : index
    %30 = vector.load %arg2[%c0_19, %29, %c0_20, %c0_21] : memref<1x18x18x128xbf16, #tpu.memory_space<vmem>>, vector<1x16x16x128xbf16>
    %31 = vector.shape_cast %30 : vector<1x16x16x128xbf16> to vector<16x16x128xbf16>
    %32 = vector.shape_cast %31 : vector<16x16x128xbf16> to vector<256x128xbf16>
    %c3 = arith.constant 3 : index
    %c0_22 = arith.constant 0 : index
    %c0_23 = arith.constant 0 : index
    %33 = vector.load %arg3[%c3, %c0_22, %c0_23] : memref<9x128x128xbf16, #tpu.memory_space<vmem>>, vector<1x128x128xbf16>
    %34 = vector.shape_cast %33 : vector<1x128x128xbf16> to vector<128x128xbf16>
    %cst_24 = arith.constant dense<0.000000e+00> : vector<256x128xf32>
    %35 = tpu.matmul %32, %34, %cst_24 {dimension_numbers = #tpu.dot_dimension_numbers<[1], [0], [0], [1], [0, 0, 1, 1], [], []>} : vector<256x128xbf16>, vector<128x128xbf16>, vector<256x128xf32> -> vector<256x128xf32>
    %36 = arith.addf %27, %35 : vector<256x128xf32>
    %c1_i32_25 = arith.constant 1 : i32
    %37 = arith.addi %1, %c1_i32_25 : i32
    %c0_26 = arith.constant 0 : index
    %38 = arith.index_cast %37 : i32 to index
    %c1_27 = arith.constant 1 : index
    %c0_28 = arith.constant 0 : index
    %39 = vector.load %arg2[%c0_26, %38, %c1_27, %c0_28] : memref<1x18x18x128xbf16, #tpu.memory_space<vmem>>, vector<1x16x16x128xbf16>
    %40 = vector.shape_cast %39 : vector<1x16x16x128xbf16> to vector<16x16x128xbf16>
    %41 = vector.shape_cast %40 : vector<16x16x128xbf16> to vector<256x128xbf16>
    %c4 = arith.constant 4 : index
    %c0_29 = arith.constant 0 : index
    %c0_30 = arith.constant 0 : index
    %42 = vector.load %arg3[%c4, %c0_29, %c0_30] : memref<9x128x128xbf16, #tpu.memory_space<vmem>>, vector<1x128x128xbf16>
    %43 = vector.shape_cast %42 : vector<1x128x128xbf16> to vector<128x128xbf16>
    %cst_31 = arith.constant dense<0.000000e+00> : vector<256x128xf32>
    %44 = tpu.matmul %41, %43, %cst_31 {dimension_numbers = #tpu.dot_dimension_numbers<[1], [0], [0], [1], [0, 0, 1, 1], [], []>} : vector<256x128xbf16>, vector<128x128xbf16>, vector<256x128xf32> -> vector<256x128xf32>
    %45 = arith.addf %36, %44 : vector<256x128xf32>
    %c1_i32_32 = arith.constant 1 : i32
    %46 = arith.addi %1, %c1_i32_32 : i32
    %c0_33 = arith.constant 0 : index
    %47 = arith.index_cast %46 : i32 to index
    %c2_34 = arith.constant 2 : index
    %c0_35 = arith.constant 0 : index
    %48 = vector.load %arg2[%c0_33, %47, %c2_34, %c0_35] : memref<1x18x18x128xbf16, #tpu.memory_space<vmem>>, vector<1x16x16x128xbf16>
    %49 = vector.shape_cast %48 : vector<1x16x16x128xbf16> to vector<16x16x128xbf16>
    %50 = vector.shape_cast %49 : vector<16x16x128xbf16> to vector<256x128xbf16>
    %c5 = arith.constant 5 : index
    %c0_36 = arith.constant 0 : index
    %c0_37 = arith.constant 0 : index
    %51 = vector.load %arg3[%c5, %c0_36, %c0_37] : memref<9x128x128xbf16, #tpu.memory_space<vmem>>, vector<1x128x128xbf16>
    %52 = vector.shape_cast %51 : vector<1x128x128xbf16> to vector<128x128xbf16>
    %cst_38 = arith.constant dense<0.000000e+00> : vector<256x128xf32>
    %53 = tpu.matmul %50, %52, %cst_38 {dimension_numbers = #tpu.dot_dimension_numbers<[1], [0], [0], [1], [0, 0, 1, 1], [], []>} : vector<256x128xbf16>, vector<128x128xbf16>, vector<256x128xf32> -> vector<256x128xf32>
    %54 = arith.addf %45, %53 : vector<256x128xf32>
    %c2_i32 = arith.constant 2 : i32
    %55 = arith.addi %1, %c2_i32 : i32
    %c0_39 = arith.constant 0 : index
    %56 = arith.index_cast %55 : i32 to index
    %c0_40 = arith.constant 0 : index
    %c0_41 = arith.constant 0 : index
    %57 = vector.load %arg2[%c0_39, %56, %c0_40, %c0_41] : memref<1x18x18x128xbf16, #tpu.memory_space<vmem>>, vector<1x16x16x128xbf16>
    %58 = vector.shape_cast %57 : vector<1x16x16x128xbf16> to vector<16x16x128xbf16>
    %59 = vector.shape_cast %58 : vector<16x16x128xbf16> to vector<256x128xbf16>
    %c6 = arith.constant 6 : index
    %c0_42 = arith.constant 0 : index
    %c0_43 = arith.constant 0 : index
    %60 = vector.load %arg3[%c6, %c0_42, %c0_43] : memref<9x128x128xbf16, #tpu.memory_space<vmem>>, vector<1x128x128xbf16>
    %61 = vector.shape_cast %60 : vector<1x128x128xbf16> to vector<128x128xbf16>
    %cst_44 = arith.constant dense<0.000000e+00> : vector<256x128xf32>
    %62 = tpu.matmul %59, %61, %cst_44 {dimension_numbers = #tpu.dot_dimension_numbers<[1], [0], [0], [1], [0, 0, 1, 1], [], []>} : vector<256x128xbf16>, vector<128x128xbf16>, vector<256x128xf32> -> vector<256x128xf32>
    %63 = arith.addf %54, %62 : vector<256x128xf32>
    %c2_i32_45 = arith.constant 2 : i32
    %64 = arith.addi %1, %c2_i32_45 : i32
    %c0_46 = arith.constant 0 : index
    %65 = arith.index_cast %64 : i32 to index
    %c1_47 = arith.constant 1 : index
    %c0_48 = arith.constant 0 : index
    %66 = vector.load %arg2[%c0_46, %65, %c1_47, %c0_48] : memref<1x18x18x128xbf16, #tpu.memory_space<vmem>>, vector<1x16x16x128xbf16>
    %67 = vector.shape_cast %66 : vector<1x16x16x128xbf16> to vector<16x16x128xbf16>
    %68 = vector.shape_cast %67 : vector<16x16x128xbf16> to vector<256x128xbf16>
    %c7 = arith.constant 7 : index
    %c0_49 = arith.constant 0 : index
    %c0_50 = arith.constant 0 : index
    %69 = vector.load %arg3[%c7, %c0_49, %c0_50] : memref<9x128x128xbf16, #tpu.memory_space<vmem>>, vector<1x128x128xbf16>
    %70 = vector.shape_cast %69 : vector<1x128x128xbf16> to vector<128x128xbf16>
    %cst_51 = arith.constant dense<0.000000e+00> : vector<256x128xf32>
    %71 = tpu.matmul %68, %70, %cst_51 {dimension_numbers = #tpu.dot_dimension_numbers<[1], [0], [0], [1], [0, 0, 1, 1], [], []>} : vector<256x128xbf16>, vector<128x128xbf16>, vector<256x128xf32> -> vector<256x128xf32>
    %72 = arith.addf %63, %71 : vector<256x128xf32>
    %c2_i32_52 = arith.constant 2 : i32
    %73 = arith.addi %1, %c2_i32_52 : i32
    %c0_53 = arith.constant 0 : index
    %74 = arith.index_cast %73 : i32 to index
    %c2_54 = arith.constant 2 : index
    %c0_55 = arith.constant 0 : index
    %75 = vector.load %arg2[%c0_53, %74, %c2_54, %c0_55] : memref<1x18x18x128xbf16, #tpu.memory_space<vmem>>, vector<1x16x16x128xbf16>
    %76 = vector.shape_cast %75 : vector<1x16x16x128xbf16> to vector<16x16x128xbf16>
    %77 = vector.shape_cast %76 : vector<16x16x128xbf16> to vector<256x128xbf16>
    %c8 = arith.constant 8 : index
    %c0_56 = arith.constant 0 : index
    %c0_57 = arith.constant 0 : index
    %78 = vector.load %arg3[%c8, %c0_56, %c0_57] : memref<9x128x128xbf16, #tpu.memory_space<vmem>>, vector<1x128x128xbf16>
    %79 = vector.shape_cast %78 : vector<1x128x128xbf16> to vector<128x128xbf16>
    %cst_58 = arith.constant dense<0.000000e+00> : vector<256x128xf32>
    %80 = tpu.matmul %77, %79, %cst_58 {dimension_numbers = #tpu.dot_dimension_numbers<[1], [0], [0], [1], [0, 0, 1, 1], [], []>} : vector<256x128xbf16>, vector<128x128xbf16>, vector<256x128xf32> -> vector<256x128xf32>
    %81 = arith.addf %72, %80 : vector<256x128xf32>
    %c0_59 = arith.constant 0 : index
    %c0_60 = arith.constant 0 : index
    %82 = vector.load %arg4[%c0_59, %c0_60] : memref<1x128xf32, #tpu.memory_space<vmem>>, vector<1x128xf32>
    %83 = vector.broadcast %82 : vector<1x128xf32> to vector<256x128xf32>
    %84 = arith.mulf %81, %83 : vector<256x128xf32>
    %c0_61 = arith.constant 0 : index
    %c0_62 = arith.constant 0 : index
    %85 = vector.load %arg5[%c0_61, %c0_62] : memref<1x128xf32, #tpu.memory_space<vmem>>, vector<1x128xf32>
    %86 = vector.broadcast %85 : vector<1x128xf32> to vector<256x128xf32>
    %87 = arith.addf %84, %86 : vector<256x128xf32>
    %88 = vector.shape_cast %87 : vector<256x128xf32> to vector<16x16x128xf32>
    %c0_63 = arith.constant 0 : index
    %c0_64 = arith.constant 0 : index
    %c0_65 = arith.constant 0 : index
    %c0_66 = arith.constant 0 : index
    %89 = vector.load %arg6[%c0_63, %c0_64, %c0_65, %c0_66] : memref<1x16x16x128xf32, #tpu.memory_space<vmem>>, vector<1x16x16x128xf32>
    %90 = vector.shape_cast %89 : vector<1x16x16x128xf32> to vector<16x16x128xf32>
    %91 = vector.shape_cast %88 : vector<16x16x128xf32> to vector<1x16x16x128xf32>
    tpu.vector_store %arg6[%c0_63, %c0_64, %c0_65, %c0_66], %91 {strides = array<i32>} : memref<1x16x16x128xf32, #tpu.memory_space<vmem>>, vector<1x16x16x128xf32>,
    return
  }
  func.func @transform_0(%arg0: i32, %arg1: i32) -> (i32, i32, i32, i32) {
    %c0_i32 = arith.constant 0 : i32
    %c0_i32_0 = arith.constant 0 : i32
    %c0_i32_1 = arith.constant 0 : i32
    %c0_i32_2 = arith.constant 0 : i32
    return %arg0, %c0_i32, %c0_i32_0, %c0_i32_1 : i32, i32, i32, i32
  }
  func.func @transform_1(%arg0: i32, %arg1: i32) -> (i32, i32, i32) {
    %c0_i32 = arith.constant 0 : i32
    %c0_i32_0 = arith.constant 0 : i32
    %c0_i32_1 = arith.constant 0 : i32
    %c0_i32_2 = arith.constant 0 : i32
    return %c0_i32, %c0_i32_0, %c0_i32_1 : i32, i32, i32
  }
  func.func @transform_2(%arg0: i32, %arg1: i32) -> (i32, i32) {
    %c0_i32 = arith.constant 0 : i32
    %c0_i32_0 = arith.constant 0 : i32
    %c0_i32_1 = arith.constant 0 : i32
    return %c0_i32, %c0_i32_0 : i32, i32
  }
  func.func @transform_3(%arg0: i32, %arg1: i32) -> (i32, i32) {
    %c0_i32 = arith.constant 0 : i32
    %c0_i32_0 = arith.constant 0 : i32
    %c0_i32_1 = arith.constant 0 : i32
    return %c0_i32, %c0_i32_0 : i32, i32
  }
  func.func @transform_4(%arg0: i32, %arg1: i32) -> (i32, i32, i32, i32) {
    %c0_i32 = arith.constant 0 : i32
    %c0_i32_0 = arith.constant 0 : i32
    %c0_i32_1 = arith.constant 0 : i32
    return %arg0, %arg1, %c0_i32, %c0_i32_0 : i32, i32, i32, i32
  }
}

</mosaic_0001>

<llo_original>
// kernel: basic_conv2d.1
$region0: #{basic_conv2d.1}
  #allocation0 [shape = 'u32[]', space=smem, size = 0x4, offset = 0x4, fixed_abs, tag = 'smem constant byte address 0x4 - core index']
  #allocation1 [shape = 'u32[144,128]{1,0:T(1,128)}', space=vmem, size = 0x12000, scoped, tag = 'internal scratch']
  %s0 = inlined_call_operand.vmem [shape: bf16[2,18,18,128], index: 0, kind: input, shape index: {}]
  %s1 = inlined_call_operand.vmem [shape: bf16[9,128,128], index: 1, kind: input, shape index: {}]
  %s2 = inlined_call_operand.vmem [shape: f32[1,128], index: 2, kind: input, shape index: {}]
  %s3 = inlined_call_operand.vmem [shape: f32[1,128], index: 3, kind: input, shape index: {}]
  %s4 = inlined_call_operand.vmem [shape: f32[2,16,16,128], index: 4, kind: output, shape index: {}]
  %s5 = sld [smem:[#allocation0]]
  $region49: #{basic_conv2d.1} parent=0
    _
  %s7 = ssub.s32 1, %s5
  %s8 = scalar_select 0, %s7, %s5
  loop: start=0, step=1, limit=4
  $region2: #{basic_conv2d.1} parent=0 // loop_pre_header
    _
  $region3: #{basic_conv2d.1} parent=0 // loop_header
    %s10 = sphi 0, %s14
    %p11 = scmp.ge.s32.totalorder %s10, 4
    %s17 = sphi 0, %s29
    %s18 = sphi 0, %s25
    %s19 = sphi 0, %s17
    %s20 = sphi 0, %s18
    %s21 = sphi 0, %s19
    %s22 = sphi 0, %s20
    %s32 = sphi 0, %s34
    %s35 = sphi 0, %s32
    %s36 = sphi 0, %s35
    %s52 = sphi 0, %s36
    %s56 = sphi 0, %s56
    %s58 = sphi 0, %s56
    %s59 = sphi 0, %s58
    %s73 = sphi 0, %s59
    %s77 = sphi 0, %s77
    %s79 = sphi 0, %s77
    %s80 = sphi 0, %s79
    %s94 = sphi 0, %s80
    %s98 = sphi 0, %s98
    %s100 = sphi 0, %s98
    %s101 = sphi 0, %s100
    %s115 = sphi 0, %s101
    %s123 = sphi 0, %s125
    %s126 = sphi 0, %s123
    %s127 = sphi 0, %s126
    %s143 = sphi 0, %s127
  $region4: #{basic_conv2d.1} parent=0 // loop_header_branch
    %13 = sbr.rel (%p11) target = $region8
  $region5: #{basic_conv2d.1} parent=0 // loop_body
    %s15 = ssub.s32 %s10, 1
    %s16 = ssub.s32 %s10, 2
    %s23 = sadd.s32 1, %s18
    %p24 = scmp.ge.s32.totalorder %s23, 1
    %s25 = scalar_select %p24, 0, %s23
    %s26 = sadd.s32 1, %s17
    %s27 = scalar_select %p24, %s26, %s17
    %p28 = scmp.ge.s32.totalorder %s27, 2
    %s29 = scalar_select %p28, 0, %s27
    %s30 = ssub.s32 %s17, %s29
    %p31 = scmp.eq.s32.totalorder %s30, 0
    %s33 = sadd.s32 %s32, 1
    %s34 = scalar_select %p31, %s32, %s33
    %p37 = pneg %p31
    %p38 = scmp.eq.s32.totalorder %s10, 1
    %p39 = por %p37, %p38
    %p40 = scmp.ne.s32.totalorder %s32, %s35
    %p41 = scmp.eq.s32.totalorder %s10, 0
    %p42 = por %p40, %p41
    %p43 = scmp.ne.s32.totalorder %s32, %s35
    %p44 = scmp.eq.s32.totalorder %s15, 1
    %p45 = por %p43, %p44
    %p46 = scmp.ne.s32.totalorder %s35, %s36
    %p47 = scmp.eq.s32.totalorder %s15, 0
    %p48 = por %p46, %p47
    %p49 = scmp.ne.s32.totalorder %s35, %s36
    %p50 = scmp.eq.s32.totalorder %s16, 1
    %p51 = por %p49, %p50
    %p53 = scmp.ne.s32.totalorder %s36, %s52
    %p54 = scmp.eq.s32.totalorder %s16, 0
    %p55 = por %p53, %p54
    %s57 = sadd.s32 %s56, 1
    %p60 = scmp.eq.s32.totalorder %s10, 1
    %p61 = scmp.ne.s32.totalorder %s56, %s58
    %p62 = scmp.eq.s32.totalorder %s10, 0
    %p63 = por %p61, %p62
    %p64 = scmp.ne.s32.totalorder %s56, %s58
    %p65 = scmp.eq.s32.totalorder %s15, 1
    %p66 = por %p64, %p65
    %p67 = scmp.ne.s32.totalorder %s58, %s59
    %p68 = scmp.eq.s32.totalorder %s15, 0
    %p69 = por %p67, %p68
    %p70 = scmp.ne.s32.totalorder %s58, %s59
    %p71 = scmp.eq.s32.totalorder %s16, 1
    %p72 = por %p70, %p71
    %p74 = scmp.ne.s32.totalorder %s59, %s73
    %p75 = scmp.eq.s32.totalorder %s16, 0
    %p76 = por %p74, %p75
    %s78 = sadd.s32 %s77, 1
    %p81 = scmp.eq.s32.totalorder %s10, 1
    %p82 = scmp.ne.s32.totalorder %s77, %s79
    %p83 = scmp.eq.s32.totalorder %s10, 0
    %p84 = por %p82, %p83
    %p85 = scmp.ne.s32.totalorder %s77, %s79
    %p86 = scmp.eq.s32.totalorder %s15, 1
    %p87 = por %p85, %p86
    %p88 = scmp.ne.s32.totalorder %s79, %s80
    %p89 = scmp.eq.s32.totalorder %s15, 0
    %p90 = por %p88, %p89
    %p91 = scmp.ne.s32.totalorder %s79, %s80
    %p92 = scmp.eq.s32.totalorder %s16, 1
    %p93 = por %p91, %p92
    %p95 = scmp.ne.s32.totalorder %s80, %s94
    %p96 = scmp.eq.s32.totalorder %s16, 0
    %p97 = por %p95, %p96
    %s99 = sadd.s32 %s98, 1
    %p102 = scmp.eq.s32.totalorder %s10, 1
    %p103 = scmp.ne.s32.totalorder %s98, %s100
    %p104 = scmp.eq.s32.totalorder %s10, 0
    %p105 = por %p103, %p104
    %p106 = scmp.ne.s32.totalorder %s98, %s100
    %p107 = scmp.eq.s32.totalorder %s15, 1
    %p108 = por %p106, %p107
    %p109 = scmp.ne.s32.totalorder %s100, %s101
    %p110 = scmp.eq.s32.totalorder %s15, 0
    %p111 = por %p109, %p110
    %p112 = scmp.ne.s32.totalorder %s100, %s101
    %p113 = scmp.eq.s32.totalorder %s16, 1
    %p114 = por %p112, %p113
    %p116 = scmp.ne.s32.totalorder %s101, %s115
    %p117 = scmp.eq.s32.totalorder %s16, 0
    %p118 = por %p116, %p117
    %s119 = ssub.s32 %s17, %s29
    %s120 = ssub.s32 %s18, %s25
    %s121 = sor.u32 %s119, %s120
    %p122 = scmp.eq.s32.totalorder %s121, 0
    %s124 = sadd.s32 %s123, 1
    %s125 = scalar_select %p122, %s123, %s124
    %p128 = pneg %p122
    %p129 = scmp.eq.s32.totalorder %s10, 1
    %p130 = por %p128, %p129
    %p131 = scmp.ne.s32.totalorder %s123, %s126
    %p132 = scmp.eq.s32.totalorder %s10, 0
    %p133 = por %p131, %p132
    %p134 = scmp.ne.s32.totalorder %s123, %s126
    %p135 = scmp.eq.s32.totalorder %s15, 1
    %p136 = por %p134, %p135
    %p137 = scmp.ne.s32.totalorder %s126, %s127
    %p138 = scmp.eq.s32.totalorder %s15, 0
    %p139 = por %p137, %p138
    %p140 = scmp.ne.s32.totalorder %s126, %s127
    %p141 = scmp.eq.s32.totalorder %s16, 1
    %p142 = por %p140, %p141
    %p144 = scmp.ne.s32.totalorder %s127, %s143
    %p145 = scmp.eq.s32.totalorder %s16, 0
    %p146 = por %p144, %p145
    %p147 = scmp.le.s32.totalorder 1, %s10
    %p148 = scmp.lt.s32.totalorder %s10, 3
    %p149 = pnand %p147, %p148
    %p150 = pneg %p149
    // Predicated region
    $region9: #{basic_conv2d.1} parent=5 // pred_check
      _
    $region10: #{basic_conv2d.1} parent=5 // pred_check_branch
      %152 = sbr.rel (%p149) target = $region12
    $region11: #{basic_conv2d.1} parent=5 // pred_region
      %s153 = ssub.s32 %s10, 1
      // Predicated region
      $region13: #{basic_conv2d.1} parent=11 // pred_check
        %p154 = pneg %p69
      $region14: #{basic_conv2d.1} parent=11 // pred_check_branch
        %156 = sbr.rel (%p154) target = $region16
      $region15: #{basic_conv2d.1} parent=11 // pred_region
        _
      $region16: #{basic_conv2d.1} parent=11 // pred_fallthru
        _
      // Predicated region
      $region17: #{basic_conv2d.1} parent=11 // pred_check
        %p157 = pneg %p90
      $region18: #{basic_conv2d.1} parent=11 // pred_check_branch
        %159 = sbr.rel (%p157) target = $region20
      $region19: #{basic_conv2d.1} parent=11 // pred_region
        _
      $region20: #{basic_conv2d.1} parent=11 // pred_fallthru
        _
      // Predicated region
      $region21: #{basic_conv2d.1} parent=11 // pred_check
        %p160 = pneg %p111
      $region22: #{basic_conv2d.1} parent=11 // pred_check_branch
        %162 = sbr.rel (%p160) target = $region24
      $region23: #{basic_conv2d.1} parent=11 // pred_region
        _
      $region24: #{basic_conv2d.1} parent=11 // pred_fallthru
        _
    $region12: #{basic_conv2d.1} parent=5 // pred_fallthru
      _
    %p163 = scmp.lt.s32.totalorder %s10, 2
    // Predicated region
    $region25: #{basic_conv2d.1} parent=5 // pred_check
      %p164 = pneg %p163
    $region26: #{basic_conv2d.1} parent=5 // pred_check_branch
      %166 = sbr.rel (%p164) target = $region28
    $region27: #{basic_conv2d.1} parent=5 // pred_region
      // Predicated region
      $region29: #{basic_conv2d.1} parent=27 // pred_check
        %p167 = pneg %p42
      $region30: #{basic_conv2d.1} parent=27 // pred_check_branch
        %169 = sbr.rel (%p167) target = $region32
      $region31: #{basic_conv2d.1} parent=27 // pred_region
        %p170 = scmp.lt.s32.totalorder %s17, 1
        %s171 = scalar_select %p170, %s17, 1
        %s172 = smul.addr %s171, 54
        %s173 = smul.addr %s172, 4
        %s174 = scalar_lea.vmem %s0, %s173
      $region32: #{basic_conv2d.1} parent=27 // pred_fallthru
        _
    $region28: #{basic_conv2d.1} parent=5 // pred_fallthru
      _
    %p175 = scmp.le.s32.totalorder 1, %s10
    %p176 = scmp.lt.s32.totalorder %s10, 3
    %p177 = pnand %p175, %p176
    %p178 = pneg %p177
    // Predicated region
    $region33: #{basic_conv2d.1} parent=5 // pred_check
      _
    $region34: #{basic_conv2d.1} parent=5 // pred_check_branch
      %180 = sbr.rel (%p177) target = $region36
    $region35: #{basic_conv2d.1} parent=5 // pred_region
      %s181 = ssub.s32 %s10, 1
      %p182 = scmp.lt.s32.totalorder %s19, 1
      %s183 = scalar_select %p182, %s19, 1
      %s184 = smul.addr %s183, 54
      %s185 = smul.addr %s184, 4
      %s186 = scalar_lea.vmem %s0, %s185
      %p187 = pneg %p48
      %p188 = pneg %p45
      %p189 = pneg %p69
      %p190 = pneg %p66
      %p191 = pneg %p90
      %p192 = pneg %p87
      %p193 = pneg %p111
      %p194 = pneg %p108
      %p195 = pneg %p139
      %p196 = pneg %p136
      %s197 = smul.u32 16, %s20
      %p198 = scmp.lt.s32.totalorder %s19, 1
      %s199 = scalar_select %p198, %s19, 1
      %p200 = scmp.lt.s32.totalorder %s197, 15
      %s201 = scalar_select %p200, %s197, 15
      %s202 = smul.addr %s201, 2
      %s203 = smul.addr %s199, 32
      %s204 = sadd.s32 %s202, %s203
      %s205 = smul.addr %s204, 8
      %s206 = scalar_lea.vmem %s4, %s205
      %p207 = scmp.lt.s32.totalorder %s19, 1
      %s208 = scalar_select %p207, %s19, 1
      %s209 = smul.addr %s208, 54
      %s210 = smul.addr %s209, 4
      %s211 = scalar_lea.vmem %s0, %s210
      %s212 = smul.u32 16, %s20
      %p213 = scmp.lt.s32.totalorder %s19, 1
      %s214 = scalar_select %p213, %s19, 1
      %p215 = scmp.lt.s32.totalorder %s212, 15
      %s216 = scalar_select %p215, %s212, 15
      %s217 = smul.addr %s216, 2
      %s218 = smul.addr %s214, 32
      %s219 = sadd.s32 %s217, %s218
      %s220 = smul.addr %s219, 8
      %s221 = scalar_lea.vmem %s4, %s220
      %s222 = smul.u32 16, %s20
      %s224 = smul.u32 %s20, 16
      %s225 = smul.u32 %s224, 3
      %s226 = smul.addr %s225, 4
      %s227 = scalar_lea.vmem %s211, %s226
      %v228 = vld [vmem:[%s227] sm:$0xf]
      %v229 = vld [vmem:[%s227 + $0x4] sm:$0xf]
      %v230 = vld [vmem:[%s227 + $0xc] sm:$0xf]
      %v231 = vld [vmem:[%s227 + $0x10] sm:$0xf]
      %v232 = vld [vmem:[%s227 + $0x18] sm:$0xf]
      %v233 = vld [vmem:[%s227 + $0x1c] sm:$0xf]
      %v234 = vld [vmem:[%s227 + $0x24] sm:$0xf]
      %v235 = vld [vmem:[%s227 + $0x28] sm:$0xf]
      %v236 = vld [vmem:[%s227 + $0x30] sm:$0xf]
      %v237 = vld [vmem:[%s227 + $0x34] sm:$0xf]
      %v238 = vld [vmem:[%s227 + $0x3c] sm:$0xf]
      %v239 = vld [vmem:[%s227 + $0x40] sm:$0xf]
      %v240 = vld [vmem:[%s227 + $0x48] sm:$0xf]
      %v241 = vld [vmem:[%s227 + $0x4c] sm:$0xf]
      %v242 = vld [vmem:[%s227 + $0x54] sm:$0xf]
      %v243 = vld [vmem:[%s227 + $0x58] sm:$0xf]
      %v244 = vld [vmem:[%s227 + $0x60] sm:$0xf]
      %v245 = vld [vmem:[%s227 + $0x64] sm:$0xf]
      %v246 = vld [vmem:[%s227 + $0x6c] sm:$0xf]
      %v247 = vld [vmem:[%s227 + $0x70] sm:$0xf]
      %v248 = vld [vmem:[%s227 + $0x78] sm:$0xf]
      %v249 = vld [vmem:[%s227 + $0x7c] sm:$0xf]
      %v250 = vld [vmem:[%s227 + $0x84] sm:$0xf]
      %v251 = vld [vmem:[%s227 + $0x88] sm:$0xf]
      %v252 = vld [vmem:[%s227 + $0x90] sm:$0xf]
      %v253 = vld [vmem:[%s227 + $0x94] sm:$0xf]
      %v254 = vld [vmem:[%s227 + $0x9c] sm:$0xf]
      %v255 = vld [vmem:[%s227 + $0xa0] sm:$0xf]
      %v256 = vld [vmem:[%s227 + $0xa8] sm:$0xf]
      %v257 = vld [vmem:[%s227 + $0xac] sm:$0xf]
      %v258 = vld [vmem:[%s227 + $0xb4] sm:$0xf]
      %v259 = vld [vmem:[%s227 + $0xb8] sm:$0xf]
      %v260 = vld [vmem:[%s1] sm:$0xf]
      %v261 = vld [vmem:[%s1 + $0x4] sm:$0xf]
      %v262 = vld [vmem:[%s1 + $0x8] sm:$0xf]
      %v263 = vld [vmem:[%s1 + $0xc] sm:$0xf]
      %v264 = vld [vmem:[%s1 + $0x10] sm:$0xf]
      %v265 = vld [vmem:[%s1 + $0x14] sm:$0xf]
      %v266 = vld [vmem:[%s1 + $0x18] sm:$0xf]
      %v267 = vld [vmem:[%s1 + $0x1c] sm:$0xf]
      %v268 = vld [vmem:[%s1 + $0x20] sm:$0xf]
      %v269 = vld [vmem:[%s1 + $0x24] sm:$0xf]
      %v270 = vld [vmem:[%s1 + $0x28] sm:$0xf]
      %v271 = vld [vmem:[%s1 + $0x2c] sm:$0xf]
      %v272 = vld [vmem:[%s1 + $0x30] sm:$0xf]
      %v273 = vld [vmem:[%s1 + $0x34] sm:$0xf]
      %v274 = vld [vmem:[%s1 + $0x38] sm:$0xf]
      %v275 = vld [vmem:[%s1 + $0x3c] sm:$0xf]
      %v276 = vld [vmem:[%s227 + $0x8] sm:$0x1]
      %v277 = vld [vmem:[%s227 + $0x14] sm:$0x1]
      %v278 = vld [vmem:[%s227 + $0x20] sm:$0x1]
      %v279 = vld [vmem:[%s227 + $0x2c] sm:$0x1]
      %v280 = vld [vmem:[%s227 + $0x38] sm:$0x1]
      %v281 = vld [vmem:[%s227 + $0x44] sm:$0x1]
      %v282 = vld [vmem:[%s227 + $0x50] sm:$0x1]
      %v283 = vld [vmem:[%s227 + $0x5c] sm:$0x1]
      %v284 = vld [vmem:[%s227 + $0x68] sm:$0x1]
      %v285 = vld [vmem:[%s227 + $0x74] sm:$0x1]
      %v286 = vld [vmem:[%s227 + $0x80] sm:$0x1]
      %v287 = vld [vmem:[%s227 + $0x8c] sm:$0x1]
      %v288 = vld [vmem:[%s227 + $0x98] sm:$0x1]
      %v289 = vld [vmem:[%s227 + $0xa4] sm:$0x1]
      %v290 = vld [vmem:[%s227 + $0xb0] sm:$0x1]
      %v291 = vld [vmem:[%s227 + $0xbc] sm:$0x1]
      %vm292 = vsmask.f32 3328
      %vm293 = vsmask.f32 7440
      %vm294 = vmor %vm292, %vm293
      %v296 = vshrl.u32 %v228, 16
      %v298 = vrot.slane %v296, 4
      %v299 = vshll.u32 %v228, 16
      %v301 = vrot.slane %v299, 5
      %v302 = vor.u32 %v298, %v301
      %v303 = vrot.slane %v302, 4
      %v305 = vshll.u32 %v229, 16
      %v307 = vrot.slane %v305, 5
      %v308 = vsel %vm294, %v303, %v307
      %v309 = vshrl.u32 %v229, 16
      %v311 = vrot.slane %v309, 4
      %v312 = vor.u32 %v311, %v307
      %v313 = vrot.slane %v312, 4
      %v315 = vshll.u32 %v276, 16
      %v317 = vrot.slane %v315, 5
      %v318 = vsel %vm294, %v313, %v317
      %v320 = vshrl.u32 %v230, 16
      %v322 = vrot.slane %v320, 4
      %v323 = vshll.u32 %v230, 16
      %v325 = vrot.slane %v323, 5
      %v326 = vor.u32 %v322, %v325
      %v327 = vrot.slane %v326, 4
      %v329 = vshll.u32 %v231, 16
      %v331 = vrot.slane %v329, 5
      %v332 = vsel %vm294, %v327, %v331
      %v333 = vshrl.u32 %v231, 16
      %v335 = vrot.slane %v333, 4
      %v336 = vor.u32 %v335, %v331
      %v337 = vrot.slane %v336, 4
      %v339 = vshll.u32 %v277, 16
      %v341 = vrot.slane %v339, 5
      %v342 = vsel %vm294, %v337, %v341
      %v344 = vshrl.u32 %v232, 16
      %v346 = vrot.slane %v344, 4
      %v347 = vshll.u32 %v232, 16
      %v349 = vrot.slane %v347, 5
      %v350 = vor.u32 %v346, %v349
      %v351 = vrot.slane %v350, 4
      %v353 = vshll.u32 %v233, 16
      %v355 = vrot.slane %v353, 5
      %v356 = vsel %vm294, %v351, %v355
      %v357 = vshrl.u32 %v233, 16
      %v359 = vrot.slane %v357, 4
      %v360 = vor.u32 %v359, %v355
      %v361 = vrot.slane %v360, 4
      %v363 = vshll.u32 %v278, 16
      %v365 = vrot.slane %v363, 5
      %v366 = vsel %vm294, %v361, %v365
      %v368 = vshrl.u32 %v234, 16
      %v370 = vrot.slane %v368, 4
      %v371 = vshll.u32 %v234, 16
      %v373 = vrot.slane %v371, 5
      %v374 = vor.u32 %v370, %v373
      %v375 = vrot.slane %v374, 4
      %v377 = vshll.u32 %v235, 16
      %v379 = vrot.slane %v377, 5
      %v380 = vsel %vm294, %v375, %v379
      %v381 = vshrl.u32 %v235, 16
      %v383 = vrot.slane %v381, 4
      %v384 = vor.u32 %v383, %v379
      %v385 = vrot.slane %v384, 4
      %v387 = vshll.u32 %v279, 16
      %v389 = vrot.slane %v387, 5
      %v390 = vsel %vm294, %v385, %v389
      %v392 = vshrl.u32 %v236, 16
      %v394 = vrot.slane %v392, 4
      %v395 = vshll.u32 %v236, 16
      %v397 = vrot.slane %v395, 5
      %v398 = vor.u32 %v394, %v397
      %v399 = vrot.slane %v398, 4
      %v401 = vshll.u32 %v237, 16
      %v403 = vrot.slane %v401, 5
      %v404 = vsel %vm294, %v399, %v403
      %v405 = vshrl.u32 %v237, 16
      %v407 = vrot.slane %v405, 4
      %v408 = vor.u32 %v407, %v403
      %v409 = vrot.slane %v408, 4
      %v411 = vshll.u32 %v280, 16
      %v413 = vrot.slane %v411, 5
      %v414 = vsel %vm294, %v409, %v413
      %v416 = vshrl.u32 %v238, 16
      %v418 = vrot.slane %v416, 4
      %v419 = vshll.u32 %v238, 16
      %v421 = vrot.slane %v419, 5
      %v422 = vor.u32 %v418, %v421
      %v423 = vrot.slane %v422, 4
      %v425 = vshll.u32 %v239, 16
      %v427 = vrot.slane %v425, 5
      %v428 = vsel %vm294, %v423, %v427
      %v429 = vshrl.u32 %v239, 16
      %v431 = vrot.slane %v429, 4
      %v432 = vor.u32 %v431, %v427
      %v433 = vrot.slane %v432, 4
      %v435 = vshll.u32 %v281, 16
      %v437 = vrot.slane %v435, 5
      %v438 = vsel %vm294, %v433, %v437
      %v440 = vshrl.u32 %v240, 16
      %v442 = vrot.slane %v440, 4
      %v443 = vshll.u32 %v240, 16
      %v445 = vrot.slane %v443, 5
      %v446 = vor.u32 %v442, %v445
      %v447 = vrot.slane %v446, 4
      %v449 = vshll.u32 %v241, 16
      %v451 = vrot.slane %v449, 5
      %v452 = vsel %vm294, %v447, %v451
      %v453 = vshrl.u32 %v241, 16
      %v455 = vrot.slane %v453, 4
      %v456 = vor.u32 %v455, %v451
      %v457 = vrot.slane %v456, 4
      %v459 = vshll.u32 %v282, 16
      %v461 = vrot.slane %v459, 5
      %v462 = vsel %vm294, %v457, %v461
      %v464 = vshrl.u32 %v242, 16
      %v466 = vrot.slane %v464, 4
      %v467 = vshll.u32 %v242, 16
      %v469 = vrot.slane %v467, 5
      %v470 = vor.u32 %v466, %v469
      %v471 = vrot.slane %v470, 4
      %v473 = vshll.u32 %v243, 16
      %v475 = vrot.slane %v473, 5
      %v476 = vsel %vm294, %v471, %v475
      %v477 = vshrl.u32 %v243, 16
      %v479 = vrot.slane %v477, 4
      %v480 = vor.u32 %v479, %v475
      %v481 = vrot.slane %v480, 4
      %v483 = vshll.u32 %v283, 16
      %v485 = vrot.slane %v483, 5
      %v486 = vsel %vm294, %v481, %v485
      %v488 = vshrl.u32 %v244, 16
      %v490 = vrot.slane %v488, 4
      %v491 = vshll.u32 %v244, 16
      %v493 = vrot.slane %v491, 5
      %v494 = vor.u32 %v490, %v493
      %v495 = vrot.slane %v494, 4
      %v497 = vshll.u32 %v245, 16
      %v499 = vrot.slane %v497, 5
      %v500 = vsel %vm294, %v495, %v499
      %v501 = vshrl.u32 %v245, 16
      %v503 = vrot.slane %v501, 4
      %v504 = vor.u32 %v503, %v499
      %v505 = vrot.slane %v504, 4
      %v507 = vshll.u32 %v284, 16
      %v509 = vrot.slane %v507, 5
      %v510 = vsel %vm294, %v505, %v509
      %v512 = vshrl.u32 %v246, 16
      %v514 = vrot.slane %v512, 4
      %v515 = vshll.u32 %v246, 16
      %v517 = vrot.slane %v515, 5
      %v518 = vor.u32 %v514, %v517
      %v519 = vrot.slane %v518, 4
      %v521 = vshll.u32 %v247, 16
      %v523 = vrot.slane %v521, 5
      %v524 = vsel %vm294, %v519, %v523
      %v525 = vshrl.u32 %v247, 16
      %v527 = vrot.slane %v525, 4
      %v528 = vor.u32 %v527, %v523
      %v529 = vrot.slane %v528, 4
      %v531 = vshll.u32 %v285, 16
      %v533 = vrot.slane %v531, 5
      %v534 = vsel %vm294, %v529, %v533
      %v536 = vshrl.u32 %v248, 16
      %v538 = vrot.slane %v536, 4
      %v539 = vshll.u32 %v248, 16
      %v541 = vrot.slane %v539, 5
      %v542 = vor.u32 %v538, %v541
      %v543 = vrot.slane %v542, 4
      %v545 = vshll.u32 %v249, 16
      %v547 = vrot.slane %v545, 5
      %v548 = vsel %vm294, %v543, %v547
      %v549 = vshrl.u32 %v249, 16
      %v551 = vrot.slane %v549, 4
      %v552 = vor.u32 %v551, %v547
      %v553 = vrot.slane %v552, 4
      %v555 = vshll.u32 %v286, 16
      %v557 = vrot.slane %v555, 5
      %v558 = vsel %vm294, %v553, %v557
      %v560 = vshrl.u32 %v250, 16
      %v562 = vrot.slane %v560, 4
      %v563 = vshll.u32 %v250, 16
      %v565 = vrot.slane %v563, 5
      %v566 = vor.u32 %v562, %v565
      %v567 = vrot.slane %v566, 4
      %v569 = vshll.u32 %v251, 16
      %v571 = vrot.slane %v569, 5
      %v572 = vsel %vm294, %v567, %v571
      %v573 = vshrl.u32 %v251, 16
      %v575 = vrot.slane %v573, 4
      %v576 = vor.u32 %v575, %v571
      %v577 = vrot.slane %v576, 4
      %v579 = vshll.u32 %v287, 16
      %v581 = vrot.slane %v579, 5
      %v582 = vsel %vm294, %v577, %v581
      %v584 = vshrl.u32 %v252, 16
      %v586 = vrot.slane %v584, 4
      %v587 = vshll.u32 %v252, 16
      %v589 = vrot.slane %v587, 5
      %v590 = vor.u32 %v586, %v589
      %v591 = vrot.slane %v590, 4
      %v593 = vshll.u32 %v253, 16
      %v595 = vrot.slane %v593, 5
      %v596 = vsel %vm294, %v591, %v595
      %v597 = vshrl.u32 %v253, 16
      %v599 = vrot.slane %v597, 4
      %v600 = vor.u32 %v599, %v595
      %v601 = vrot.slane %v600, 4
      %v603 = vshll.u32 %v288, 16
      %v605 = vrot.slane %v603, 5
      %v606 = vsel %vm294, %v601, %v605
      %v608 = vshrl.u32 %v254, 16
      %v610 = vrot.slane %v608, 4
      %v611 = vshll.u32 %v254, 16
      %v613 = vrot.slane %v611, 5
      %v614 = vor.u32 %v610, %v613
      %v615 = vrot.slane %v614, 4
      %v617 = vshll.u32 %v255, 16
      %v619 = vrot.slane %v617, 5
      %v620 = vsel %vm294, %v615, %v619
      %v621 = vshrl.u32 %v255, 16
      %v623 = vrot.slane %v621, 4
      %v624 = vor.u32 %v623, %v619
      %v625 = vrot.slane %v624, 4
      %v627 = vshll.u32 %v289, 16
      %v629 = vrot.slane %v627, 5
      %v630 = vsel %vm294, %v625, %v629
      %v632 = vshrl.u32 %v256, 16
      %v634 = vrot.slane %v632, 4
      %v635 = vshll.u32 %v256, 16
      %v637 = vrot.slane %v635, 5
      %v638 = vor.u32 %v634, %v637
      %v639 = vrot.slane %v638, 4
      %v641 = vshll.u32 %v257, 16
      %v643 = vrot.slane %v641, 5
      %v644 = vsel %vm294, %v639, %v643
      %v645 = vshrl.u32 %v257, 16
      %v647 = vrot.slane %v645, 4
      %v648 = vor.u32 %v647, %v643
      %v649 = vrot.slane %v648, 4
      %v651 = vshll.u32 %v290, 16
      %v653 = vrot.slane %v651, 5
      %v654 = vsel %vm294, %v649, %v653
      %v656 = vshrl.u32 %v258, 16
      %v658 = vrot.slane %v656, 4
      %v659 = vshll.u32 %v258, 16
      %v661 = vrot.slane %v659, 5
      %v662 = vor.u32 %v658, %v661
      %v663 = vrot.slane %v662, 4
      %v665 = vshll.u32 %v259, 16
      %v667 = vrot.slane %v665, 5
      %v668 = vsel %vm294, %v663, %v667
      %v669 = vshrl.u32 %v259, 16
      %v671 = vrot.slane %v669, 4
      %v672 = vor.u32 %v671, %v667
      %v673 = vrot.slane %v672, 4
      %v675 = vshll.u32 %v291, 16
      %v677 = vrot.slane %v675, 5
      %v678 = vsel %vm294, %v673, %v677
      %s679 = scalar_lea.vmem %s1, 64
      %v680 = vld [vmem:[%s679] sm:$0xf]
      %v681 = vld [vmem:[%s679 + $0x4] sm:$0xf]
      %v682 = vld [vmem:[%s679 + $0x8] sm:$0xf]
      %v683 = vld [vmem:[%s679 + $0xc] sm:$0xf]
      %v684 = vld [vmem:[%s679 + $0x10] sm:$0xf]
      %v685 = vld [vmem:[%s679 + $0x14] sm:$0xf]
      %v686 = vld [vmem:[%s679 + $0x18] sm:$0xf]
      %v687 = vld [vmem:[%s679 + $0x1c] sm:$0xf]
      %v688 = vld [vmem:[%s679 + $0x20] sm:$0xf]
      %v689 = vld [vmem:[%s679 + $0x24] sm:$0xf]
      %v690 = vld [vmem:[%s679 + $0x28] sm:$0xf]
      %v691 = vld [vmem:[%s679 + $0x2c] sm:$0xf]
      %v692 = vld [vmem:[%s679 + $0x30] sm:$0xf]
      %v693 = vld [vmem:[%s679 + $0x34] sm:$0xf]
      %v694 = vld [vmem:[%s679 + $0x38] sm:$0xf]
      %v695 = vld [vmem:[%s679 + $0x3c] sm:$0xf]
      %v696 = vunpack.c.l.b16 %v308
      %v697 = vunpack.c.l.b16 %v318
      %v698 = vunpack.c.l.b16 %v332
      %v699 = vunpack.c.l.b16 %v342
      %v700 = vunpack.c.l.b16 %v356
      %v701 = vunpack.c.l.b16 %v366
      %v702 = vunpack.c.l.b16 %v380
      %v703 = vunpack.c.l.b16 %v390
      %v704 = vunpack.c.l.b16 %v404
      %v705 = vunpack.c.l.b16 %v414
      %v706 = vunpack.c.l.b16 %v428
      %v707 = vunpack.c.l.b16 %v438
      %v708 = vunpack.c.l.b16 %v452
      %v709 = vunpack.c.l.b16 %v462
      %v710 = vunpack.c.l.b16 %v476
      %v711 = vunpack.c.l.b16 %v486
      %v712 = vunpack.c.l.b16 %v500
      %v713 = vunpack.c.l.b16 %v510
      %v714 = vunpack.c.l.b16 %v524
      %v715 = vunpack.c.l.b16 %v534
      %v716 = vunpack.c.l.b16 %v548
      %v717 = vunpack.c.l.b16 %v558
      %v718 = vunpack.c.l.b16 %v572
      %v719 = vunpack.c.l.b16 %v582
      %v720 = vunpack.c.l.b16 %v596
      %v721 = vunpack.c.l.b16 %v606
      %v722 = vunpack.c.l.b16 %v620
      %v723 = vunpack.c.l.b16 %v630
      %v724 = vunpack.c.l.b16 %v644
      %v725 = vunpack.c.l.b16 %v654
      %v726 = vunpack.c.l.b16 %v668
      %v727 = vunpack.c.l.b16 %v678
      %v728 = vpack.c.b16 %v697, %v696
      %v729 = vpack.c.b16 %v699, %v698
      %v730 = vpack.c.b16 %v701, %v700
      %v731 = vpack.c.b16 %v703, %v702
      %v732 = vpack.c.b16 %v705, %v704
      %v733 = vpack.c.b16 %v707, %v706
      %v734 = vpack.c.b16 %v709, %v708
      %v735 = vpack.c.b16 %v711, %v710
      %v736 = vpack.c.b16 %v713, %v712
      %v737 = vpack.c.b16 %v715, %v714
      %v738 = vpack.c.b16 %v717, %v716
      %v739 = vpack.c.b16 %v719, %v718
      %v740 = vpack.c.b16 %v721, %v720
      %v741 = vpack.c.b16 %v723, %v722
      %v742 = vpack.c.b16 %v725, %v724
      %v743 = vpack.c.b16 %v727, %v726
      %v776 = vunpack.c.l.b16 %v680
      %v777 = vunpack.c.l.b16 %v681
      %v778 = vunpack.c.l.b16 %v682
      %v779 = vunpack.c.l.b16 %v683
      %v780 = vunpack.c.l.b16 %v684
      %v781 = vunpack.c.l.b16 %v685
      %v782 = vunpack.c.l.b16 %v686
      %v783 = vunpack.c.l.b16 %v687
      %v784 = vunpack.c.l.b16 %v688
      %v785 = vunpack.c.l.b16 %v689
      %v786 = vunpack.c.l.b16 %v690
      %v787 = vunpack.c.l.b16 %v691
      %v788 = vunpack.c.l.b16 %v692
      %v789 = vunpack.c.l.b16 %v693
      %v790 = vunpack.c.l.b16 %v694
      %v791 = vunpack.c.l.b16 %v695
      %v792 = vpack.c.b16 %v777, %v776
      %v793 = vpack.c.b16 %v779, %v778
      %v794 = vpack.c.b16 %v781, %v780
      %v795 = vpack.c.b16 %v783, %v782
      %v796 = vpack.c.b16 %v785, %v784
      %v797 = vpack.c.b16 %v787, %v786
      %v798 = vpack.c.b16 %v789, %v788
      %v799 = vpack.c.b16 %v791, %v790
      %808 = vmatprep.subr.bf16.mxu0 0
      %809 = vmatpush1.bf16.msra.mxu0 %v792
      %810 = vmatprep.subr.bf16.mxu0 0
      %811 = vmatpush1.bf16.msra.mxu0 %v793
      %812 = vmatprep.subr.bf16.mxu0 0
      %813 = vmatpush1.bf16.msra.mxu0 %v794
      %814 = vmatprep.subr.bf16.mxu0 0
      %815 = vmatpush1.bf16.msra.mxu0 %v795
      %816 = vmatprep.subr.bf16.mxu0 0
      %817 = vmatpush1.bf16.msra.mxu0 %v796
      %818 = vmatprep.subr.bf16.mxu0 0
      %819 = vmatpush1.bf16.msra.mxu0 %v797
      %820 = vmatprep.subr.bf16.mxu0 0
      %821 = vmatpush1.bf16.msra.mxu0 %v798
      %822 = vmatprep.subr.bf16.mxu0 0
      %823 = vmatpush1.bf16.msra.mxu0 %v799
      %824 = vmatprep.subr.bf16.mxu0 0
      %825 = vmatpush1.bf16.msra.mxu0 0
      %826 = vmatprep.subr.bf16.mxu0 0
      %827 = vmatpush1.bf16.msra.mxu0 0
      %828 = vmatprep.subr.bf16.mxu0 0
      %829 = vmatpush1.bf16.msra.mxu0 0
      %830 = vmatprep.subr.bf16.mxu0 0
      %831 = vmatpush1.bf16.msra.mxu0 0
      %832 = vmatprep.subr.bf16.mxu0 0
      %833 = vmatpush1.bf16.msra.mxu0 0
      %834 = vmatprep.subr.bf16.mxu0 0
      %835 = vmatpush1.bf16.msra.mxu0 0
      %836 = vmatprep.subr.bf16.mxu0 0
      %837 = vmatpush1.bf16.msra.mxu0 0
      %838 = vmatprep.subr.bf16.mxu0 0
      %839 = vmatpush1.bf16.msra.mxu0 0
      %840 = vmatprep.mubr.bf16.mxu0 0
      %841 = vmatmul.mubr.bf16.gmra.mrb[0].mxu0 %v728
      %v842 = vpop.f32.mrb[0].mxu0
      %v843 = vadd.f32 0.0, %v842
      %v844 = vpop.f32.mrb[0].mxu0
      %v845 = vpop.f32.mrb[0].mxu0
      %v846 = vadd.f32 0.0, %v845
      %v847 = vpop.f32.mrb[0].mxu0
      %848 = vmatprep.mubr.bf16.mxu0 0
      %849 = vmatmul.mubr.bf16.gmra.mrb[0].mxu0 %v729
      %v850 = vpop.f32.mrb[0].mxu0
      %v851 = vadd.f32 0.0, %v850
      %v852 = vpop.f32.mrb[0].mxu0
      %v853 = vpop.f32.mrb[0].mxu0
      %v854 = vadd.f32 0.0, %v853
      %v855 = vpop.f32.mrb[0].mxu0
      %856 = vmatprep.mubr.bf16.mxu0 0
      %857 = vmatmul.mubr.bf16.gmra.mrb[0].mxu0 %v730
      %v858 = vpop.f32.mrb[0].mxu0
      %v859 = vadd.f32 0.0, %v858
      %v860 = vpop.f32.mrb[0].mxu0
      %v861 = vpop.f32.mrb[0].mxu0
      %v862 = vadd.f32 0.0, %v861
      %v863 = vpop.f32.mrb[0].mxu0
      %864 = vmatprep.mubr.bf16.mxu0 0
      %865 = vmatmul.mubr.bf16.gmra.mrb[0].mxu0 %v731
      %v866 = vpop.f32.mrb[0].mxu0
      %v867 = vadd.f32 0.0, %v866
      %v868 = vpop.f32.mrb[0].mxu0
      %v869 = vpop.f32.mrb[0].mxu0
      %v870 = vadd.f32 0.0, %v869
      %v871 = vpop.f32.mrb[0].mxu0
      %872 = vmatprep.mubr.bf16.mxu0 0
      %873 = vmatmul.mubr.bf16.gmra.mrb[0].mxu0 %v732
      %v874 = vpop.f32.mrb[0].mxu0
      %v875 = vadd.f32 0.0, %v874
      %v876 = vpop.f32.mrb[0].mxu0
      %v877 = vpop.f32.mrb[0].mxu0
      %v878 = vadd.f32 0.0, %v877
      %v879 = vpop.f32.mrb[0].mxu0
      %880 = vmatprep.mubr.bf16.mxu0 0
      %881 = vmatmul.mubr.bf16.gmra.mrb[0].mxu0 %v733
      %v882 = vpop.f32.mrb[0].mxu0
      %v883 = vadd.f32 0.0, %v882
      %v884 = vpop.f32.mrb[0].mxu0
      %v885 = vpop.f32.mrb[0].mxu0
      %v886 = vadd.f32 0.0, %v885
      %v887 = vpop.f32.mrb[0].mxu0
      %888 = vmatprep.mubr.bf16.mxu0 0
      %889 = vmatmul.mubr.bf16.gmra.mrb[0].mxu0 %v734
      %v890 = vpop.f32.mrb[0].mxu0
      %v891 = vadd.f32 0.0, %v890
      %v892 = vpop.f32.mrb[0].mxu0
      %v893 = vpop.f32.mrb[0].mxu0
      %v894 = vadd.f32 0.0, %v893
      %v895 = vpop.f32.mrb[0].mxu0
      %896 = vmatprep.mubr.bf16.mxu0 0
      %897 = vmatmul.mubr.bf16.gmra.mrb[0].mxu0 %v735
      %v898 = vpop.f32.mrb[0].mxu0
      %v899 = vadd.f32 0.0, %v898
      %v900 = vpop.f32.mrb[0].mxu0
      %v901 = vpop.f32.mrb[0].mxu0
      %v902 = vadd.f32 0.0, %v901
      %v903 = vpop.f32.mrb[0].mxu0
      %904 = vmatprep.mubr.bf16.mxu0 0
      %905 = vmatmul.mubr.bf16.gmra.mrb[0].mxu0 %v736
      %v906 = vpop.f32.mrb[0].mxu0
      %v907 = vadd.f32 0.0, %v906
      %v908 = vpop.f32.mrb[0].mxu0
      %v909 = vpop.f32.mrb[0].mxu0
      %v910 = vadd.f32 0.0, %v909
      %v911 = vpop.f32.mrb[0].mxu0
      %912 = vmatprep.mubr.bf16.mxu0 0
      %913 = vmatmul.mubr.bf16.gmra.mrb[0].mxu0 %v737
      %v914 = vpop.f32.mrb[0].mxu0
      %v915 = vadd.f32 0.0, %v914
      %v916 = vpop.f32.mrb[0].mxu0
      %v917 = vpop.f32.mrb[0].mxu0
      %v918 = vadd.f32 0.0, %v917
      %v919 = vpop.f32.mrb[0].mxu0
      %920 = vmatprep.mubr.bf16.mxu0 0
      %921 = vmatmul.mubr.bf16.gmra.mrb[0].mxu0 %v738
      %v922 = vpop.f32.mrb[0].mxu0
      %v923 = vadd.f32 0.0, %v922
      %v924 = vpop.f32.mrb[0].mxu0
      %v925 = vpop.f32.mrb[0].mxu0
      %v926 = vadd.f32 0.0, %v925
      %v927 = vpop.f32.mrb[0].mxu0
      %928 = vmatprep.mubr.bf16.mxu0 0
      %929 = vmatmul.mubr.bf16.gmra.mrb[0].mxu0 %v739
      %v930 = vpop.f32.mrb[0].mxu0
      %v931 = vadd.f32 0.0, %v930
      %v932 = vpop.f32.mrb[0].mxu0
      %v933 = vpop.f32.mrb[0].mxu0
      %v934 = vadd.f32 0.0, %v933
      %v935 = vpop.f32.mrb[0].mxu0
      %936 = vmatprep.mubr.bf16.mxu0 0
      %937 = vmatmul.mubr.bf16.gmra.mrb[0].mxu0 %v740
      %v938 = vpop.f32.mrb[0].mxu0
      %v939 = vadd.f32 0.0, %v938
      %v940 = vpop.f32.mrb[0].mxu0
      %v941 = vpop.f32.mrb[0].mxu0
      %v942 = vadd.f32 0.0, %v941
      %v943 = vpop.f32.mrb[0].mxu0
      %944 = vmatprep.mubr.bf16.mxu0 0
      %945 = vmatmul.mubr.bf16.gmra.mrb[0].mxu0 %v741
      %v946 = vpop.f32.mrb[0].mxu0
      %v947 = vadd.f32 0.0, %v946
      %v948 = vpop.f32.mrb[0].mxu0
      %v949 = vpop.f32.mrb[0].mxu0
      %v950 = vadd.f32 0.0, %v949
      %v951 = vpop.f32.mrb[0].mxu0
      %952 = vmatprep.mubr.bf16.mxu0 0
      %953 = vmatmul.mubr.bf16.gmra.mrb[0].mxu0 %v742
      %v954 = vpop.f32.mrb[0].mxu0
      %v955 = vadd.f32 0.0, %v954
      %v956 = vpop.f32.mrb[0].mxu0
      %v957 = vpop.f32.mrb[0].mxu0
      %v958 = vadd.f32 0.0, %v957
      %v959 = vpop.f32.mrb[0].mxu0
      %960 = vmatprep.mubr.bf16.mxu0 0
      %961 = vmatmul.mubr.bf16.gmra.mrb[0].mxu0 %v743
      %v962 = vpop.f32.mrb[0].mxu0
      %v963 = vadd.f32 0.0, %v962
      %v964 = vpop.f32.mrb[0].mxu0
      %v965 = vpop.f32.mrb[0].mxu0
      %v966 = vadd.f32 0.0, %v965
      %v967 = vpop.f32.mrb[0].mxu0
      %968 = vdwg.mxu0
      %v1001 = vunpack.c.l.b16 %v228
      %v1002 = vunpack.c.l.b16 %v229
      %v1003 = vunpack.c.l.b16 %v230
      %v1004 = vunpack.c.l.b16 %v231
      %v1005 = vunpack.c.l.b16 %v232
      %v1006 = vunpack.c.l.b16 %v233
      %v1007 = vunpack.c.l.b16 %v234
      %v1008 = vunpack.c.l.b16 %v235
      %v1009 = vunpack.c.l.b16 %v236
      %v1010 = vunpack.c.l.b16 %v237
      %v1011 = vunpack.c.l.b16 %v238
      %v1012 = vunpack.c.l.b16 %v239
      %v1013 = vunpack.c.l.b16 %v240
      %v1014 = vunpack.c.l.b16 %v241
      %v1015 = vunpack.c.l.b16 %v242
      %v1016 = vunpack.c.l.b16 %v243
      %v1017 = vunpack.c.l.b16 %v244
      %v1018 = vunpack.c.l.b16 %v245
      %v1019 = vunpack.c.l.b16 %v246
      %v1020 = vunpack.c.l.b16 %v247
      %v1021 = vunpack.c.l.b16 %v248
      %v1022 = vunpack.c.l.b16 %v249
      %v1023 = vunpack.c.l.b16 %v250
      %v1024 = vunpack.c.l.b16 %v251
      %v1025 = vunpack.c.l.b16 %v252
      %v1026 = vunpack.c.l.b16 %v253
      %v1027 = vunpack.c.l.b16 %v254
      %v1028 = vunpack.c.l.b16 %v255
      %v1029 = vunpack.c.l.b16 %v256
      %v1030 = vunpack.c.l.b16 %v257
      %v1031 = vunpack.c.l.b16 %v258
      %v1032 = vunpack.c.l.b16 %v259
      %v1033 = vpack.c.b16 %v1002, %v1001
      %v1034 = vpack.c.b16 %v1004, %v1003
      %v1035 = vpack.c.b16 %v1006, %v1005
      %v1036 = vpack.c.b16 %v1008, %v1007
      %v1037 = vpack.c.b16 %v1010, %v1009
      %v1038 = vpack.c.b16 %v1012, %v1011
      %v1039 = vpack.c.b16 %v1014, %v1013
      %v1040 = vpack.c.b16 %v1016, %v1015
      %v1041 = vpack.c.b16 %v1018, %v1017
      %v1042 = vpack.c.b16 %v1020, %v1019
      %v1043 = vpack.c.b16 %v1022, %v1021
      %v1044 = vpack.c.b16 %v1024, %v1023
      %v1045 = vpack.c.b16 %v1026, %v1025
      %v1046 = vpack.c.b16 %v1028, %v1027
      %v1047 = vpack.c.b16 %v1030, %v1029
      %v1048 = vpack.c.b16 %v1032, %v1031
      %v1081 = vunpack.c.l.b16 %v260
      %v1082 = vunpack.c.l.b16 %v261
      %v1083 = vunpack.c.l.b16 %v262
      %v1084 = vunpack.c.l.b16 %v263
      %v1085 = vunpack.c.l.b16 %v264
      %v1086 = vunpack.c.l.b16 %v265
      %v1087 = vunpack.c.l.b16 %v266
      %v1088 = vunpack.c.l.b16 %v267
      %v1089 = vunpack.c.l.b16 %v268
      %v1090 = vunpack.c.l.b16 %v269
      %v1091 = vunpack.c.l.b16 %v270
      %v1092 = vunpack.c.l.b16 %v271
      %v1093 = vunpack.c.l.b16 %v272
      %v1094 = vunpack.c.l.b16 %v273
      %v1095 = vunpack.c.l.b16 %v274
      %v1096 = vunpack.c.l.b16 %v275
      %v1097 = vpack.c.b16 %v1082, %v1081
      %v1098 = vpack.c.b16 %v1084, %v1083
      %v1099 = vpack.c.b16 %v1086, %v1085
      %v1100 = vpack.c.b16 %v1088, %v1087
      %v1101 = vpack.c.b16 %v1090, %v1089
      %v1102 = vpack.c.b16 %v1092, %v1091
      %v1103 = vpack.c.b16 %v1094, %v1093
      %v1104 = vpack.c.b16 %v1096, %v1095
      %1113 = vmatprep.subr.bf16.mxu0 0
      %1114 = vmatpush1.bf16.msra.mxu0 %v1097
      %1115 = vmatprep.subr.bf16.mxu0 0
      %1116 = vmatpush1.bf16.msra.mxu0 %v1098
      %1117 = vmatprep.subr.bf16.mxu0 0
      %1118 = vmatpush1.bf16.msra.mxu0 %v1099
      %1119 = vmatprep.subr.bf16.mxu0 0
      %1120 = vmatpush1.bf16.msra.mxu0 %v1100
      %1121 = vmatprep.subr.bf16.mxu0 0
      %1122 = vmatpush1.bf16.msra.mxu0 %v1101
      %1123 = vmatprep.subr.bf16.mxu0 0
      %1124 = vmatpush1.bf16.msra.mxu0 %v1102
      %1125 = vmatprep.subr.bf16.mxu0 0
      %1126 = vmatpush1.bf16.msra.mxu0 %v1103
      %1127 = vmatprep.subr.bf16.mxu0 0
      %1128 = vmatpush1.bf16.msra.mxu0 %v1104
      %1129 = vmatprep.subr.bf16.mxu0 0
      %1130 = vmatpush1.bf16.msra.mxu0 0
      %1131 = vmatprep.subr.bf16.mxu0 0
      %1132 = vmatpush1.bf16.msra.mxu0 0
      %1133 = vmatprep.subr.bf16.mxu0 0
      %1134 = vmatpush1.bf16.msra.mxu0 0
      %1135 = vmatprep.subr.bf16.mxu0 0
      %1136 = vmatpush1.bf16.msra.mxu0 0
      %1137 = vmatprep.subr.bf16.mxu0 0
      %1138 = vmatpush1.bf16.msra.mxu0 0
      %1139 = vmatprep.subr.bf16.mxu0 0
      %1140 = vmatpush1.bf16.msra.mxu0 0
      %1141 = vmatprep.subr.bf16.mxu0 0
      %1142 = vmatpush1.bf16.msra.mxu0 0
      %1143 = vmatprep.subr.bf16.mxu0 0
      %1144 = vmatpush1.bf16.msra.mxu0 0
      %1145 = vmatprep.mubr.bf16.mxu0 0
      %1146 = vmatmul.mubr.bf16.gmra.mrb[0].mxu0 %v1033
      %v1147 = vpop.f32.mrb[0].mxu0
      %v1148 = vadd.f32 %v843, %v1147
      %v1149 = vpop.f32.mrb[0].mxu0
      %v1150 = vpop.f32.mrb[0].mxu0
      %v1151 = vadd.f32 %v846, %v1150
      %v1152 = vpop.f32.mrb[0].mxu0
      %1153 = vmatprep.mubr.bf16.mxu0 0
      %1154 = vmatmul.mubr.bf16.gmra.mrb[0].mxu0 %v1034
      %v1155 = vpop.f32.mrb[0].mxu0
      %v1156 = vadd.f32 %v851, %v1155
      %v1157 = vpop.f32.mrb[0].mxu0
      %v1158 = vpop.f32.mrb[0].mxu0
      %v1159 = vadd.f32 %v854, %v1158
      %v1160 = vpop.f32.mrb[0].mxu0
      %1161 = vmatprep.mubr.bf16.mxu0 0
      %1162 = vmatmul.mubr.bf16.gmra.mrb[0].mxu0 %v1035
      %v1163 = vpop.f32.mrb[0].mxu0
      %v1164 = vadd.f32 %v859, %v1163
      %v1165 = vpop.f32.mrb[0].mxu0
      %v1166 = vpop.f32.mrb[0].mxu0
      %v1167 = vadd.f32 %v862, %v1166
      %v1168 = vpop.f32.mrb[0].mxu0
      %1169 = vmatprep.mubr.bf16.mxu0 0
      %1170 = vmatmul.mubr.bf16.gmra.mrb[0].mxu0 %v1036
      %v1171 = vpop.f32.mrb[0].mxu0
      %v1172 = vadd.f32 %v867, %v1171
      %v1173 = vpop.f32.mrb[0].mxu0
      %v1174 = vpop.f32.mrb[0].mxu0
      %v1175 = vadd.f32 %v870, %v1174
      %v1176 = vpop.f32.mrb[0].mxu0
      %1177 = vmatprep.mubr.bf16.mxu0 0
      %1178 = vmatmul.mubr.bf16.gmra.mrb[0].mxu0 %v1037
      %v1179 = vpop.f32.mrb[0].mxu0
      %v1180 = vadd.f32 %v875, %v1179
      %v1181 = vpop.f32.mrb[0].mxu0
      %v1182 = vpop.f32.mrb[0].mxu0
      %v1183 = vadd.f32 %v878, %v1182
      %v1184 = vpop.f32.mrb[0].mxu0
      %1185 = vmatprep.mubr.bf16.mxu0 0
      %1186 = vmatmul.mubr.bf16.gmra.mrb[0].mxu0 %v1038
      %v1187 = vpop.f32.mrb[0].mxu0
      %v1188 = vadd.f32 %v883, %v1187
      %v1189 = vpop.f32.mrb[0].mxu0
      %v1190 = vpop.f32.mrb[0].mxu0
      %v1191 = vadd.f32 %v886, %v1190
      %v1192 = vpop.f32.mrb[0].mxu0
      %1193 = vmatprep.mubr.bf16.mxu0 0
      %1194 = vmatmul.mubr.bf16.gmra.mrb[0].mxu0 %v1039
      %v1195 = vpop.f32.mrb[0].mxu0
      %v1196 = vadd.f32 %v891, %v1195
      %v1197 = vpop.f32.mrb[0].mxu0
      %v1198 = vpop.f32.mrb[0].mxu0
      %v1199 = vadd.f32 %v894, %v1198
      %v1200 = vpop.f32.mrb[0].mxu0
      %1201 = vmatprep.mubr.bf16.mxu0 0
      %1202 = vmatmul.mubr.bf16.gmra.mrb[0].mxu0 %v1040
      %v1203 = vpop.f32.mrb[0].mxu0
      %v1204 = vadd.f32 %v899, %v1203
      %v1205 = vpop.f32.mrb[0].mxu0
      %v1206 = vpop.f32.mrb[0].mxu0
      %v1207 = vadd.f32 %v902, %v1206
      %v1208 = vpop.f32.mrb[0].mxu0
      %1209 = vmatprep.mubr.bf16.mxu0 0
      %1210 = vmatmul.mubr.bf16.gmra.mrb[0].mxu0 %v1041
      %v1211 = vpop.f32.mrb[0].mxu0
      %v1212 = vadd.f32 %v907, %v1211
      %v1213 = vpop.f32.mrb[0].mxu0
      %v1214 = vpop.f32.mrb[0].mxu0
      %v1215 = vadd.f32 %v910, %v1214
      %v1216 = vpop.f32.mrb[0].mxu0
      %1217 = vmatprep.mubr.bf16.mxu0 0
      %1218 = vmatmul.mubr.bf16.gmra.mrb[0].mxu0 %v1042
      %v1219 = vpop.f32.mrb[0].mxu0
      %v1220 = vadd.f32 %v915, %v1219
      %v1221 = vpop.f32.mrb[0].mxu0
      %v1222 = vpop.f32.mrb[0].mxu0
      %v1223 = vadd.f32 %v918, %v1222
      %v1224 = vpop.f32.mrb[0].mxu0
      %1225 = vmatprep.mubr.bf16.mxu0 0
      %1226 = vmatmul.mubr.bf16.gmra.mrb[0].mxu0 %v1043
      %v1227 = vpop.f32.mrb[0].mxu0
      %v1228 = vadd.f32 %v923, %v1227
      %v1229 = vpop.f32.mrb[0].mxu0
      %v1230 = vpop.f32.mrb[0].mxu0
      %v1231 = vadd.f32 %v926, %v1230
      %v1232 = vpop.f32.mrb[0].mxu0
      %1233 = vmatprep.mubr.bf16.mxu0 0
      %1234 = vmatmul.mubr.bf16.gmra.mrb[0].mxu0 %v1044
      %v1235 = vpop.f32.mrb[0].mxu0
      %v1236 = vadd.f32 %v931, %v1235
      %v1237 = vpop.f32.mrb[0].mxu0
      %v1238 = vpop.f32.mrb[0].mxu0
      %v1239 = vadd.f32 %v934, %v1238
      %v1240 = vpop.f32.mrb[0].mxu0
      %1241 = vmatprep.mubr.bf16.mxu0 0
      %1242 = vmatmul.mubr.bf16.gmra.mrb[0].mxu0 %v1045
      %v1243 = vpop.f32.mrb[0].mxu0
      %v1244 = vadd.f32 %v939, %v1243
      %v1245 = vpop.f32.mrb[0].mxu0
      %v1246 = vpop.f32.mrb[0].mxu0
      %v1247 = vadd.f32 %v942, %v1246
      %v1248 = vpop.f32.mrb[0].mxu0
      %1249 = vmatprep.mubr.bf16.mxu0 0
      %1250 = vmatmul.mubr.bf16.gmra.mrb[0].mxu0 %v1046
      %v1251 = vpop.f32.mrb[0].mxu0
      %v1252 = vadd.f32 %v947, %v1251
      %v1253 = vpop.f32.mrb[0].mxu0
      %v1254 = vpop.f32.mrb[0].mxu0
      %v1255 = vadd.f32 %v950, %v1254
      %v1256 = vpop.f32.mrb[0].mxu0
      %1257 = vmatprep.mubr.bf16.mxu0 0
      %1258 = vmatmul.mubr.bf16.gmra.mrb[0].mxu0 %v1047
      %v1259 = vpop.f32.mrb[0].mxu0
      %v1260 = vadd.f32 %v955, %v1259
      %v1261 = vpop.f32.mrb[0].mxu0
      %v1262 = vpop.f32.mrb[0].mxu0
      %v1263 = vadd.f32 %v958, %v1262
      %v1264 = vpop.f32.mrb[0].mxu0
      %1265 = vmatprep.mubr.bf16.mxu0 0
      %1266 = vmatmul.mubr.bf16.gmra.mrb[0].mxu0 %v1048
      %v1267 = vpop.f32.mrb[0].mxu0
      %v1268 = vadd.f32 %v963, %v1267
      %v1269 = vpop.f32.mrb[0].mxu0
      %v1270 = vpop.f32.mrb[0].mxu0
      %v1271 = vadd.f32 %v966, %v1270
      %v1272 = vpop.f32.mrb[0].mxu0
      %1273 = vdwg.mxu0
      %v1274 = vld [vmem:[%s227] sm:$0xe]
      %v1275 = vld [vmem:[%s227 + $0xc] sm:$0xe]
      %v1276 = vld [vmem:[%s227 + $0x18] sm:$0xe]
      %v1277 = vld [vmem:[%s227 + $0x24] sm:$0xe]
      %v1278 = vld [vmem:[%s227 + $0x30] sm:$0xe]
      %v1279 = vld [vmem:[%s227 + $0x3c] sm:$0xe]
      %v1280 = vld [vmem:[%s227 + $0x48] sm:$0xe]
      %v1281 = vld [vmem:[%s227 + $0x54] sm:$0xe]
      %v1282 = vld [vmem:[%s227 + $0x60] sm:$0xe]
      %v1283 = vld [vmem:[%s227 + $0x6c] sm:$0xe]
      %v1284 = vld [vmem:[%s227 + $0x78] sm:$0xe]
      %v1285 = vld [vmem:[%s227 + $0x84] sm:$0xe]
      %v1286 = vld [vmem:[%s227 + $0x90] sm:$0xe]
      %v1287 = vld [vmem:[%s227 + $0x9c] sm:$0xe]
      %v1288 = vld [vmem:[%s227 + $0xa8] sm:$0xe]
      %v1289 = vld [vmem:[%s227 + $0xb4] sm:$0xe]
      %vm1322 = vcmask 1042432
      %vm1323 = vcmask 1046532
      %vm1324 = vmor %vm1322, %vm1323
      %v1325 = vrot.slane %v1274, 5
      %v1326 = vrot.slane %v1325, 4
      %v1327 = vrot.slane %v229, 5
      %v1328 = vsel %vm1324, %v1326, %v1327
      %v1329 = vrot.slane %v1327, 4
      %v1330 = vrot.slane %v276, 5
      %v1331 = vsel %vm1324, %v1329, %v1330
      %v1332 = vrot.slane %v1275, 5
      %v1333 = vrot.slane %v1332, 4
      %v1334 = vrot.slane %v231, 5
      %v1335 = vsel %vm1324, %v1333, %v1334
      %v1336 = vrot.slane %v1334, 4
      %v1337 = vrot.slane %v277, 5
      %v1338 = vsel %vm1324, %v1336, %v1337
      %v1339 = vrot.slane %v1276, 5
      %v1340 = vrot.slane %v1339, 4
      %v1341 = vrot.slane %v233, 5
      %v1342 = vsel %vm1324, %v1340, %v1341
      %v1343 = vrot.slane %v1341, 4
      %v1344 = vrot.slane %v278, 5
      %v1345 = vsel %vm1324, %v1343, %v1344
      %v1346 = vrot.slane %v1277, 5
      %v1347 = vrot.slane %v1346, 4
      %v1348 = vrot.slane %v235, 5
      %v1349 = vsel %vm1324, %v1347, %v1348
      %v1350 = vrot.slane %v1348, 4
      %v1351 = vrot.slane %v279, 5
      %v1352 = vsel %vm1324, %v1350, %v1351
      %v1353 = vrot.slane %v1278, 5
      %v1354 = vrot.slane %v1353, 4
      %v1355 = vrot.slane %v237, 5
      %v1356 = vsel %vm1324, %v1354, %v1355
      %v1357 = vrot.slane %v1355, 4
      %v1358 = vrot.slane %v280, 5
      %v1359 = vsel %vm1324, %v1357, %v1358
      %v1360 = vrot.slane %v1279, 5
      %v1361 = vrot.slane %v1360, 4
      %v1362 = vrot.slane %v239, 5
      %v1363 = vsel %vm1324, %v1361, %v1362
      %v1364 = vrot.slane %v1362, 4
      %v1365 = vrot.slane %v281, 5
      %v1366 = vsel %vm1324, %v1364, %v1365
      %v1367 = vrot.slane %v1280, 5
      %v1368 = vrot.slane %v1367, 4
      %v1369 = vrot.slane %v241, 5
      %v1370 = vsel %vm1324, %v1368, %v1369
      %v1371 = vrot.slane %v1369, 4
      %v1372 = vrot.slane %v282, 5
      %v1373 = vsel %vm1324, %v1371, %v1372
      %v1374 = vrot.slane %v1281, 5
      %v1375 = vrot.slane %v1374, 4
      %v1376 = vrot.slane %v243, 5
      %v1377 = vsel %vm1324, %v1375, %v1376
      %v1378 = vrot.slane %v1376, 4
      %v1379 = vrot.slane %v283, 5
      %v1380 = vsel %vm1324, %v1378, %v1379
      %v1381 = vrot.slane %v1282, 5
      %v1382 = vrot.slane %v1381, 4
      %v1383 = vrot.slane %v245, 5
      %v1384 = vsel %vm1324, %v1382, %v1383
      %v1385 = vrot.slane %v1383, 4
      %v1386 = vrot.slane %v284, 5
      %v1387 = vsel %vm1324, %v1385, %v1386
      %v1388 = vrot.slane %v1283, 5
      %v1389 = vrot.slane %v1388, 4
      %v1390 = vrot.slane %v247, 5
      %v1391 = vsel %vm1324, %v1389, %v1390
      %v1392 = vrot.slane %v1390, 4
      %v1393 = vrot.slane %v285, 5
      %v1394 = vsel %vm1324, %v1392, %v1393
      %v1395 = vrot.slane %v1284, 5
      %v1396 = vrot.slane %v1395, 4
      %v1397 = vrot.slane %v249, 5
      %v1398 = vsel %vm1324, %v1396, %v1397
      %v1399 = vrot.slane %v1397, 4
      %v1400 = vrot.slane %v286, 5
      %v1401 = vsel %vm1324, %v1399, %v1400
      %v1402 = vrot.slane %v1285, 5
      %v1403 = vrot.slane %v1402, 4
      %v1404 = vrot.slane %v251, 5
      %v1405 = vsel %vm1324, %v1403, %v1404
      %v1406 = vrot.slane %v1404, 4
      %v1407 = vrot.slane %v287, 5
      %v1408 = vsel %vm1324, %v1406, %v1407
      %v1409 = vrot.slane %v1286, 5
      %v1410 = vrot.slane %v1409, 4
      %v1411 = vrot.slane %v253, 5
      %v1412 = vsel %vm1324, %v1410, %v1411
      %v1413 = vrot.slane %v1411, 4
      %v1414 = vrot.slane %v288, 5
      %v1415 = vsel %vm1324, %v1413, %v1414
      %v1416 = vrot.slane %v1287, 5
      %v1417 = vrot.slane %v1416, 4
      %v1418 = vrot.slane %v255, 5
      %v1419 = vsel %vm1324, %v1417, %v1418
      %v1420 = vrot.slane %v1418, 4
      %v1421 = vrot.slane %v289, 5
      %v1422 = vsel %vm1324, %v1420, %v1421
      %v1423 = vrot.slane %v1288, 5
      %v1424 = vrot.slane %v1423, 4
      %v1425 = vrot.slane %v257, 5
      %v1426 = vsel %vm1324, %v1424, %v1425
      %v1427 = vrot.slane %v1425, 4
      %v1428 = vrot.slane %v290, 5
      %v1429 = vsel %vm1324, %v1427, %v1428
      %v1430 = vrot.slane %v1289, 5
      %v1431 = vrot.slane %v1430, 4
      %v1432 = vrot.slane %v259, 5
      %v1433 = vsel %vm1324, %v1431, %v1432
      %v1434 = vrot.slane %v1432, 4
      %v1435 = vrot.slane %v291, 5
      %v1436 = vsel %vm1324, %v1434, %v1435
      %s1437 = scalar_lea.vmem %s1, 128
      %v1438 = vld [vmem:[%s1437] sm:$0xf]
      %v1439 = vld [vmem:[%s1437 + $0x4] sm:$0xf]
      %v1440 = vld [vmem:[%s1437 + $0x8] sm:$0xf]
      %v1441 = vld [vmem:[%s1437 + $0xc] sm:$0xf]
      %v1442 = vld [vmem:[%s1437 + $0x10] sm:$0xf]
      %v1443 = vld [vmem:[%s1437 + $0x14] sm:$0xf]
      %v1444 = vld [vmem:[%s1437 + $0x18] sm:$0xf]
      %v1445 = vld [vmem:[%s1437 + $0x1c] sm:$0xf]
      %v1446 = vld [vmem:[%s1437 + $0x20] sm:$0xf]
      %v1447 = vld [vmem:[%s1437 + $0x24] sm:$0xf]
      %v1448 = vld [vmem:[%s1437 + $0x28] sm:$0xf]
      %v1449 = vld [vmem:[%s1437 + $0x2c] sm:$0xf]
      %v1450 = vld [vmem:[%s1437 + $0x30] sm:$0xf]
      %v1451 = vld [vmem:[%s1437 + $0x34] sm:$0xf]
      %v1452 = vld [vmem:[%s1437 + $0x38] sm:$0xf]
      %v1453 = vld [vmem:[%s1437 + $0x3c] sm:$0xf]
      %v1454 = vunpack.c.l.b16 %v1328
      %v1455 = vunpack.c.l.b16 %v1331
      %v1456 = vunpack.c.l.b16 %v1335
      %v1457 = vunpack.c.l.b16 %v1338
      %v1458 = vunpack.c.l.b16 %v1342
      %v1459 = vunpack.c.l.b16 %v1345
      %v1460 = vunpack.c.l.b16 %v1349
      %v1461 = vunpack.c.l.b16 %v1352
      %v1462 = vunpack.c.l.b16 %v1356
      %v1463 = vunpack.c.l.b16 %v1359
      %v1464 = vunpack.c.l.b16 %v1363
      %v1465 = vunpack.c.l.b16 %v1366
      %v1466 = vunpack.c.l.b16 %v1370
      %v1467 = vunpack.c.l.b16 %v1373
      %v1468 = vunpack.c.l.b16 %v1377
      %v1469 = vunpack.c.l.b16 %v1380
      %v1470 = vunpack.c.l.b16 %v1384
      %v1471 = vunpack.c.l.b16 %v1387
      %v1472 = vunpack.c.l.b16 %v1391
      %v1473 = vunpack.c.l.b16 %v1394
      %v1474 = vunpack.c.l.b16 %v1398
      %v1475 = vunpack.c.l.b16 %v1401
      %v1476 = vunpack.c.l.b16 %v1405
      %v1477 = vunpack.c.l.b16 %v1408
      %v1478 = vunpack.c.l.b16 %v1412
      %v1479 = vunpack.c.l.b16 %v1415
      %v1480 = vunpack.c.l.b16 %v1419
      %v1481 = vunpack.c.l.b16 %v1422
      %v1482 = vunpack.c.l.b16 %v1426
      %v1483 = vunpack.c.l.b16 %v1429
      %v1484 = vunpack.c.l.b16 %v1433
      %v1485 = vunpack.c.l.b16 %v1436
      %v1486 = vpack.c.b16 %v1455, %v1454
      %v1487 = vpack.c.b16 %v1457, %v1456
      %v1488 = vpack.c.b16 %v1459, %v1458
      %v1489 = vpack.c.b16 %v1461, %v1460
      %v1490 = vpack.c.b16 %v1463, %v1462
      %v1491 = vpack.c.b16 %v1465, %v1464
      %v1492 = vpack.c.b16 %v1467, %v1466
      %v1493 = vpack.c.b16 %v1469, %v1468
      %v1494 = vpack.c.b16 %v1471, %v1470
      %v1495 = vpack.c.b16 %v1473, %v1472
      %v1496 = vpack.c.b16 %v1475, %v1474
      %v1497 = vpack.c.b16 %v1477, %v1476
      %v1498 = vpack.c.b16 %v1479, %v1478
      %v1499 = vpack.c.b16 %v1481, %v1480
      %v1500 = vpack.c.b16 %v1483, %v1482
      %v1501 = vpack.c.b16 %v1485, %v1484
      %v1534 = vunpack.c.l.b16 %v1438
      %v1535 = vunpack.c.l.b16 %v1439
      %v1536 = vunpack.c.l.b16 %v1440
      %v1537 = vunpack.c.l.b16 %v1441
      %v1538 = vunpack.c.l.b16 %v1442
      %v1539 = vunpack.c.l.b16 %v1443
      %v1540 = vunpack.c.l.b16 %v1444
      %v1541 = vunpack.c.l.b16 %v1445
      %v1542 = vunpack.c.l.b16 %v1446
      %v1543 = vunpack.c.l.b16 %v1447
      %v1544 = vunpack.c.l.b16 %v1448
      %v1545 = vunpack.c.l.b16 %v1449
      %v1546 = vunpack.c.l.b16 %v1450
      %v1547 = vunpack.c.l.b16 %v1451
      %v1548 = vunpack.c.l.b16 %v1452
      %v1549 = vunpack.c.l.b16 %v1453
      %v1550 = vpack.c.b16 %v1535, %v1534
      %v1551 = vpack.c.b16 %v1537, %v1536
      %v1552 = vpack.c.b16 %v1539, %v1538
      %v1553 = vpack.c.b16 %v1541, %v1540
      %v1554 = vpack.c.b16 %v1543, %v1542
      %v1555 = vpack.c.b16 %v1545, %v1544
      %v1556 = vpack.c.b16 %v1547, %v1546
      %v1557 = vpack.c.b16 %v1549, %v1548
      %1566 = vmatprep.subr.bf16.mxu0 0
      %1567 = vmatpush1.bf16.msra.mxu0 %v1550
      %1568 = vmatprep.subr.bf16.mxu0 0
      %1569 = vmatpush1.bf16.msra.mxu0 %v1551
      %1570 = vmatprep.subr.bf16.mxu0 0
      %1571 = vmatpush1.bf16.msra.mxu0 %v1552
      %1572 = vmatprep.subr.bf16.mxu0 0
      %1573 = vmatpush1.bf16.msra.mxu0 %v1553
      %1574 = vmatprep.subr.bf16.mxu0 0
      %1575 = vmatpush1.bf16.msra.mxu0 %v1554
      %1576 = vmatprep.subr.bf16.mxu0 0
      %1577 = vmatpush1.bf16.msra.mxu0 %v1555
      %1578 = vmatprep.subr.bf16.mxu0 0
      %1579 = vmatpush1.bf16.msra.mxu0 %v1556
      %1580 = vmatprep.subr.bf16.mxu0 0
      %1581 = vmatpush1.bf16.msra.mxu0 %v1557
      %1582 = vmatprep.subr.bf16.mxu0 0
      %1583 = vmatpush1.bf16.msra.mxu0 0
      %1584 = vmatprep.subr.bf16.mxu0 0
      %1585 = vmatpush1.bf16.msra.mxu0 0
      %1586 = vmatprep.subr.bf16.mxu0 0
      %1587 = vmatpush1.bf16.msra.mxu0 0
      %1588 = vmatprep.subr.bf16.mxu0 0
      %1589 = vmatpush1.bf16.msra.mxu0 0
      %1590 = vmatprep.subr.bf16.mxu0 0
      %1591 = vmatpush1.bf16.msra.mxu0 0
      %1592 = vmatprep.subr.bf16.mxu0 0
      %1593 = vmatpush1.bf16.msra.mxu0 0
      %1594 = vmatprep.subr.bf16.mxu0 0
      %1595 = vmatpush1.bf16.msra.mxu0 0
      %1596 = vmatprep.subr.bf16.mxu0 0
      %1597 = vmatpush1.bf16.msra.mxu0 0
      %1598 = vmatprep.mubr.bf16.mxu0 0
      %1599 = vmatmul.mubr.bf16.gmra.mrb[0].mxu0 %v1486
      %v1600 = vpop.f32.mrb[0].mxu0
      %v1601 = vadd.f32 0.0, %v1600
      %v1602 = vpop.f32.mrb[0].mxu0
      %v1603 = vpop.f32.mrb[0].mxu0
      %v1604 = vadd.f32 0.0, %v1603
      %v1605 = vpop.f32.mrb[0].mxu0
      %1606 = vmatprep.mubr.bf16.mxu0 0
      %1607 = vmatmul.mubr.bf16.gmra.mrb[0].mxu0 %v1487
      %v1608 = vpop.f32.mrb[0].mxu0
      %v1609 = vadd.f32 0.0, %v1608
      %v1610 = vpop.f32.mrb[0].mxu0
      %v1611 = vpop.f32.mrb[0].mxu0
      %v1612 = vadd.f32 0.0, %v1611
      %v1613 = vpop.f32.mrb[0].mxu0
      %1614 = vmatprep.mubr.bf16.mxu0 0
      %1615 = vmatmul.mubr.bf16.gmra.mrb[0].mxu0 %v1488
      %v1616 = vpop.f32.mrb[0].mxu0
      %v1617 = vadd.f32 0.0, %v1616
      %v1618 = vpop.f32.mrb[0].mxu0
      %v1619 = vpop.f32.mrb[0].mxu0
      %v1620 = vadd.f32 0.0, %v1619
      %v1621 = vpop.f32.mrb[0].mxu0
      %1622 = vmatprep.mubr.bf16.mxu0 0
      %1623 = vmatmul.mubr.bf16.gmra.mrb[0].mxu0 %v1489
      %v1624 = vpop.f32.mrb[0].mxu0
      %v1625 = vadd.f32 0.0, %v1624
      %v1626 = vpop.f32.mrb[0].mxu0
      %v1627 = vpop.f32.mrb[0].mxu0
      %v1628 = vadd.f32 0.0, %v1627
      %v1629 = vpop.f32.mrb[0].mxu0
      %1630 = vmatprep.mubr.bf16.mxu0 0
      %1631 = vmatmul.mubr.bf16.gmra.mrb[0].mxu0 %v1490
      %v1632 = vpop.f32.mrb[0].mxu0
      %v1633 = vadd.f32 0.0, %v1632
      %v1634 = vpop.f32.mrb[0].mxu0
      %v1635 = vpop.f32.mrb[0].mxu0
      %v1636 = vadd.f32 0.0, %v1635
      %v1637 = vpop.f32.mrb[0].mxu0
      %1638 = vmatprep.mubr.bf16.mxu0 0
      %1639 = vmatmul.mubr.bf16.gmra.mrb[0].mxu0 %v1491
      %v1640 = vpop.f32.mrb[0].mxu0
      %v1641 = vadd.f32 0.0, %v1640
      %v1642 = vpop.f32.mrb[0].mxu0
      %v1643 = vpop.f32.mrb[0].mxu0
      %v1644 = vadd.f32 0.0, %v1643
      %v1645 = vpop.f32.mrb[0].mxu0
      %1646 = vmatprep.mubr.bf16.mxu0 0
      %1647 = vmatmul.mubr.bf16.gmra.mrb[0].mxu0 %v1492
      %v1648 = vpop.f32.mrb[0].mxu0
      %v1649 = vadd.f32 0.0, %v1648
      %v1650 = vpop.f32.mrb[0].mxu0
      %v1651 = vpop.f32.mrb[0].mxu0
      %v1652 = vadd.f32 0.0, %v1651
      %v1653 = vpop.f32.mrb[0].mxu0
      %1654 = vmatprep.mubr.bf16.mxu0 0
      %1655 = vmatmul.mubr.bf16.gmra.mrb[0].mxu0 %v1493
      %v1656 = vpop.f32.mrb[0].mxu0
      %v1657 = vadd.f32 0.0, %v1656
      %v1658 = vpop.f32.mrb[0].mxu0
      %v1659 = vpop.f32.mrb[0].mxu0
      %v1660 = vadd.f32 0.0, %v1659
      %v1661 = vpop.f32.mrb[0].mxu0
      %1662 = vmatprep.mubr.bf16.mxu0 0
      %1663 = vmatmul.mubr.bf16.gmra.mrb[0].mxu0 %v1494
      %v1664 = vpop.f32.mrb[0].mxu0
      %v1665 = vadd.f32 0.0, %v1664
      %v1666 = vpop.f32.mrb[0].mxu0
      %v1667 = vpop.f32.mrb[0].mxu0
      %v1668 = vadd.f32 0.0, %v1667
      %v1669 = vpop.f32.mrb[0].mxu0
      %1670 = vmatprep.mubr.bf16.mxu0 0
      %1671 = vmatmul.mubr.bf16.gmra.mrb[0].mxu0 %v1495
      %v1672 = vpop.f32.mrb[0].mxu0
      %v1673 = vadd.f32 0.0, %v1672
      %v1674 = vpop.f32.mrb[0].mxu0
      %v1675 = vpop.f32.mrb[0].mxu0
      %v1676 = vadd.f32 0.0, %v1675
      %v1677 = vpop.f32.mrb[0].mxu0
      %1678 = vmatprep.mubr.bf16.mxu0 0
      %1679 = vmatmul.mubr.bf16.gmra.mrb[0].mxu0 %v1496
      %v1680 = vpop.f32.mrb[0].mxu0
      %v1681 = vadd.f32 0.0, %v1680
      %v1682 = vpop.f32.mrb[0].mxu0
      %v1683 = vpop.f32.mrb[0].mxu0
      %v1684 = vadd.f32 0.0, %v1683
      %v1685 = vpop.f32.mrb[0].mxu0
      %1686 = vmatprep.mubr.bf16.mxu0 0
      %1687 = vmatmul.mubr.bf16.gmra.mrb[0].mxu0 %v1497
      %v1688 = vpop.f32.mrb[0].mxu0
      %v1689 = vadd.f32 0.0, %v1688
      %v1690 = vpop.f32.mrb[0].mxu0
      %v1691 = vpop.f32.mrb[0].mxu0
      %v1692 = vadd.f32 0.0, %v1691
      %v1693 = vpop.f32.mrb[0].mxu0
      %1694 = vmatprep.mubr.bf16.mxu0 0
      %1695 = vmatmul.mubr.bf16.gmra.mrb[0].mxu0 %v1498
      %v1696 = vpop.f32.mrb[0].mxu0
      %v1697 = vadd.f32 0.0, %v1696
      %v1698 = vpop.f32.mrb[0].mxu0
      %v1699 = vpop.f32.mrb[0].mxu0
      %v1700 = vadd.f32 0.0, %v1699
      %v1701 = vpop.f32.mrb[0].mxu0
      %1702 = vmatprep.mubr.bf16.mxu0 0
      %1703 = vmatmul.mubr.bf16.gmra.mrb[0].mxu0 %v1499
      %v1704 = vpop.f32.mrb[0].mxu0
      %v1705 = vadd.f32 0.0, %v1704
      %v1706 = vpop.f32.mrb[0].mxu0
      %v1707 = vpop.f32.mrb[0].mxu0
      %v1708 = vadd.f32 0.0, %v1707
      %v1709 = vpop.f32.mrb[0].mxu0
      %1710 = vmatprep.mubr.bf16.mxu0 0
      %1711 = vmatmul.mubr.bf16.gmra.mrb[0].mxu0 %v1500
      %v1712 = vpop.f32.mrb[0].mxu0
      %v1713 = vadd.f32 0.0, %v1712
      %v1714 = vpop.f32.mrb[0].mxu0
      %v1715 = vpop.f32.mrb[0].mxu0
      %v1716 = vadd.f32 0.0, %v1715
      %v1717 = vpop.f32.mrb[0].mxu0
      %1718 = vmatprep.mubr.bf16.mxu0 0
      %1719 = vmatmul.mubr.bf16.gmra.mrb[0].mxu0 %v1501
      %v1720 = vpop.f32.mrb[0].mxu0
      %v1721 = vadd.f32 0.0, %v1720
      %v1722 = vpop.f32.mrb[0].mxu0
      %v1723 = vpop.f32.mrb[0].mxu0
      %v1724 = vadd.f32 0.0, %v1723
      %v1725 = vpop.f32.mrb[0].mxu0
      %1726 = vdwg.mxu0
      %v1727 = vadd.f32 %v1148, %v1601
      %v1728 = vadd.f32 %v1151, %v1604
      %v1729 = vadd.f32 %v1156, %v1609
      %v1730 = vadd.f32 %v1159, %v1612
      %v1731 = vadd.f32 %v1164, %v1617
      %v1732 = vadd.f32 %v1167, %v1620
      %v1733 = vadd.f32 %v1172, %v1625
      %v1734 = vadd.f32 %v1175, %v1628
      %v1735 = vadd.f32 %v1180, %v1633
      %v1736 = vadd.f32 %v1183, %v1636
      %v1737 = vadd.f32 %v1188, %v1641
      %v1738 = vadd.f32 %v1191, %v1644
      %v1739 = vadd.f32 %v1196, %v1649
      %v1740 = vadd.f32 %v1199, %v1652
      %v1741 = vadd.f32 %v1204, %v1657
      %v1742 = vadd.f32 %v1207, %v1660
      %v1743 = vadd.f32 %v1212, %v1665
      %v1744 = vadd.f32 %v1215, %v1668
      %v1745 = vadd.f32 %v1220, %v1673
      %v1746 = vadd.f32 %v1223, %v1676
      %v1747 = vadd.f32 %v1228, %v1681
      %v1748 = vadd.f32 %v1231, %v1684
      %v1749 = vadd.f32 %v1236, %v1689
      %v1750 = vadd.f32 %v1239, %v1692
      %v1751 = vadd.f32 %v1244, %v1697
      %v1752 = vadd.f32 %v1247, %v1700
      %v1753 = vadd.f32 %v1252, %v1705
      %v1754 = vadd.f32 %v1255, %v1708
      %v1755 = vadd.f32 %v1260, %v1713
      %v1756 = vadd.f32 %v1263, %v1716
      %v1757 = vadd.f32 %v1268, %v1721
      %v1758 = vadd.f32 %v1271, %v1724
      %s1759 = sadd.s32 %s224, 1
      %s1760 = smul.u32 %s1759, 3
      %s1761 = smul.addr %s1760, 4
      %s1762 = scalar_lea.vmem %s211, %s1761
      %v1763 = vld [vmem:[%s1762] sm:$0xf]
      %v1764 = vld [vmem:[%s1762 + $0x4] sm:$0xf]
      %v1765 = vld [vmem:[%s1762 + $0xc] sm:$0xf]
      %v1766 = vld [vmem:[%s1762 + $0x10] sm:$0xf]
      %v1767 = vld [vmem:[%s1762 + $0x18] sm:$0xf]
      %v1768 = vld [vmem:[%s1762 + $0x1c] sm:$0xf]
      %v1769 = vld [vmem:[%s1762 + $0x24] sm:$0xf]
      %v1770 = vld [vmem:[%s1762 + $0x28] sm:$0xf]
      %v1771 = vld [vmem:[%s1762 + $0x30] sm:$0xf]
      %v1772 = vld [vmem:[%s1762 + $0x34] sm:$0xf]
      %v1773 = vld [vmem:[%s1762 + $0x3c] sm:$0xf]
      %v1774 = vld [vmem:[%s1762 + $0x40] sm:$0xf]
      %v1775 = vld [vmem:[%s1762 + $0x48] sm:$0xf]
      %v1776 = vld [vmem:[%s1762 + $0x4c] sm:$0xf]
      %v1777 = vld [vmem:[%s1762 + $0x54] sm:$0xf]
      %v1778 = vld [vmem:[%s1762 + $0x58] sm:$0xf]
      %v1779 = vld [vmem:[%s1762 + $0x60] sm:$0xf]
      %v1780 = vld [vmem:[%s1762 + $0x64] sm:$0xf]
      %v1781 = vld [vmem:[%s1762 + $0x6c] sm:$0xf]
      %v1782 = vld [vmem:[%s1762 + $0x70] sm:$0xf]
      %v1783 = vld [vmem:[%s1762 + $0x78] sm:$0xf]
      %v1784 = vld [vmem:[%s1762 + $0x7c] sm:$0xf]
      %v1785 = vld [vmem:[%s1762 + $0x84] sm:$0xf]
      %v1786 = vld [vmem:[%s1762 + $0x88] sm:$0xf]
      %v1787 = vld [vmem:[%s1762 + $0x90] sm:$0xf]
      %v1788 = vld [vmem:[%s1762 + $0x94] sm:$0xf]
      %v1789 = vld [vmem:[%s1762 + $0x9c] sm:$0xf]
      %v1790 = vld [vmem:[%s1762 + $0xa0] sm:$0xf]
      %v1791 = vld [vmem:[%s1762 + $0xa8] sm:$0xf]
      %v1792 = vld [vmem:[%s1762 + $0xac] sm:$0xf]
      %v1793 = vld [vmem:[%s1762 + $0xb4] sm:$0xf]
      %v1794 = vld [vmem:[%s1762 + $0xb8] sm:$0xf]
      %s1795 = scalar_lea.vmem %s1, 192
      %v1796 = vld [vmem:[%s1795] sm:$0xf]
      %v1797 = vld [vmem:[%s1795 + $0x4] sm:$0xf]
      %v1798 = vld [vmem:[%s1795 + $0x8] sm:$0xf]
      %v1799 = vld [vmem:[%s1795 + $0xc] sm:$0xf]
      %v1800 = vld [vmem:[%s1795 + $0x10] sm:$0xf]
      %v1801 = vld [vmem:[%s1795 + $0x14] sm:$0xf]
      %v1802 = vld [vmem:[%s1795 + $0x18] sm:$0xf]
      %v1803 = vld [vmem:[%s1795 + $0x1c] sm:$0xf]
      %v1804 = vld [vmem:[%s1795 + $0x20] sm:$0xf]
      %v1805 = vld [vmem:[%s1795 + $0x24] sm:$0xf]
      %v1806 = vld [vmem:[%s1795 + $0x28] sm:$0xf]
      %v1807 = vld [vmem:[%s1795 + $0x2c] sm:$0xf]
      %v1808 = vld [vmem:[%s1795 + $0x30] sm:$0xf]
      %v1809 = vld [vmem:[%s1795 + $0x34] sm:$0xf]
      %v1810 = vld [vmem:[%s1795 + $0x38] sm:$0xf]
      %v1811 = vld [vmem:[%s1795 + $0x3c] sm:$0xf]
      %v1844 = vunpack.c.l.b16 %v1763
      %v1845 = vunpack.c.l.b16 %v1764
      %v1846 = vunpack.c.l.b16 %v1765
      %v1847 = vunpack.c.l.b16 %v1766
      %v1848 = vunpack.c.l.b16 %v1767
      %v1849 = vunpack.c.l.b16 %v1768
      %v1850 = vunpack.c.l.b16 %v1769
      %v1851 = vunpack.c.l.b16 %v1770
      %v1852 = vunpack.c.l.b16 %v1771
      %v1853 = vunpack.c.l.b16 %v1772
      %v1854 = vunpack.c.l.b16 %v1773
      %v1855 = vunpack.c.l.b16 %v1774
      %v1856 = vunpack.c.l.b16 %v1775
      %v1857 = vunpack.c.l.b16 %v1776
      %v1858 = vunpack.c.l.b16 %v1777
      %v1859 = vunpack.c.l.b16 %v1778
      %v1860 = vunpack.c.l.b16 %v1779
      %v1861 = vunpack.c.l.b16 %v1780
      %v1862 = vunpack.c.l.b16 %v1781
      %v1863 = vunpack.c.l.b16 %v1782
      %v1864 = vunpack.c.l.b16 %v1783
      %v1865 = vunpack.c.l.b16 %v1784
      %v1866 = vunpack.c.l.b16 %v1785
      %v1867 = vunpack.c.l.b16 %v1786
      %v1868 = vunpack.c.l.b16 %v1787
      %v1869 = vunpack.c.l.b16 %v1788
      %v1870 = vunpack.c.l.b16 %v1789
      %v1871 = vunpack.c.l.b16 %v1790
      %v1872 = vunpack.c.l.b16 %v1791
      %v1873 = vunpack.c.l.b16 %v1792
      %v1874 = vunpack.c.l.b16 %v1793
      %v1875 = vunpack.c.l.b16 %v1794
      %v1876 = vpack.c.b16 %v1845, %v1844
      %v1877 = vpack.c.b16 %v1847, %v1846
      %v1878 = vpack.c.b16 %v1849, %v1848
      %v1879 = vpack.c.b16 %v1851, %v1850
      %v1880 = vpack.c.b16 %v1853, %v1852
      %v1881 = vpack.c.b16 %v1855, %v1854
      %v1882 = vpack.c.b16 %v1857, %v1856
      %v1883 = vpack.c.b16 %v1859, %v1858
      %v1884 = vpack.c.b16 %v1861, %v1860
      %v1885 = vpack.c.b16 %v1863, %v1862
      %v1886 = vpack.c.b16 %v1865, %v1864
      %v1887 = vpack.c.b16 %v1867, %v1866
      %v1888 = vpack.c.b16 %v1869, %v1868
      %v1889 = vpack.c.b16 %v1871, %v1870
      %v1890 = vpack.c.b16 %v1873, %v1872
      %v1891 = vpack.c.b16 %v1875, %v1874
      %v1924 = vunpack.c.l.b16 %v1796
      %v1925 = vunpack.c.l.b16 %v1797
      %v1926 = vunpack.c.l.b16 %v1798
      %v1927 = vunpack.c.l.b16 %v1799
      %v1928 = vunpack.c.l.b16 %v1800
      %v1929 = vunpack.c.l.b16 %v1801
      %v1930 = vunpack.c.l.b16 %v1802
      %v1931 = vunpack.c.l.b16 %v1803
      %v1932 = vunpack.c.l.b16 %v1804
      %v1933 = vunpack.c.l.b16 %v1805
      %v1934 = vunpack.c.l.b16 %v1806
      %v1935 = vunpack.c.l.b16 %v1807
      %v1936 = vunpack.c.l.b16 %v1808
      %v1937 = vunpack.c.l.b16 %v1809
      %v1938 = vunpack.c.l.b16 %v1810
      %v1939 = vunpack.c.l.b16 %v1811
      %v1940 = vpack.c.b16 %v1925, %v1924
      %v1941 = vpack.c.b16 %v1927, %v1926
      %v1942 = vpack.c.b16 %v1929, %v1928
      %v1943 = vpack.c.b16 %v1931, %v1930
      %v1944 = vpack.c.b16 %v1933, %v1932
      %v1945 = vpack.c.b16 %v1935, %v1934
      %v1946 = vpack.c.b16 %v1937, %v1936
      %v1947 = vpack.c.b16 %v1939, %v1938
      %1956 = vmatprep.subr.bf16.mxu0 0
      %1957 = vmatpush1.bf16.msra.mxu0 %v1940
      %1958 = vmatprep.subr.bf16.mxu0 0
      %1959 = vmatpush1.bf16.msra.mxu0 %v1941
      %1960 = vmatprep.subr.bf16.mxu0 0
      %1961 = vmatpush1.bf16.msra.mxu0 %v1942
      %1962 = vmatprep.subr.bf16.mxu0 0
      %1963 = vmatpush1.bf16.msra.mxu0 %v1943
      %1964 = vmatprep.subr.bf16.mxu0 0
      %1965 = vmatpush1.bf16.msra.mxu0 %v1944
      %1966 = vmatprep.subr.bf16.mxu0 0
      %1967 = vmatpush1.bf16.msra.mxu0 %v1945
      %1968 = vmatprep.subr.bf16.mxu0 0
      %1969 = vmatpush1.bf16.msra.mxu0 %v1946
      %1970 = vmatprep.subr.bf16.mxu0 0
      %1971 = vmatpush1.bf16.msra.mxu0 %v1947
      %1972 = vmatprep.subr.bf16.mxu0 0
      %1973 = vmatpush1.bf16.msra.mxu0 0
      %1974 = vmatprep.subr.bf16.mxu0 0
      %1975 = vmatpush1.bf16.msra.mxu0 0
      %1976 = vmatprep.subr.bf16.mxu0 0
      %1977 = vmatpush1.bf16.msra.mxu0 0
      %1978 = vmatprep.subr.bf16.mxu0 0
      %1979 = vmatpush1.bf16.msra.mxu0 0
      %1980 = vmatprep.subr.bf16.mxu0 0
      %1981 = vmatpush1.bf16.msra.mxu0 0
      %1982 = vmatprep.subr.bf16.mxu0 0
      %1983 = vmatpush1.bf16.msra.mxu0 0
      %1984 = vmatprep.subr.bf16.mxu0 0
      %1985 = vmatpush1.bf16.msra.mxu0 0
      %1986 = vmatprep.subr.bf16.mxu0 0
      %1987 = vmatpush1.bf16.msra.mxu0 0
      %1988 = vmatprep.mubr.bf16.mxu0 0
      %1989 = vmatmul.mubr.bf16.gmra.mrb[0].mxu0 %v1876
      %v1990 = vpop.f32.mrb[0].mxu0
      %v1991 = vadd.f32 0.0, %v1990
      %v1992 = vpop.f32.mrb[0].mxu0
      %v1993 = vpop.f32.mrb[0].mxu0
      %v1994 = vadd.f32 0.0, %v1993
      %v1995 = vpop.f32.mrb[0].mxu0
      %1996 = vmatprep.mubr.bf16.mxu0 0
      %1997 = vmatmul.mubr.bf16.gmra.mrb[0].mxu0 %v1877
      %v1998 = vpop.f32.mrb[0].mxu0
      %v1999 = vadd.f32 0.0, %v1998
      %v2000 = vpop.f32.mrb[0].mxu0
      %v2001 = vpop.f32.mrb[0].mxu0
      %v2002 = vadd.f32 0.0, %v2001
      %v2003 = vpop.f32.mrb[0].mxu0
      %2004 = vmatprep.mubr.bf16.mxu0 0
      %2005 = vmatmul.mubr.bf16.gmra.mrb[0].mxu0 %v1878
      %v2006 = vpop.f32.mrb[0].mxu0
      %v2007 = vadd.f32 0.0, %v2006
      %v2008 = vpop.f32.mrb[0].mxu0
      %v2009 = vpop.f32.mrb[0].mxu0
      %v2010 = vadd.f32 0.0, %v2009
      %v2011 = vpop.f32.mrb[0].mxu0
      %2012 = vmatprep.mubr.bf16.mxu0 0
      %2013 = vmatmul.mubr.bf16.gmra.mrb[0].mxu0 %v1879
      %v2014 = vpop.f32.mrb[0].mxu0
      %v2015 = vadd.f32 0.0, %v2014
      %v2016 = vpop.f32.mrb[0].mxu0
      %v2017 = vpop.f32.mrb[0].mxu0
      %v2018 = vadd.f32 0.0, %v2017
      %v2019 = vpop.f32.mrb[0].mxu0
      %2020 = vmatprep.mubr.bf16.mxu0 0
      %2021 = vmatmul.mubr.bf16.gmra.mrb[0].mxu0 %v1880
      %v2022 = vpop.f32.mrb[0].mxu0
      %v2023 = vadd.f32 0.0, %v2022
      %v2024 = vpop.f32.mrb[0].mxu0
      %v2025 = vpop.f32.mrb[0].mxu0
      %v2026 = vadd.f32 0.0, %v2025
      %v2027 = vpop.f32.mrb[0].mxu0
      %2028 = vmatprep.mubr.bf16.mxu0 0
      %2029 = vmatmul.mubr.bf16.gmra.mrb[0].mxu0 %v1881
      %v2030 = vpop.f32.mrb[0].mxu0
      %v2031 = vadd.f32 0.0, %v2030
      %v2032 = vpop.f32.mrb[0].mxu0
      %v2033 = vpop.f32.mrb[0].mxu0
      %v2034 = vadd.f32 0.0, %v2033
      %v2035 = vpop.f32.mrb[0].mxu0
      %2036 = vmatprep.mubr.bf16.mxu0 0
      %2037 = vmatmul.mubr.bf16.gmra.mrb[0].mxu0 %v1882
      %v2038 = vpop.f32.mrb[0].mxu0
      %v2039 = vadd.f32 0.0, %v2038
      %v2040 = vpop.f32.mrb[0].mxu0
      %v2041 = vpop.f32.mrb[0].mxu0
      %v2042 = vadd.f32 0.0, %v2041
      %v2043 = vpop.f32.mrb[0].mxu0
      %2044 = vmatprep.mubr.bf16.mxu0 0
      %2045 = vmatmul.mubr.bf16.gmra.mrb[0].mxu0 %v1883
      %v2046 = vpop.f32.mrb[0].mxu0
      %v2047 = vadd.f32 0.0, %v2046
      %v2048 = vpop.f32.mrb[0].mxu0
      %v2049 = vpop.f32.mrb[0].mxu0
      %v2050 = vadd.f32 0.0, %v2049
      %v2051 = vpop.f32.mrb[0].mxu0
      %2052 = vmatprep.mubr.bf16.mxu0 0
      %2053 = vmatmul.mubr.bf16.gmra.mrb[0].mxu0 %v1884
      %v2054 = vpop.f32.mrb[0].mxu0
      %v2055 = vadd.f32 0.0, %v2054
      %v2056 = vpop.f32.mrb[0].mxu0
      %v2057 = vpop.f32.mrb[0].mxu0
      %v2058 = vadd.f32 0.0, %v2057
      %v2059 = vpop.f32.mrb[0].mxu0
      %2060 = vmatprep.mubr.bf16.mxu0 0
      %2061 = vmatmul.mubr.bf16.gmra.mrb[0].mxu0 %v1885
      %v2062 = vpop.f32.mrb[0].mxu0
      %v2063 = vadd.f32 0.0, %v2062
      %v2064 = vpop.f32.mrb[0].mxu0
      %v2065 = vpop.f32.mrb[0].mxu0
      %v2066 = vadd.f32 0.0, %v2065
      %v2067 = vpop.f32.mrb[0].mxu0
      %2068 = vmatprep.mubr.bf16.mxu0 0
      %2069 = vmatmul.mubr.bf16.gmra.mrb[0].mxu0 %v1886
      %v2070 = vpop.f32.mrb[0].mxu0
      %v2071 = vadd.f32 0.0, %v2070
      %v2072 = vpop.f32.mrb[0].mxu0
      %v2073 = vpop.f32.mrb[0].mxu0
      %v2074 = vadd.f32 0.0, %v2073
      %v2075 = vpop.f32.mrb[0].mxu0
      %2076 = vmatprep.mubr.bf16.mxu0 0
      %2077 = vmatmul.mubr.bf16.gmra.mrb[0].mxu0 %v1887
      %v2078 = vpop.f32.mrb[0].mxu0
      %v2079 = vadd.f32 0.0, %v2078
      %v2080 = vpop.f32.mrb[0].mxu0
      %v2081 = vpop.f32.mrb[0].mxu0
      %v2082 = vadd.f32 0.0, %v2081
      %v2083 = vpop.f32.mrb[0].mxu0
      %2084 = vmatprep.mubr.bf16.mxu0 0
      %2085 = vmatmul.mubr.bf16.gmra.mrb[0].mxu0 %v1888
      %v2086 = vpop.f32.mrb[0].mxu0
      %v2087 = vadd.f32 0.0, %v2086
      %v2088 = vpop.f32.mrb[0].mxu0
      %v2089 = vpop.f32.mrb[0].mxu0
      %v2090 = vadd.f32 0.0, %v2089
      %v2091 = vpop.f32.mrb[0].mxu0
      %2092 = vmatprep.mubr.bf16.mxu0 0
      %2093 = vmatmul.mubr.bf16.gmra.mrb[0].mxu0 %v1889
      %v2094 = vpop.f32.mrb[0].mxu0
      %v2095 = vadd.f32 0.0, %v2094
      %v2096 = vpop.f32.mrb[0].mxu0
      %v2097 = vpop.f32.mrb[0].mxu0
      %v2098 = vadd.f32 0.0, %v2097
      %v2099 = vpop.f32.mrb[0].mxu0
      %2100 = vmatprep.mubr.bf16.mxu0 0
      %2101 = vmatmul.mubr.bf16.gmra.mrb[0].mxu0 %v1890
      %v2102 = vpop.f32.mrb[0].mxu0
      %v2103 = vadd.f32 0.0, %v2102
      %v2104 = vpop.f32.mrb[0].mxu0
      %v2105 = vpop.f32.mrb[0].mxu0
      %v2106 = vadd.f32 0.0, %v2105
      %v2107 = vpop.f32.mrb[0].mxu0
      %2108 = vmatprep.mubr.bf16.mxu0 0
      %2109 = vmatmul.mubr.bf16.gmra.mrb[0].mxu0 %v1891
      %v2110 = vpop.f32.mrb[0].mxu0
      %v2111 = vadd.f32 0.0, %v2110
      %v2112 = vpop.f32.mrb[0].mxu0
      %v2113 = vpop.f32.mrb[0].mxu0
      %v2114 = vadd.f32 0.0, %v2113
      %v2115 = vpop.f32.mrb[0].mxu0
      %2116 = vdwg.mxu0
      %v2117 = vadd.f32 %v1727, %v1991
      %v2118 = vadd.f32 %v1728, %v1994
      %v2119 = vadd.f32 %v1729, %v1999
      %v2120 = vadd.f32 %v1730, %v2002
      %v2121 = vadd.f32 %v1731, %v2007
      %v2122 = vadd.f32 %v1732, %v2010
      %v2123 = vadd.f32 %v1733, %v2015
      %v2124 = vadd.f32 %v1734, %v2018
      %v2125 = vadd.f32 %v1735, %v2023
      %v2126 = vadd.f32 %v1736, %v2026
      %v2127 = vadd.f32 %v1737, %v2031
      %v2128 = vadd.f32 %v1738, %v2034
      %v2129 = vadd.f32 %v1739, %v2039
      %v2130 = vadd.f32 %v1740, %v2042
      %v2131 = vadd.f32 %v1741, %v2047
      %v2132 = vadd.f32 %v1742, %v2050
      %v2133 = vadd.f32 %v1743, %v2055
      %v2134 = vadd.f32 %v1744, %v2058
      %v2135 = vadd.f32 %v1745, %v2063
      %v2136 = vadd.f32 %v1746, %v2066
      %v2137 = vadd.f32 %v1747, %v2071
      %v2138 = vadd.f32 %v1748, %v2074
      %v2139 = vadd.f32 %v1749, %v2079
      %v2140 = vadd.f32 %v1750, %v2082
      %v2141 = vadd.f32 %v1751, %v2087
      %v2142 = vadd.f32 %v1752, %v2090
      %v2143 = vadd.f32 %v1753, %v2095
      %v2144 = vadd.f32 %v1754, %v2098
      %v2145 = vadd.f32 %v1755, %v2103
      %v2146 = vadd.f32 %v1756, %v2106
      %v2147 = vadd.f32 %v1757, %v2111
      %v2148 = vadd.f32 %v1758, %v2114
      %v2149 = vld [vmem:[%s1762] sm:$0xf]
      %v2150 = vld [vmem:[%s1762 + $0x4] sm:$0xf]
      %v2151 = vld [vmem:[%s1762 + $0x8] sm:$0x1]
      %v2152 = vld [vmem:[%s1762 + $0xc] sm:$0xf]
      %v2153 = vld [vmem:[%s1762 + $0x10] sm:$0xf]
      %v2154 = vld [vmem:[%s1762 + $0x14] sm:$0x1]
      %v2155 = vld [vmem:[%s1762 + $0x18] sm:$0xf]
      %v2156 = vld [vmem:[%s1762 + $0x1c] sm:$0xf]
      %v2157 = vld [vmem:[%s1762 + $0x20] sm:$0x1]
      %v2158 = vld [vmem:[%s1762 + $0x24] sm:$0xf]
      %v2159 = vld [vmem:[%s1762 + $0x28] sm:$0xf]
      %v2160 = vld [vmem:[%s1762 + $0x2c] sm:$0x1]
      %v2161 = vld [vmem:[%s1762 + $0x30] sm:$0xf]
      %v2162 = vld [vmem:[%s1762 + $0x34] sm:$0xf]
      %v2163 = vld [vmem:[%s1762 + $0x38] sm:$0x1]
      %v2164 = vld [vmem:[%s1762 + $0x3c] sm:$0xf]
      %v2165 = vld [vmem:[%s1762 + $0x40] sm:$0xf]
      %v2166 = vld [vmem:[%s1762 + $0x44] sm:$0x1]
      %v2167 = vld [vmem:[%s1762 + $0x48] sm:$0xf]
      %v2168 = vld [vmem:[%s1762 + $0x4c] sm:$0xf]
      %v2169 = vld [vmem:[%s1762 + $0x50] sm:$0x1]
      %v2170 = vld [vmem:[%s1762 + $0x54] sm:$0xf]
      %v2171 = vld [vmem:[%s1762 + $0x58] sm:$0xf]
      %v2172 = vld [vmem:[%s1762 + $0x5c] sm:$0x1]
      %v2173 = vld [vmem:[%s1762 + $0x60] sm:$0xf]
      %v2174 = vld [vmem:[%s1762 + $0x64] sm:$0xf]
      %v2175 = vld [vmem:[%s1762 + $0x68] sm:$0x1]
      %v2176 = vld [vmem:[%s1762 + $0x6c] sm:$0xf]
      %v2177 = vld [vmem:[%s1762 + $0x70] sm:$0xf]
      %v2178 = vld [vmem:[%s1762 + $0x74] sm:$0x1]
      %v2179 = vld [vmem:[%s1762 + $0x78] sm:$0xf]
      %v2180 = vld [vmem:[%s1762 + $0x7c] sm:$0xf]
      %v2181 = vld [vmem:[%s1762 + $0x80] sm:$0x1]
      %v2182 = vld [vmem:[%s1762 + $0x84] sm:$0xf]
      %v2183 = vld [vmem:[%s1762 + $0x88] sm:$0xf]
      %v2184 = vld [vmem:[%s1762 + $0x8c] sm:$0x1]
      %v2185 = vld [vmem:[%s1762 + $0x90] sm:$0xf]
      %v2186 = vld [vmem:[%s1762 + $0x94] sm:$0xf]
      %v2187 = vld [vmem:[%s1762 + $0x98] sm:$0x1]
      %v2188 = vld [vmem:[%s1762 + $0x9c] sm:$0xf]
      %v2189 = vld [vmem:[%s1762 + $0xa0] sm:$0xf]
      %v2190 = vld [vmem:[%s1762 + $0xa4] sm:$0x1]
      %v2191 = vld [vmem:[%s1762 + $0xa8] sm:$0xf]
      %v2192 = vld [vmem:[%s1762 + $0xac] sm:$0xf]
      %v2193 = vld [vmem:[%s1762 + $0xb0] sm:$0x1]
      %v2194 = vld [vmem:[%s1762 + $0xb4] sm:$0xf]
      %v2195 = vld [vmem:[%s1762 + $0xb8] sm:$0xf]
      %v2196 = vld [vmem:[%s1762 + $0xbc] sm:$0x1]
      %v2198 = vshrl.u32 %v2149, 16
      %v2200 = vrot.slane %v2198, 4
      %v2201 = vshll.u32 %v2149, 16
      %v2203 = vrot.slane %v2201, 5
      %v2204 = vor.u32 %v2200, %v2203
      %v2205 = vrot.slane %v2204, 4
      %v2207 = vshll.u32 %v2150, 16
      %v2209 = vrot.slane %v2207, 5
      %v2210 = vsel %vm294, %v2205, %v2209
      %v2211 = vshrl.u32 %v2150, 16
      %v2213 = vrot.slane %v2211, 4
      %v2214 = vor.u32 %v2213, %v2209
      %v2215 = vrot.slane %v2214, 4
      %v2217 = vshll.u32 %v2151, 16
      %v2219 = vrot.slane %v2217, 5
      %v2220 = vsel %vm294, %v2215, %v2219
      %v2222 = vshrl.u32 %v2152, 16
      %v2224 = vrot.slane %v2222, 4
      %v2225 = vshll.u32 %v2152, 16
      %v2227 = vrot.slane %v2225, 5
      %v2228 = vor.u32 %v2224, %v2227
      %v2229 = vrot.slane %v2228, 4
      %v2231 = vshll.u32 %v2153, 16
      %v2233 = vrot.slane %v2231, 5
      %v2234 = vsel %vm294, %v2229, %v2233
      %v2235 = vshrl.u32 %v2153, 16
      %v2237 = vrot.slane %v2235, 4
      %v2238 = vor.u32 %v2237, %v2233
      %v2239 = vrot.slane %v2238, 4
      %v2241 = vshll.u32 %v2154, 16
      %v2243 = vrot.slane %v2241, 5
      %v2244 = vsel %vm294, %v2239, %v2243
      %v2246 = vshrl.u32 %v2155, 16
      %v2248 = vrot.slane %v2246, 4
      %v2249 = vshll.u32 %v2155, 16
      %v2251 = vrot.slane %v2249, 5
      %v2252 = vor.u32 %v2248, %v2251
      %v2253 = vrot.slane %v2252, 4
      %v2255 = vshll.u32 %v2156, 16
      %v2257 = vrot.slane %v2255, 5
      %v2258 = vsel %vm294, %v2253, %v2257
      %v2259 = vshrl.u32 %v2156, 16
      %v2261 = vrot.slane %v2259, 4
      %v2262 = vor.u32 %v2261, %v2257
      %v2263 = vrot.slane %v2262, 4
      %v2265 = vshll.u32 %v2157, 16
      %v2267 = vrot.slane %v2265, 5
      %v2268 = vsel %vm294, %v2263, %v2267
      %v2270 = vshrl.u32 %v2158, 16
      %v2272 = vrot.slane %v2270, 4
      %v2273 = vshll.u32 %v2158, 16
      %v2275 = vrot.slane %v2273, 5
      %v2276 = vor.u32 %v2272, %v2275
      %v2277 = vrot.slane %v2276, 4
      %v2279 = vshll.u32 %v2159, 16
      %v2281 = vrot.slane %v2279, 5
      %v2282 = vsel %vm294, %v2277, %v2281
      %v2283 = vshrl.u32 %v2159, 16
      %v2285 = vrot.slane %v2283, 4
      %v2286 = vor.u32 %v2285, %v2281
      %v2287 = vrot.slane %v2286, 4
      %v2289 = vshll.u32 %v2160, 16
      %v2291 = vrot.slane %v2289, 5
      %v2292 = vsel %vm294, %v2287, %v2291
      %v2294 = vshrl.u32 %v2161, 16
      %v2296 = vrot.slane %v2294, 4
      %v2297 = vshll.u32 %v2161, 16
      %v2299 = vrot.slane %v2297, 5
      %v2300 = vor.u32 %v2296, %v2299
      %v2301 = vrot.slane %v2300, 4
      %v2303 = vshll.u32 %v2162, 16
      %v2305 = vrot.slane %v2303, 5
      %v2306 = vsel %vm294, %v2301, %v2305
      %v2307 = vshrl.u32 %v2162, 16
      %v2309 = vrot.slane %v2307, 4
      %v2310 = vor.u32 %v2309, %v2305
      %v2311 = vrot.slane %v2310, 4
      %v2313 = vshll.u32 %v2163, 16
      %v2315 = vrot.slane %v2313, 5
      %v2316 = vsel %vm294, %v2311, %v2315
      %v2318 = vshrl.u32 %v2164, 16
      %v2320 = vrot.slane %v2318, 4
      %v2321 = vshll.u32 %v2164, 16
      %v2323 = vrot.slane %v2321, 5
      %v2324 = vor.u32 %v2320, %v2323
      %v2325 = vrot.slane %v2324, 4
      %v2327 = vshll.u32 %v2165, 16
      %v2329 = vrot.slane %v2327, 5
      %v2330 = vsel %vm294, %v2325, %v2329
      %v2331 = vshrl.u32 %v2165, 16
      %v2333 = vrot.slane %v2331, 4
      %v2334 = vor.u32 %v2333, %v2329
      %v2335 = vrot.slane %v2334, 4
      %v2337 = vshll.u32 %v2166, 16
      %v2339 = vrot.slane %v2337, 5
      %v2340 = vsel %vm294, %v2335, %v2339
      %v2342 = vshrl.u32 %v2167, 16
      %v2344 = vrot.slane %v2342, 4
      %v2345 = vshll.u32 %v2167, 16
      %v2347 = vrot.slane %v2345, 5
      %v2348 = vor.u32 %v2344, %v2347
      %v2349 = vrot.slane %v2348, 4
      %v2351 = vshll.u32 %v2168, 16
      %v2353 = vrot.slane %v2351, 5
      %v2354 = vsel %vm294, %v2349, %v2353
      %v2355 = vshrl.u32 %v2168, 16
      %v2357 = vrot.slane %v2355, 4
      %v2358 = vor.u32 %v2357, %v2353
      %v2359 = vrot.slane %v2358, 4
      %v2361 = vshll.u32 %v2169, 16
      %v2363 = vrot.slane %v2361, 5
      %v2364 = vsel %vm294, %v2359, %v2363
      %v2366 = vshrl.u32 %v2170, 16
      %v2368 = vrot.slane %v2366, 4
      %v2369 = vshll.u32 %v2170, 16
      %v2371 = vrot.slane %v2369, 5
      %v2372 = vor.u32 %v2368, %v2371
      %v2373 = vrot.slane %v2372, 4
      %v2375 = vshll.u32 %v2171, 16
      %v2377 = vrot.slane %v2375, 5
      %v2378 = vsel %vm294, %v2373, %v2377
      %v2379 = vshrl.u32 %v2171, 16
      %v2381 = vrot.slane %v2379, 4
      %v2382 = vor.u32 %v2381, %v2377
      %v2383 = vrot.slane %v2382, 4
      %v2385 = vshll.u32 %v2172, 16
      %v2387 = vrot.slane %v2385, 5
      %v2388 = vsel %vm294, %v2383, %v2387
      %v2390 = vshrl.u32 %v2173, 16
      %v2392 = vrot.slane %v2390, 4
      %v2393 = vshll.u32 %v2173, 16
      %v2395 = vrot.slane %v2393, 5
      %v2396 = vor.u32 %v2392, %v2395
      %v2397 = vrot.slane %v2396, 4
      %v2399 = vshll.u32 %v2174, 16
      %v2401 = vrot.slane %v2399, 5
      %v2402 = vsel %vm294, %v2397, %v2401
      %v2403 = vshrl.u32 %v2174, 16
      %v2405 = vrot.slane %v2403, 4
      %v2406 = vor.u32 %v2405, %v2401
      %v2407 = vrot.slane %v2406, 4
      %v2409 = vshll.u32 %v2175, 16
      %v2411 = vrot.slane %v2409, 5
      %v2412 = vsel %vm294, %v2407, %v2411
      %v2414 = vshrl.u32 %v2176, 16
      %v2416 = vrot.slane %v2414, 4
      %v2417 = vshll.u32 %v2176, 16
      %v2419 = vrot.slane %v2417, 5
      %v2420 = vor.u32 %v2416, %v2419
      %v2421 = vrot.slane %v2420, 4
      %v2423 = vshll.u32 %v2177, 16
      %v2425 = vrot.slane %v2423, 5
      %v2426 = vsel %vm294, %v2421, %v2425
      %v2427 = vshrl.u32 %v2177, 16
      %v2429 = vrot.slane %v2427, 4
      %v2430 = vor.u32 %v2429, %v2425
      %v2431 = vrot.slane %v2430, 4
      %v2433 = vshll.u32 %v2178, 16
      %v2435 = vrot.slane %v2433, 5
      %v2436 = vsel %vm294, %v2431, %v2435
      %v2438 = vshrl.u32 %v2179, 16
      %v2440 = vrot.slane %v2438, 4
      %v2441 = vshll.u32 %v2179, 16
      %v2443 = vrot.slane %v2441, 5
      %v2444 = vor.u32 %v2440, %v2443
      %v2445 = vrot.slane %v2444, 4
      %v2447 = vshll.u32 %v2180, 16
      %v2449 = vrot.slane %v2447, 5
      %v2450 = vsel %vm294, %v2445, %v2449
      %v2451 = vshrl.u32 %v2180, 16
      %v2453 = vrot.slane %v2451, 4
      %v2454 = vor.u32 %v2453, %v2449
      %v2455 = vrot.slane %v2454, 4
      %v2457 = vshll.u32 %v2181, 16
      %v2459 = vrot.slane %v2457, 5
      %v2460 = vsel %vm294, %v2455, %v2459
      %v2462 = vshrl.u32 %v2182, 16
      %v2464 = vrot.slane %v2462, 4
      %v2465 = vshll.u32 %v2182, 16
      %v2467 = vrot.slane %v2465, 5
      %v2468 = vor.u32 %v2464, %v2467
      %v2469 = vrot.slane %v2468, 4
      %v2471 = vshll.u32 %v2183, 16
      %v2473 = vrot.slane %v2471, 5
      %v2474 = vsel %vm294, %v2469, %v2473
      %v2475 = vshrl.u32 %v2183, 16
      %v2477 = vrot.slane %v2475, 4
      %v2478 = vor.u32 %v2477, %v2473
      %v2479 = vrot.slane %v2478, 4
      %v2481 = vshll.u32 %v2184, 16
      %v2483 = vrot.slane %v2481, 5
      %v2484 = vsel %vm294, %v2479, %v2483
      %v2486 = vshrl.u32 %v2185, 16
      %v2488 = vrot.slane %v2486, 4
      %v2489 = vshll.u32 %v2185, 16
      %v2491 = vrot.slane %v2489, 5
      %v2492 = vor.u32 %v2488, %v2491
      %v2493 = vrot.slane %v2492, 4
      %v2495 = vshll.u32 %v2186, 16
      %v2497 = vrot.slane %v2495, 5
      %v2498 = vsel %vm294, %v2493, %v2497
      %v2499 = vshrl.u32 %v2186, 16
      %v2501 = vrot.slane %v2499, 4
      %v2502 = vor.u32 %v2501, %v2497
      %v2503 = vrot.slane %v2502, 4
      %v2505 = vshll.u32 %v2187, 16
      %v2507 = vrot.slane %v2505, 5
      %v2508 = vsel %vm294, %v2503, %v2507
      %v2510 = vshrl.u32 %v2188, 16
      %v2512 = vrot.slane %v2510, 4
      %v2513 = vshll.u32 %v2188, 16
      %v2515 = vrot.slane %v2513, 5
      %v2516 = vor.u32 %v2512, %v2515
      %v2517 = vrot.slane %v2516, 4
      %v2519 = vshll.u32 %v2189, 16
      %v2521 = vrot.slane %v2519, 5
      %v2522 = vsel %vm294, %v2517, %v2521
      %v2523 = vshrl.u32 %v2189, 16
      %v2525 = vrot.slane %v2523, 4
      %v2526 = vor.u32 %v2525, %v2521
      %v2527 = vrot.slane %v2526, 4
      %v2529 = vshll.u32 %v2190, 16
      %v2531 = vrot.slane %v2529, 5
      %v2532 = vsel %vm294, %v2527, %v2531
      %v2534 = vshrl.u32 %v2191, 16
      %v2536 = vrot.slane %v2534, 4
      %v2537 = vshll.u32 %v2191, 16
      %v2539 = vrot.slane %v2537, 5
      %v2540 = vor.u32 %v2536, %v2539
      %v2541 = vrot.slane %v2540, 4
      %v2543 = vshll.u32 %v2192, 16
      %v2545 = vrot.slane %v2543, 5
      %v2546 = vsel %vm294, %v2541, %v2545
      %v2547 = vshrl.u32 %v2192, 16
      %v2549 = vrot.slane %v2547, 4
      %v2550 = vor.u32 %v2549, %v2545
      %v2551 = vrot.slane %v2550, 4
      %v2553 = vshll.u32 %v2193, 16
      %v2555 = vrot.slane %v2553, 5
      %v2556 = vsel %vm294, %v2551, %v2555
      %v2558 = vshrl.u32 %v2194, 16
      %v2560 = vrot.slane %v2558, 4
      %v2561 = vshll.u32 %v2194, 16
      %v2563 = vrot.slane %v2561, 5
      %v2564 = vor.u32 %v2560, %v2563
      %v2565 = vrot.slane %v2564, 4
      %v2567 = vshll.u32 %v2195, 16
      %v2569 = vrot.slane %v2567, 5
      %v2570 = vsel %vm294, %v2565, %v2569
      %v2571 = vshrl.u32 %v2195, 16
      %v2573 = vrot.slane %v2571, 4
      %v2574 = vor.u32 %v2573, %v2569
      %v2575 = vrot.slane %v2574, 4
      %v2577 = vshll.u32 %v2196, 16
      %v2579 = vrot.slane %v2577, 5
      %v2580 = vsel %vm294, %v2575, %v2579
      %s2581 = scalar_lea.vmem %s1, 256
      %v2582 = vld [vmem:[%s2581] sm:$0xf]
      %v2583 = vld [vmem:[%s2581 + $0x4] sm:$0xf]
      %v2584 = vld [vmem:[%s2581 + $0x8] sm:$0xf]
      %v2585 = vld [vmem:[%s2581 + $0xc] sm:$0xf]
      %v2586 = vld [vmem:[%s2581 + $0x10] sm:$0xf]
      %v2587 = vld [vmem:[%s2581 + $0x14] sm:$0xf]
      %v2588 = vld [vmem:[%s2581 + $0x18] sm:$0xf]
      %v2589 = vld [vmem:[%s2581 + $0x1c] sm:$0xf]
      %v2590 = vld [vmem:[%s2581 + $0x20] sm:$0xf]
      %v2591 = vld [vmem:[%s2581 + $0x24] sm:$0xf]
      %v2592 = vld [vmem:[%s2581 + $0x28] sm:$0xf]
      %v2593 = vld [vmem:[%s2581 + $0x2c] sm:$0xf]
      %v2594 = vld [vmem:[%s2581 + $0x30] sm:$0xf]
      %v2595 = vld [vmem:[%s2581 + $0x34] sm:$0xf]
      %v2596 = vld [vmem:[%s2581 + $0x38] sm:$0xf]
      %v2597 = vld [vmem:[%s2581 + $0x3c] sm:$0xf]
      %v2598 = vunpack.c.l.b16 %v2210
      %v2599 = vunpack.c.l.b16 %v2220
      %v2600 = vunpack.c.l.b16 %v2234
      %v2601 = vunpack.c.l.b16 %v2244
      %v2602 = vunpack.c.l.b16 %v2258
      %v2603 = vunpack.c.l.b16 %v2268
      %v2604 = vunpack.c.l.b16 %v2282
      %v2605 = vunpack.c.l.b16 %v2292
      %v2606 = vunpack.c.l.b16 %v2306
      %v2607 = vunpack.c.l.b16 %v2316
      %v2608 = vunpack.c.l.b16 %v2330
      %v2609 = vunpack.c.l.b16 %v2340
      %v2610 = vunpack.c.l.b16 %v2354
      %v2611 = vunpack.c.l.b16 %v2364
      %v2612 = vunpack.c.l.b16 %v2378
      %v2613 = vunpack.c.l.b16 %v2388
      %v2614 = vunpack.c.l.b16 %v2402
      %v2615 = vunpack.c.l.b16 %v2412
      %v2616 = vunpack.c.l.b16 %v2426
      %v2617 = vunpack.c.l.b16 %v2436
      %v2618 = vunpack.c.l.b16 %v2450
      %v2619 = vunpack.c.l.b16 %v2460
      %v2620 = vunpack.c.l.b16 %v2474
      %v2621 = vunpack.c.l.b16 %v2484
      %v2622 = vunpack.c.l.b16 %v2498
      %v2623 = vunpack.c.l.b16 %v2508
      %v2624 = vunpack.c.l.b16 %v2522
      %v2625 = vunpack.c.l.b16 %v2532
      %v2626 = vunpack.c.l.b16 %v2546
      %v2627 = vunpack.c.l.b16 %v2556
      %v2628 = vunpack.c.l.b16 %v2570
      %v2629 = vunpack.c.l.b16 %v2580
      %v2630 = vpack.c.b16 %v2599, %v2598
      %v2631 = vpack.c.b16 %v2601, %v2600
      %v2632 = vpack.c.b16 %v2603, %v2602
      %v2633 = vpack.c.b16 %v2605, %v2604
      %v2634 = vpack.c.b16 %v2607, %v2606
      %v2635 = vpack.c.b16 %v2609, %v2608
      %v2636 = vpack.c.b16 %v2611, %v2610
      %v2637 = vpack.c.b16 %v2613, %v2612
      %v2638 = vpack.c.b16 %v2615, %v2614
      %v2639 = vpack.c.b16 %v2617, %v2616
      %v2640 = vpack.c.b16 %v2619, %v2618
      %v2641 = vpack.c.b16 %v2621, %v2620
      %v2642 = vpack.c.b16 %v2623, %v2622
      %v2643 = vpack.c.b16 %v2625, %v2624
      %v2644 = vpack.c.b16 %v2627, %v2626
      %v2645 = vpack.c.b16 %v2629, %v2628
      %v2678 = vunpack.c.l.b16 %v2582
      %v2679 = vunpack.c.l.b16 %v2583
      %v2680 = vunpack.c.l.b16 %v2584
      %v2681 = vunpack.c.l.b16 %v2585
      %v2682 = vunpack.c.l.b16 %v2586
      %v2683 = vunpack.c.l.b16 %v2587
      %v2684 = vunpack.c.l.b16 %v2588
      %v2685 = vunpack.c.l.b16 %v2589
      %v2686 = vunpack.c.l.b16 %v2590
      %v2687 = vunpack.c.l.b16 %v2591
      %v2688 = vunpack.c.l.b16 %v2592
      %v2689 = vunpack.c.l.b16 %v2593
      %v2690 = vunpack.c.l.b16 %v2594
      %v2691 = vunpack.c.l.b16 %v2595
      %v2692 = vunpack.c.l.b16 %v2596
      %v2693 = vunpack.c.l.b16 %v2597
      %v2694 = vpack.c.b16 %v2679, %v2678
      %v2695 = vpack.c.b16 %v2681, %v2680
      %v2696 = vpack.c.b16 %v2683, %v2682
      %v2697 = vpack.c.b16 %v2685, %v2684
      %v2698 = vpack.c.b16 %v2687, %v2686
      %v2699 = vpack.c.b16 %v2689, %v2688
      %v2700 = vpack.c.b16 %v2691, %v2690
      %v2701 = vpack.c.b16 %v2693, %v2692
      %2710 = vmatprep.subr.bf16.mxu0 0
      %2711 = vmatpush1.bf16.msra.mxu0 %v2694
      %2712 = vmatprep.subr.bf16.mxu0 0
      %2713 = vmatpush1.bf16.msra.mxu0 %v2695
      %2714 = vmatprep.subr.bf16.mxu0 0
      %2715 = vmatpush1.bf16.msra.mxu0 %v2696
      %2716 = vmatprep.subr.bf16.mxu0 0
      %2717 = vmatpush1.bf16.msra.mxu0 %v2697
      %2718 = vmatprep.subr.bf16.mxu0 0
      %2719 = vmatpush1.bf16.msra.mxu0 %v2698
      %2720 = vmatprep.subr.bf16.mxu0 0
      %2721 = vmatpush1.bf16.msra.mxu0 %v2699
      %2722 = vmatprep.subr.bf16.mxu0 0
      %2723 = vmatpush1.bf16.msra.mxu0 %v2700
      %2724 = vmatprep.subr.bf16.mxu0 0
      %2725 = vmatpush1.bf16.msra.mxu0 %v2701
      %2726 = vmatprep.subr.bf16.mxu0 0
      %2727 = vmatpush1.bf16.msra.mxu0 0
      %2728 = vmatprep.subr.bf16.mxu0 0
      %2729 = vmatpush1.bf16.msra.mxu0 0
      %2730 = vmatprep.subr.bf16.mxu0 0
      %2731 = vmatpush1.bf16.msra.mxu0 0
      %2732 = vmatprep.subr.bf16.mxu0 0
      %2733 = vmatpush1.bf16.msra.mxu0 0
      %2734 = vmatprep.subr.bf16.mxu0 0
      %2735 = vmatpush1.bf16.msra.mxu0 0
      %2736 = vmatprep.subr.bf16.mxu0 0
      %2737 = vmatpush1.bf16.msra.mxu0 0
      %2738 = vmatprep.subr.bf16.mxu0 0
      %2739 = vmatpush1.bf16.msra.mxu0 0
      %2740 = vmatprep.subr.bf16.mxu0 0
      %2741 = vmatpush1.bf16.msra.mxu0 0
      %2742 = vmatprep.mubr.bf16.mxu0 0
      %2743 = vmatmul.mubr.bf16.gmra.mrb[0].mxu0 %v2630
      %v2744 = vpop.f32.mrb[0].mxu0
      %v2745 = vadd.f32 0.0, %v2744
      %v2746 = vpop.f32.mrb[0].mxu0
      %v2747 = vpop.f32.mrb[0].mxu0
      %v2748 = vadd.f32 0.0, %v2747
      %v2749 = vpop.f32.mrb[0].mxu0
      %2750 = vmatprep.mubr.bf16.mxu0 0
      %2751 = vmatmul.mubr.bf16.gmra.mrb[0].mxu0 %v2631
      %v2752 = vpop.f32.mrb[0].mxu0
      %v2753 = vadd.f32 0.0, %v2752
      %v2754 = vpop.f32.mrb[0].mxu0
      %v2755 = vpop.f32.mrb[0].mxu0
      %v2756 = vadd.f32 0.0, %v2755
      %v2757 = vpop.f32.mrb[0].mxu0
      %2758 = vmatprep.mubr.bf16.mxu0 0
      %2759 = vmatmul.mubr.bf16.gmra.mrb[0].mxu0 %v2632
      %v2760 = vpop.f32.mrb[0].mxu0
      %v2761 = vadd.f32 0.0, %v2760
      %v2762 = vpop.f32.mrb[0].mxu0
      %v2763 = vpop.f32.mrb[0].mxu0
      %v2764 = vadd.f32 0.0, %v2763
      %v2765 = vpop.f32.mrb[0].mxu0
      %2766 = vmatprep.mubr.bf16.mxu0 0
      %2767 = vmatmul.mubr.bf16.gmra.mrb[0].mxu0 %v2633
      %v2768 = vpop.f32.mrb[0].mxu0
      %v2769 = vadd.f32 0.0, %v2768
      %v2770 = vpop.f32.mrb[0].mxu0
      %v2771 = vpop.f32.mrb[0].mxu0
      %v2772 = vadd.f32 0.0, %v2771
      %v2773 = vpop.f32.mrb[0].mxu0
      %2774 = vmatprep.mubr.bf16.mxu0 0
      %2775 = vmatmul.mubr.bf16.gmra.mrb[0].mxu0 %v2634
      %v2776 = vpop.f32.mrb[0].mxu0
      %v2777 = vadd.f32 0.0, %v2776
      %v2778 = vpop.f32.mrb[0].mxu0
      %v2779 = vpop.f32.mrb[0].mxu0
      %v2780 = vadd.f32 0.0, %v2779
      %v2781 = vpop.f32.mrb[0].mxu0
      %2782 = vmatprep.mubr.bf16.mxu0 0
      %2783 = vmatmul.mubr.bf16.gmra.mrb[0].mxu0 %v2635
      %v2784 = vpop.f32.mrb[0].mxu0
      %v2785 = vadd.f32 0.0, %v2784
      %v2786 = vpop.f32.mrb[0].mxu0
      %v2787 = vpop.f32.mrb[0].mxu0
      %v2788 = vadd.f32 0.0, %v2787
      %v2789 = vpop.f32.mrb[0].mxu0
      %2790 = vmatprep.mubr.bf16.mxu0 0
      %2791 = vmatmul.mubr.bf16.gmra.mrb[0].mxu0 %v2636
      %v2792 = vpop.f32.mrb[0].mxu0
      %v2793 = vadd.f32 0.0, %v2792
      %v2794 = vpop.f32.mrb[0].mxu0
      %v2795 = vpop.f32.mrb[0].mxu0
      %v2796 = vadd.f32 0.0, %v2795
      %v2797 = vpop.f32.mrb[0].mxu0
      %2798 = vmatprep.mubr.bf16.mxu0 0
      %2799 = vmatmul.mubr.bf16.gmra.mrb[0].mxu0 %v2637
      %v2800 = vpop.f32.mrb[0].mxu0
      %v2801 = vadd.f32 0.0, %v2800
      %v2802 = vpop.f32.mrb[0].mxu0
      %v2803 = vpop.f32.mrb[0].mxu0
      %v2804 = vadd.f32 0.0, %v2803
      %v2805 = vpop.f32.mrb[0].mxu0
      %2806 = vmatprep.mubr.bf16.mxu0 0
      %2807 = vmatmul.mubr.bf16.gmra.mrb[0].mxu0 %v2638
      %v2808 = vpop.f32.mrb[0].mxu0
      %v2809 = vadd.f32 0.0, %v2808
      %v2810 = vpop.f32.mrb[0].mxu0
      %v2811 = vpop.f32.mrb[0].mxu0
      %v2812 = vadd.f32 0.0, %v2811
      %v2813 = vpop.f32.mrb[0].mxu0
      %2814 = vmatprep.mubr.bf16.mxu0 0
      %2815 = vmatmul.mubr.bf16.gmra.mrb[0].mxu0 %v2639
      %v2816 = vpop.f32.mrb[0].mxu0
      %v2817 = vadd.f32 0.0, %v2816
      %v2818 = vpop.f32.mrb[0].mxu0
      %v2819 = vpop.f32.mrb[0].mxu0
      %v2820 = vadd.f32 0.0, %v2819
      %v2821 = vpop.f32.mrb[0].mxu0
      %2822 = vmatprep.mubr.bf16.mxu0 0
      %2823 = vmatmul.mubr.bf16.gmra.mrb[0].mxu0 %v2640
      %v2824 = vpop.f32.mrb[0].mxu0
      %v2825 = vadd.f32 0.0, %v2824
      %v2826 = vpop.f32.mrb[0].mxu0
      %v2827 = vpop.f32.mrb[0].mxu0
      %v2828 = vadd.f32 0.0, %v2827
      %v2829 = vpop.f32.mrb[0].mxu0
      %2830 = vmatprep.mubr.bf16.mxu0 0
      %2831 = vmatmul.mubr.bf16.gmra.mrb[0].mxu0 %v2641
      %v2832 = vpop.f32.mrb[0].mxu0
      %v2833 = vadd.f32 0.0, %v2832
      %v2834 = vpop.f32.mrb[0].mxu0
      %v2835 = vpop.f32.mrb[0].mxu0
      %v2836 = vadd.f32 0.0, %v2835
      %v2837 = vpop.f32.mrb[0].mxu0
      %2838 = vmatprep.mubr.bf16.mxu0 0
      %2839 = vmatmul.mubr.bf16.gmra.mrb[0].mxu0 %v2642
      %v2840 = vpop.f32.mrb[0].mxu0
      %v2841 = vadd.f32 0.0, %v2840
      %v2842 = vpop.f32.mrb[0].mxu0
      %v2843 = vpop.f32.mrb[0].mxu0
      %v2844 = vadd.f32 0.0, %v2843
      %v2845 = vpop.f32.mrb[0].mxu0
      %2846 = vmatprep.mubr.bf16.mxu0 0
      %2847 = vmatmul.mubr.bf16.gmra.mrb[0].mxu0 %v2643
      %v2848 = vpop.f32.mrb[0].mxu0
      %v2849 = vadd.f32 0.0, %v2848
      %v2850 = vpop.f32.mrb[0].mxu0
      %v2851 = vpop.f32.mrb[0].mxu0
      %v2852 = vadd.f32 0.0, %v2851
      %v2853 = vpop.f32.mrb[0].mxu0
      %2854 = vmatprep.mubr.bf16.mxu0 0
      %2855 = vmatmul.mubr.bf16.gmra.mrb[0].mxu0 %v2644
      %v2856 = vpop.f32.mrb[0].mxu0
      %v2857 = vadd.f32 0.0, %v2856
      %v2858 = vpop.f32.mrb[0].mxu0
      %v2859 = vpop.f32.mrb[0].mxu0
      %v2860 = vadd.f32 0.0, %v2859
      %v2861 = vpop.f32.mrb[0].mxu0
      %2862 = vmatprep.mubr.bf16.mxu0 0
      %2863 = vmatmul.mubr.bf16.gmra.mrb[0].mxu0 %v2645
      %v2864 = vpop.f32.mrb[0].mxu0
      %v2865 = vadd.f32 0.0, %v2864
      %v2866 = vpop.f32.mrb[0].mxu0
      %v2867 = vpop.f32.mrb[0].mxu0
      %v2868 = vadd.f32 0.0, %v2867
      %v2869 = vpop.f32.mrb[0].mxu0
      %2870 = vdwg.mxu0
      %v2871 = vadd.f32 %v2117, %v2745
      %v2872 = vadd.f32 %v2118, %v2748
      %v2873 = vadd.f32 %v2119, %v2753
      %v2874 = vadd.f32 %v2120, %v2756
      %v2875 = vadd.f32 %v2121, %v2761
      %v2876 = vadd.f32 %v2122, %v2764
      %v2877 = vadd.f32 %v2123, %v2769
      %v2878 = vadd.f32 %v2124, %v2772
      %v2879 = vadd.f32 %v2125, %v2777
      %v2880 = vadd.f32 %v2126, %v2780
      %v2881 = vadd.f32 %v2127, %v2785
      %v2882 = vadd.f32 %v2128, %v2788
      %v2883 = vadd.f32 %v2129, %v2793
      %v2884 = vadd.f32 %v2130, %v2796
      %v2885 = vadd.f32 %v2131, %v2801
      %v2886 = vadd.f32 %v2132, %v2804
      %v2887 = vadd.f32 %v2133, %v2809
      %v2888 = vadd.f32 %v2134, %v2812
      %v2889 = vadd.f32 %v2135, %v2817
      %v2890 = vadd.f32 %v2136, %v2820
      %v2891 = vadd.f32 %v2137, %v2825
      %v2892 = vadd.f32 %v2138, %v2828
      %v2893 = vadd.f32 %v2139, %v2833
      %v2894 = vadd.f32 %v2140, %v2836
      %v2895 = vadd.f32 %v2141, %v2841
      %v2896 = vadd.f32 %v2142, %v2844
      %v2897 = vadd.f32 %v2143, %v2849
      %v2898 = vadd.f32 %v2144, %v2852
      %v2899 = vadd.f32 %v2145, %v2857
      %v2900 = vadd.f32 %v2146, %v2860
      %v2901 = vadd.f32 %v2147, %v2865
      %v2902 = vadd.f32 %v2148, %v2868
      %v2903 = vld [vmem:[%s1762] sm:$0xe]
      %v2904 = vld [vmem:[%s1762 + $0xc] sm:$0xe]
      %v2905 = vld [vmem:[%s1762 + $0x18] sm:$0xe]
      %v2906 = vld [vmem:[%s1762 + $0x24] sm:$0xe]
      %v2907 = vld [vmem:[%s1762 + $0x30] sm:$0xe]
      %v2908 = vld [vmem:[%s1762 + $0x3c] sm:$0xe]
      %v2909 = vld [vmem:[%s1762 + $0x48] sm:$0xe]
      %v2910 = vld [vmem:[%s1762 + $0x54] sm:$0xe]
      %v2911 = vld [vmem:[%s1762 + $0x60] sm:$0xe]
      %v2912 = vld [vmem:[%s1762 + $0x6c] sm:$0xe]
      %v2913 = vld [vmem:[%s1762 + $0x78] sm:$0xe]
      %v2914 = vld [vmem:[%s1762 + $0x84] sm:$0xe]
      %v2915 = vld [vmem:[%s1762 + $0x90] sm:$0xe]
      %v2916 = vld [vmem:[%s1762 + $0x9c] sm:$0xe]
      %v2917 = vld [vmem:[%s1762 + $0xa8] sm:$0xe]
      %v2918 = vld [vmem:[%s1762 + $0xb4] sm:$0xe]
      %v2967 = vrot.slane %v2903, 5
      %v2968 = vrot.slane %v2967, 4
      %v2969 = vrot.slane %v2150, 5
      %v2970 = vsel %vm1324, %v2968, %v2969
      %v2971 = vrot.slane %v2969, 4
      %v2972 = vrot.slane %v2151, 5
      %v2973 = vsel %vm1324, %v2971, %v2972
      %v2974 = vrot.slane %v2904, 5
      %v2975 = vrot.slane %v2974, 4
      %v2976 = vrot.slane %v2153, 5
      %v2977 = vsel %vm1324, %v2975, %v2976
      %v2978 = vrot.slane %v2976, 4
      %v2979 = vrot.slane %v2154, 5
      %v2980 = vsel %vm1324, %v2978, %v2979
      %v2981 = vrot.slane %v2905, 5
      %v2982 = vrot.slane %v2981, 4
      %v2983 = vrot.slane %v2156, 5
      %v2984 = vsel %vm1324, %v2982, %v2983
      %v2985 = vrot.slane %v2983, 4
      %v2986 = vrot.slane %v2157, 5
      %v2987 = vsel %vm1324, %v2985, %v2986
      %v2988 = vrot.slane %v2906, 5
      %v2989 = vrot.slane %v2988, 4
      %v2990 = vrot.slane %v2159, 5
      %v2991 = vsel %vm1324, %v2989, %v2990
      %v2992 = vrot.slane %v2990, 4
      %v2993 = vrot.slane %v2160, 5
      %v2994 = vsel %vm1324, %v2992, %v2993
      %v2995 = vrot.slane %v2907, 5
      %v2996 = vrot.slane %v2995, 4
      %v2997 = vrot.slane %v2162, 5
      %v2998 = vsel %vm1324, %v2996, %v2997
      %v2999 = vrot.slane %v2997, 4
      %v3000 = vrot.slane %v2163, 5
      %v3001 = vsel %vm1324, %v2999, %v3000
      %v3002 = vrot.slane %v2908, 5
      %v3003 = vrot.slane %v3002, 4
      %v3004 = vrot.slane %v2165, 5
      %v3005 = vsel %vm1324, %v3003, %v3004
      %v3006 = vrot.slane %v3004, 4
      %v3007 = vrot.slane %v2166, 5
      %v3008 = vsel %vm1324, %v3006, %v3007
      %v3009 = vrot.slane %v2909, 5
      %v3010 = vrot.slane %v3009, 4
      %v3011 = vrot.slane %v2168, 5
      %v3012 = vsel %vm1324, %v3010, %v3011
      %v3013 = vrot.slane %v3011, 4
      %v3014 = vrot.slane %v2169, 5
      %v3015 = vsel %vm1324, %v3013, %v3014
      %v3016 = vrot.slane %v2910, 5
      %v3017 = vrot.slane %v3016, 4
      %v3018 = vrot.slane %v2171, 5
      %v3019 = vsel %vm1324, %v3017, %v3018
      %v3020 = vrot.slane %v3018, 4
      %v3021 = vrot.slane %v2172, 5
      %v3022 = vsel %vm1324, %v3020, %v3021
      %v3023 = vrot.slane %v2911, 5
      %v3024 = vrot.slane %v3023, 4
      %v3025 = vrot.slane %v2174, 5
      %v3026 = vsel %vm1324, %v3024, %v3025
      %v3027 = vrot.slane %v3025, 4
      %v3028 = vrot.slane %v2175, 5
      %v3029 = vsel %vm1324, %v3027, %v3028
      %v3030 = vrot.slane %v2912, 5
      %v3031 = vrot.slane %v3030, 4
      %v3032 = vrot.slane %v2177, 5
      %v3033 = vsel %vm1324, %v3031, %v3032
      %v3034 = vrot.slane %v3032, 4
      %v3035 = vrot.slane %v2178, 5
      %v3036 = vsel %vm1324, %v3034, %v3035
      %v3037 = vrot.slane %v2913, 5
      %v3038 = vrot.slane %v3037, 4
      %v3039 = vrot.slane %v2180, 5
      %v3040 = vsel %vm1324, %v3038, %v3039
      %v3041 = vrot.slane %v3039, 4
      %v3042 = vrot.slane %v2181, 5
      %v3043 = vsel %vm1324, %v3041, %v3042
      %v3044 = vrot.slane %v2914, 5
      %v3045 = vrot.slane %v3044, 4
      %v3046 = vrot.slane %v2183, 5
      %v3047 = vsel %vm1324, %v3045, %v3046
      %v3048 = vrot.slane %v3046, 4
      %v3049 = vrot.slane %v2184, 5
      %v3050 = vsel %vm1324, %v3048, %v3049
      %v3051 = vrot.slane %v2915, 5
      %v3052 = vrot.slane %v3051, 4
      %v3053 = vrot.slane %v2186, 5
      %v3054 = vsel %vm1324, %v3052, %v3053
      %v3055 = vrot.slane %v3053, 4
      %v3056 = vrot.slane %v2187, 5
      %v3057 = vsel %vm1324, %v3055, %v3056
      %v3058 = vrot.slane %v2916, 5
      %v3059 = vrot.slane %v3058, 4
      %v3060 = vrot.slane %v2189, 5
      %v3061 = vsel %vm1324, %v3059, %v3060
      %v3062 = vrot.slane %v3060, 4
      %v3063 = vrot.slane %v2190, 5
      %v3064 = vsel %vm1324, %v3062, %v3063
      %v3065 = vrot.slane %v2917, 5
      %v3066 = vrot.slane %v3065, 4
      %v3067 = vrot.slane %v2192, 5
      %v3068 = vsel %vm1324, %v3066, %v3067
      %v3069 = vrot.slane %v3067, 4
      %v3070 = vrot.slane %v2193, 5
      %v3071 = vsel %vm1324, %v3069, %v3070
      %v3072 = vrot.slane %v2918, 5
      %v3073 = vrot.slane %v3072, 4
      %v3074 = vrot.slane %v2195, 5
      %v3075 = vsel %vm1324, %v3073, %v3074
      %v3076 = vrot.slane %v3074, 4
      %v3077 = vrot.slane %v2196, 5
      %v3078 = vsel %vm1324, %v3076, %v3077
      %s3079 = scalar_lea.vmem %s1, 320
      %v3080 = vld [vmem:[%s3079] sm:$0xf]
      %v3081 = vld [vmem:[%s3079 + $0x4] sm:$0xf]
      %v3082 = vld [vmem:[%s3079 + $0x8] sm:$0xf]
      %v3083 = vld [vmem:[%s3079 + $0xc] sm:$0xf]
      %v3084 = vld [vmem:[%s3079 + $0x10] sm:$0xf]
      %v3085 = vld [vmem:[%s3079 + $0x14] sm:$0xf]
      %v3086 = vld [vmem:[%s3079 + $0x18] sm:$0xf]
      %v3087 = vld [vmem:[%s3079 + $0x1c] sm:$0xf]
      %v3088 = vld [vmem:[%s3079 + $0x20] sm:$0xf]
      %v3089 = vld [vmem:[%s3079 + $0x24] sm:$0xf]
      %v3090 = vld [vmem:[%s3079 + $0x28] sm:$0xf]
      %v3091 = vld [vmem:[%s3079 + $0x2c] sm:$0xf]
      %v3092 = vld [vmem:[%s3079 + $0x30] sm:$0xf]
      %v3093 = vld [vmem:[%s3079 + $0x34] sm:$0xf]
      %v3094 = vld [vmem:[%s3079 + $0x38] sm:$0xf]
      %v3095 = vld [vmem:[%s3079 + $0x3c] sm:$0xf]
      %v3096 = vunpack.c.l.b16 %v2970
      %v3097 = vunpack.c.l.b16 %v2973
      %v3098 = vunpack.c.l.b16 %v2977
      %v3099 = vunpack.c.l.b16 %v2980
      %v3100 = vunpack.c.l.b16 %v2984
      %v3101 = vunpack.c.l.b16 %v2987
      %v3102 = vunpack.c.l.b16 %v2991
      %v3103 = vunpack.c.l.b16 %v2994
      %v3104 = vunpack.c.l.b16 %v2998
      %v3105 = vunpack.c.l.b16 %v3001
      %v3106 = vunpack.c.l.b16 %v3005
      %v3107 = vunpack.c.l.b16 %v3008
      %v3108 = vunpack.c.l.b16 %v3012
      %v3109 = vunpack.c.l.b16 %v3015
      %v3110 = vunpack.c.l.b16 %v3019
      %v3111 = vunpack.c.l.b16 %v3022
      %v3112 = vunpack.c.l.b16 %v3026
      %v3113 = vunpack.c.l.b16 %v3029
      %v3114 = vunpack.c.l.b16 %v3033
      %v3115 = vunpack.c.l.b16 %v3036
      %v3116 = vunpack.c.l.b16 %v3040
      %v3117 = vunpack.c.l.b16 %v3043
      %v3118 = vunpack.c.l.b16 %v3047
      %v3119 = vunpack.c.l.b16 %v3050
      %v3120 = vunpack.c.l.b16 %v3054
      %v3121 = vunpack.c.l.b16 %v3057
      %v3122 = vunpack.c.l.b16 %v3061
      %v3123 = vunpack.c.l.b16 %v3064
      %v3124 = vunpack.c.l.b16 %v3068
      %v3125 = vunpack.c.l.b16 %v3071
      %v3126 = vunpack.c.l.b16 %v3075
      %v3127 = vunpack.c.l.b16 %v3078
      %v3128 = vpack.c.b16 %v3097, %v3096
      %v3129 = vpack.c.b16 %v3099, %v3098
      %v3130 = vpack.c.b16 %v3101, %v3100
      %v3131 = vpack.c.b16 %v3103, %v3102
      %v3132 = vpack.c.b16 %v3105, %v3104
      %v3133 = vpack.c.b16 %v3107, %v3106
      %v3134 = vpack.c.b16 %v3109, %v3108
      %v3135 = vpack.c.b16 %v3111, %v3110
      %v3136 = vpack.c.b16 %v3113, %v3112
      %v3137 = vpack.c.b16 %v3115, %v3114
      %v3138 = vpack.c.b16 %v3117, %v3116
      %v3139 = vpack.c.b16 %v3119, %v3118
      %v3140 = vpack.c.b16 %v3121, %v3120
      %v3141 = vpack.c.b16 %v3123, %v3122
      %v3142 = vpack.c.b16 %v3125, %v3124
      %v3143 = vpack.c.b16 %v3127, %v3126
      %v3176 = vunpack.c.l.b16 %v3080
      %v3177 = vunpack.c.l.b16 %v3081
      %v3178 = vunpack.c.l.b16 %v3082
      %v3179 = vunpack.c.l.b16 %v3083
      %v3180 = vunpack.c.l.b16 %v3084
      %v3181 = vunpack.c.l.b16 %v3085
      %v3182 = vunpack.c.l.b16 %v3086
      %v3183 = vunpack.c.l.b16 %v3087
      %v3184 = vunpack.c.l.b16 %v3088
      %v3185 = vunpack.c.l.b16 %v3089
      %v3186 = vunpack.c.l.b16 %v3090
      %v3187 = vunpack.c.l.b16 %v3091
      %v3188 = vunpack.c.l.b16 %v3092
      %v3189 = vunpack.c.l.b16 %v3093
      %v3190 = vunpack.c.l.b16 %v3094
      %v3191 = vunpack.c.l.b16 %v3095
      %v3192 = vpack.c.b16 %v3177, %v3176
      %v3193 = vpack.c.b16 %v3179, %v3178
      %v3194 = vpack.c.b16 %v3181, %v3180
      %v3195 = vpack.c.b16 %v3183, %v3182
      %v3196 = vpack.c.b16 %v3185, %v3184
      %v3197 = vpack.c.b16 %v3187, %v3186
      %v3198 = vpack.c.b16 %v3189, %v3188
      %v3199 = vpack.c.b16 %v3191, %v3190
      %3208 = vmatprep.subr.bf16.mxu0 0
      %3209 = vmatpush1.bf16.msra.mxu0 %v3192
      %3210 = vmatprep.subr.bf16.mxu0 0
      %3211 = vmatpush1.bf16.msra.mxu0 %v3193
      %3212 = vmatprep.subr.bf16.mxu0 0
      %3213 = vmatpush1.bf16.msra.mxu0 %v3194
      %3214 = vmatprep.subr.bf16.mxu0 0
      %3215 = vmatpush1.bf16.msra.mxu0 %v3195
      %3216 = vmatprep.subr.bf16.mxu0 0
      %3217 = vmatpush1.bf16.msra.mxu0 %v3196
      %3218 = vmatprep.subr.bf16.mxu0 0
      %3219 = vmatpush1.bf16.msra.mxu0 %v3197
      %3220 = vmatprep.subr.bf16.mxu0 0
      %3221 = vmatpush1.bf16.msra.mxu0 %v3198
      %3222 = vmatprep.subr.bf16.mxu0 0
      %3223 = vmatpush1.bf16.msra.mxu0 %v3199
      %3224 = vmatprep.subr.bf16.mxu0 0
      %3225 = vmatpush1.bf16.msra.mxu0 0
      %3226 = vmatprep.subr.bf16.mxu0 0
      %3227 = vmatpush1.bf16.msra.mxu0 0
      %3228 = vmatprep.subr.bf16.mxu0 0
      %3229 = vmatpush1.bf16.msra.mxu0 0
      %3230 = vmatprep.subr.bf16.mxu0 0
      %3231 = vmatpush1.bf16.msra.mxu0 0
      %3232 = vmatprep.subr.bf16.mxu0 0
      %3233 = vmatpush1.bf16.msra.mxu0 0
      %3234 = vmatprep.subr.bf16.mxu0 0
      %3235 = vmatpush1.bf16.msra.mxu0 0
      %3236 = vmatprep.subr.bf16.mxu0 0
      %3237 = vmatpush1.bf16.msra.mxu0 0
      %3238 = vmatprep.subr.bf16.mxu0 0
      %3239 = vmatpush1.bf16.msra.mxu0 0
      %3240 = vmatprep.mubr.bf16.mxu0 0
      %3241 = vmatmul.mubr.bf16.gmra.mrb[0].mxu0 %v3128
      %v3242 = vpop.f32.mrb[0].mxu0
      %v3243 = vadd.f32 0.0, %v3242
      %v3244 = vpop.f32.mrb[0].mxu0
      %v3245 = vpop.f32.mrb[0].mxu0
      %v3246 = vadd.f32 0.0, %v3245
      %v3247 = vpop.f32.mrb[0].mxu0
      %3248 = vmatprep.mubr.bf16.mxu0 0
      %3249 = vmatmul.mubr.bf16.gmra.mrb[0].mxu0 %v3129
      %v3250 = vpop.f32.mrb[0].mxu0
      %v3251 = vadd.f32 0.0, %v3250
      %v3252 = vpop.f32.mrb[0].mxu0
      %v3253 = vpop.f32.mrb[0].mxu0
      %v3254 = vadd.f32 0.0, %v3253
      %v3255 = vpop.f32.mrb[0].mxu0
      %3256 = vmatprep.mubr.bf16.mxu0 0
      %3257 = vmatmul.mubr.bf16.gmra.mrb[0].mxu0 %v3130
      %v3258 = vpop.f32.mrb[0].mxu0
      %v3259 = vadd.f32 0.0, %v3258
      %v3260 = vpop.f32.mrb[0].mxu0
      %v3261 = vpop.f32.mrb[0].mxu0
      %v3262 = vadd.f32 0.0, %v3261
      %v3263 = vpop.f32.mrb[0].mxu0
      %3264 = vmatprep.mubr.bf16.mxu0 0
      %3265 = vmatmul.mubr.bf16.gmra.mrb[0].mxu0 %v3131
      %v3266 = vpop.f32.mrb[0].mxu0
      %v3267 = vadd.f32 0.0, %v3266
      %v3268 = vpop.f32.mrb[0].mxu0
      %v3269 = vpop.f32.mrb[0].mxu0
      %v3270 = vadd.f32 0.0, %v3269
      %v3271 = vpop.f32.mrb[0].mxu0
      %3272 = vmatprep.mubr.bf16.mxu0 0
      %3273 = vmatmul.mubr.bf16.gmra.mrb[0].mxu0 %v3132
      %v3274 = vpop.f32.mrb[0].mxu0
      %v3275 = vadd.f32 0.0, %v3274
      %v3276 = vpop.f32.mrb[0].mxu0
      %v3277 = vpop.f32.mrb[0].mxu0
      %v3278 = vadd.f32 0.0, %v3277
      %v3279 = vpop.f32.mrb[0].mxu0
      %3280 = vmatprep.mubr.bf16.mxu0 0
      %3281 = vmatmul.mubr.bf16.gmra.mrb[0].mxu0 %v3133
      %v3282 = vpop.f32.mrb[0].mxu0
      %v3283 = vadd.f32 0.0, %v3282
      %v3284 = vpop.f32.mrb[0].mxu0
      %v3285 = vpop.f32.mrb[0].mxu0
      %v3286 = vadd.f32 0.0, %v3285
      %v3287 = vpop.f32.mrb[0].mxu0
      %3288 = vmatprep.mubr.bf16.mxu0 0
      %3289 = vmatmul.mubr.bf16.gmra.mrb[0].mxu0 %v3134
      %v3290 = vpop.f32.mrb[0].mxu0
      %v3291 = vadd.f32 0.0, %v3290
      %v3292 = vpop.f32.mrb[0].mxu0
      %v3293 = vpop.f32.mrb[0].mxu0
      %v3294 = vadd.f32 0.0, %v3293
      %v3295 = vpop.f32.mrb[0].mxu0
      %3296 = vmatprep.mubr.bf16.mxu0 0
      %3297 = vmatmul.mubr.bf16.gmra.mrb[0].mxu0 %v3135
      %v3298 = vpop.f32.mrb[0].mxu0
      %v3299 = vadd.f32 0.0, %v3298
      %v3300 = vpop.f32.mrb[0].mxu0
      %v3301 = vpop.f32.mrb[0].mxu0
      %v3302 = vadd.f32 0.0, %v3301
      %v3303 = vpop.f32.mrb[0].mxu0
      %3304 = vmatprep.mubr.bf16.mxu0 0
      %3305 = vmatmul.mubr.bf16.gmra.mrb[0].mxu0 %v3136
      %v3306 = vpop.f32.mrb[0].mxu0
      %v3307 = vadd.f32 0.0, %v3306
      %v3308 = vpop.f32.mrb[0].mxu0
      %v3309 = vpop.f32.mrb[0].mxu0
      %v3310 = vadd.f32 0.0, %v3309
      %v3311 = vpop.f32.mrb[0].mxu0
      %3312 = vmatprep.mubr.bf16.mxu0 0
      %3313 = vmatmul.mubr.bf16.gmra.mrb[0].mxu0 %v3137
      %v3314 = vpop.f32.mrb[0].mxu0
      %v3315 = vadd.f32 0.0, %v3314
      %v3316 = vpop.f32.mrb[0].mxu0
      %v3317 = vpop.f32.mrb[0].mxu0
      %v3318 = vadd.f32 0.0, %v3317
      %v3319 = vpop.f32.mrb[0].mxu0
      %3320 = vmatprep.mubr.bf16.mxu0 0
      %3321 = vmatmul.mubr.bf16.gmra.mrb[0].mxu0 %v3138
      %v3322 = vpop.f32.mrb[0].mxu0
      %v3323 = vadd.f32 0.0, %v3322
      %v3324 = vpop.f32.mrb[0].mxu0
      %v3325 = vpop.f32.mrb[0].mxu0
      %v3326 = vadd.f32 0.0, %v3325
      %v3327 = vpop.f32.mrb[0].mxu0
      %3328 = vmatprep.mubr.bf16.mxu0 0
      %3329 = vmatmul.mubr.bf16.gmra.mrb[0].mxu0 %v3139
      %v3330 = vpop.f32.mrb[0].mxu0
      %v3331 = vadd.f32 0.0, %v3330
      %v3332 = vpop.f32.mrb[0].mxu0
      %v3333 = vpop.f32.mrb[0].mxu0
      %v3334 = vadd.f32 0.0, %v3333
      %v3335 = vpop.f32.mrb[0].mxu0
      %3336 = vmatprep.mubr.bf16.mxu0 0
      %3337 = vmatmul.mubr.bf16.gmra.mrb[0].mxu0 %v3140
      %v3338 = vpop.f32.mrb[0].mxu0
      %v3339 = vadd.f32 0.0, %v3338
      %v3340 = vpop.f32.mrb[0].mxu0
      %v3341 = vpop.f32.mrb[0].mxu0
      %v3342 = vadd.f32 0.0, %v3341
      %v3343 = vpop.f32.mrb[0].mxu0
      %3344 = vmatprep.mubr.bf16.mxu0 0
      %3345 = vmatmul.mubr.bf16.gmra.mrb[0].mxu0 %v3141
      %v3346 = vpop.f32.mrb[0].mxu0
      %v3347 = vadd.f32 0.0, %v3346
      %v3348 = vpop.f32.mrb[0].mxu0
      %v3349 = vpop.f32.mrb[0].mxu0
      %v3350 = vadd.f32 0.0, %v3349
      %v3351 = vpop.f32.mrb[0].mxu0
      %3352 = vmatprep.mubr.bf16.mxu0 0
      %3353 = vmatmul.mubr.bf16.gmra.mrb[0].mxu0 %v3142
      %v3354 = vpop.f32.mrb[0].mxu0
      %v3355 = vadd.f32 0.0, %v3354
      %v3356 = vpop.f32.mrb[0].mxu0
      %v3357 = vpop.f32.mrb[0].mxu0
      %v3358 = vadd.f32 0.0, %v3357
      %v3359 = vpop.f32.mrb[0].mxu0
      %3360 = vmatprep.mubr.bf16.mxu0 0
      %3361 = vmatmul.mubr.bf16.gmra.mrb[0].mxu0 %v3143
      %v3362 = vpop.f32.mrb[0].mxu0
      %v3363 = vadd.f32 0.0, %v3362
      %v3364 = vpop.f32.mrb[0].mxu0
      %v3365 = vpop.f32.mrb[0].mxu0
      %v3366 = vadd.f32 0.0, %v3365
      %v3367 = vpop.f32.mrb[0].mxu0
      %3368 = vdwg.mxu0
      %v3369 = vadd.f32 %v2871, %v3243
      %v3370 = vadd.f32 %v2872, %v3246
      %v3371 = vadd.f32 %v2873, %v3251
      %v3372 = vadd.f32 %v2874, %v3254
      %v3373 = vadd.f32 %v2875, %v3259
      %v3374 = vadd.f32 %v2876, %v3262
      %v3375 = vadd.f32 %v2877, %v3267
      %v3376 = vadd.f32 %v2878, %v3270
      %v3377 = vadd.f32 %v2879, %v3275
      %v3378 = vadd.f32 %v2880, %v3278
      %v3379 = vadd.f32 %v2881, %v3283
      %v3380 = vadd.f32 %v2882, %v3286
      %v3381 = vadd.f32 %v2883, %v3291
      %v3382 = vadd.f32 %v2884, %v3294
      %v3383 = vadd.f32 %v2885, %v3299
      %v3384 = vadd.f32 %v2886, %v3302
      %v3385 = vadd.f32 %v2887, %v3307
      %v3386 = vadd.f32 %v2888, %v3310
      %v3387 = vadd.f32 %v2889, %v3315
      %v3388 = vadd.f32 %v2890, %v3318
      %v3389 = vadd.f32 %v2891, %v3323
      %v3390 = vadd.f32 %v2892, %v3326
      %v3391 = vadd.f32 %v2893, %v3331
      %v3392 = vadd.f32 %v2894, %v3334
      %v3393 = vadd.f32 %v2895, %v3339
      %v3394 = vadd.f32 %v2896, %v3342
      %v3395 = vadd.f32 %v2897, %v3347
      %v3396 = vadd.f32 %v2898, %v3350
      %v3397 = vadd.f32 %v2899, %v3355
      %v3398 = vadd.f32 %v2900, %v3358
      %v3399 = vadd.f32 %v2901, %v3363
      %v3400 = vadd.f32 %v2902, %v3366
      %s3401 = sadd.s32 %s224, 2
      %s3402 = smul.u32 %s3401, 3
      %s3403 = smul.addr %s3402, 4
      %s3404 = scalar_lea.vmem %s211, %s3403
      %v3405 = vld [vmem:[%s3404] sm:$0xf]
      %v3406 = vld [vmem:[%s3404 + $0x4] sm:$0xf]
      %v3407 = vld [vmem:[%s3404 + $0xc] sm:$0xf]
      %v3408 = vld [vmem:[%s3404 + $0x10] sm:$0xf]
      %v3409 = vld [vmem:[%s3404 + $0x18] sm:$0xf]
      %v3410 = vld [vmem:[%s3404 + $0x1c] sm:$0xf]
      %v3411 = vld [vmem:[%s3404 + $0x24] sm:$0xf]
      %v3412 = vld [vmem:[%s3404 + $0x28] sm:$0xf]
      %v3413 = vld [vmem:[%s3404 + $0x30] sm:$0xf]
      %v3414 = vld [vmem:[%s3404 + $0x34] sm:$0xf]
      %v3415 = vld [vmem:[%s3404 + $0x3c] sm:$0xf]
      %v3416 = vld [vmem:[%s3404 + $0x40] sm:$0xf]
      %v3417 = vld [vmem:[%s3404 + $0x48] sm:$0xf]
      %v3418 = vld [vmem:[%s3404 + $0x4c] sm:$0xf]
      %v3419 = vld [vmem:[%s3404 + $0x54] sm:$0xf]
      %v3420 = vld [vmem:[%s3404 + $0x58] sm:$0xf]
      %v3421 = vld [vmem:[%s3404 + $0x60] sm:$0xf]
      %v3422 = vld [vmem:[%s3404 + $0x64] sm:$0xf]
      %v3423 = vld [vmem:[%s3404 + $0x6c] sm:$0xf]
      %v3424 = vld [vmem:[%s3404 + $0x70] sm:$0xf]
      %v3425 = vld [vmem:[%s3404 + $0x78] sm:$0xf]
      %v3426 = vld [vmem:[%s3404 + $0x7c] sm:$0xf]
      %v3427 = vld [vmem:[%s3404 + $0x84] sm:$0xf]
      %v3428 = vld [vmem:[%s3404 + $0x88] sm:$0xf]
      %v3429 = vld [vmem:[%s3404 + $0x90] sm:$0xf]
      %v3430 = vld [vmem:[%s3404 + $0x94] sm:$0xf]
      %v3431 = vld [vmem:[%s3404 + $0x9c] sm:$0xf]
      %v3432 = vld [vmem:[%s3404 + $0xa0] sm:$0xf]
      %v3433 = vld [vmem:[%s3404 + $0xa8] sm:$0xf]
      %v3434 = vld [vmem:[%s3404 + $0xac] sm:$0xf]
      %v3435 = vld [vmem:[%s3404 + $0xb4] sm:$0xf]
      %v3436 = vld [vmem:[%s3404 + $0xb8] sm:$0xf]
      %s3437 = scalar_lea.vmem %s1, 384
      %v3438 = vld [vmem:[%s3437] sm:$0xf]
      %v3439 = vld [vmem:[%s3437 + $0x4] sm:$0xf]
      %v3440 = vld [vmem:[%s3437 + $0x8] sm:$0xf]
      %v3441 = vld [vmem:[%s3437 + $0xc] sm:$0xf]
      %v3442 = vld [vmem:[%s3437 + $0x10] sm:$0xf]
      %v3443 = vld [vmem:[%s3437 + $0x14] sm:$0xf]
      %v3444 = vld [vmem:[%s3437 + $0x18] sm:$0xf]
      %v3445 = vld [vmem:[%s3437 + $0x1c] sm:$0xf]
      %v3446 = vld [vmem:[%s3437 + $0x20] sm:$0xf]
      %v3447 = vld [vmem:[%s3437 + $0x24] sm:$0xf]
      %v3448 = vld [vmem:[%s3437 + $0x28] sm:$0xf]
      %v3449 = vld [vmem:[%s3437 + $0x2c] sm:$0xf]
      %v3450 = vld [vmem:[%s3437 + $0x30] sm:$0xf]
      %v3451 = vld [vmem:[%s3437 + $0x34] sm:$0xf]
      %v3452 = vld [vmem:[%s3437 + $0x38] sm:$0xf]
      %v3453 = vld [vmem:[%s3437 + $0x3c] sm:$0xf]
      %v3486 = vunpack.c.l.b16 %v3405
      %v3487 = vunpack.c.l.b16 %v3406
      %v3488 = vunpack.c.l.b16 %v3407
      %v3489 = vunpack.c.l.b16 %v3408
      %v3490 = vunpack.c.l.b16 %v3409
      %v3491 = vunpack.c.l.b16 %v3410
      %v3492 = vunpack.c.l.b16 %v3411
      %v3493 = vunpack.c.l.b16 %v3412
      %v3494 = vunpack.c.l.b16 %v3413
      %v3495 = vunpack.c.l.b16 %v3414
      %v3496 = vunpack.c.l.b16 %v3415
      %v3497 = vunpack.c.l.b16 %v3416
      %v3498 = vunpack.c.l.b16 %v3417
      %v3499 = vunpack.c.l.b16 %v3418
      %v3500 = vunpack.c.l.b16 %v3419
      %v3501 = vunpack.c.l.b16 %v3420
      %v3502 = vunpack.c.l.b16 %v3421
      %v3503 = vunpack.c.l.b16 %v3422
      %v3504 = vunpack.c.l.b16 %v3423
      %v3505 = vunpack.c.l.b16 %v3424
      %v3506 = vunpack.c.l.b16 %v3425
      %v3507 = vunpack.c.l.b16 %v3426
      %v3508 = vunpack.c.l.b16 %v3427
      %v3509 = vunpack.c.l.b16 %v3428
      %v3510 = vunpack.c.l.b16 %v3429
      %v3511 = vunpack.c.l.b16 %v3430
      %v3512 = vunpack.c.l.b16 %v3431
      %v3513 = vunpack.c.l.b16 %v3432
      %v3514 = vunpack.c.l.b16 %v3433
      %v3515 = vunpack.c.l.b16 %v3434
      %v3516 = vunpack.c.l.b16 %v3435
      %v3517 = vunpack.c.l.b16 %v3436
      %v3518 = vpack.c.b16 %v3487, %v3486
      %v3519 = vpack.c.b16 %v3489, %v3488
      %v3520 = vpack.c.b16 %v3491, %v3490
      %v3521 = vpack.c.b16 %v3493, %v3492
      %v3522 = vpack.c.b16 %v3495, %v3494
      %v3523 = vpack.c.b16 %v3497, %v3496
      %v3524 = vpack.c.b16 %v3499, %v3498
      %v3525 = vpack.c.b16 %v3501, %v3500
      %v3526 = vpack.c.b16 %v3503, %v3502
      %v3527 = vpack.c.b16 %v3505, %v3504
      %v3528 = vpack.c.b16 %v3507, %v3506
      %v3529 = vpack.c.b16 %v3509, %v3508
      %v3530 = vpack.c.b16 %v3511, %v3510
      %v3531 = vpack.c.b16 %v3513, %v3512
      %v3532 = vpack.c.b16 %v3515, %v3514
      %v3533 = vpack.c.b16 %v3517, %v3516
      %v3566 = vunpack.c.l.b16 %v3438
      %v3567 = vunpack.c.l.b16 %v3439
      %v3568 = vunpack.c.l.b16 %v3440
      %v3569 = vunpack.c.l.b16 %v3441
      %v3570 = vunpack.c.l.b16 %v3442
      %v3571 = vunpack.c.l.b16 %v3443
      %v3572 = vunpack.c.l.b16 %v3444
      %v3573 = vunpack.c.l.b16 %v3445
      %v3574 = vunpack.c.l.b16 %v3446
      %v3575 = vunpack.c.l.b16 %v3447
      %v3576 = vunpack.c.l.b16 %v3448
      %v3577 = vunpack.c.l.b16 %v3449
      %v3578 = vunpack.c.l.b16 %v3450
      %v3579 = vunpack.c.l.b16 %v3451
      %v3580 = vunpack.c.l.b16 %v3452
      %v3581 = vunpack.c.l.b16 %v3453
      %v3582 = vpack.c.b16 %v3567, %v3566
      %v3583 = vpack.c.b16 %v3569, %v3568
      %v3584 = vpack.c.b16 %v3571, %v3570
      %v3585 = vpack.c.b16 %v3573, %v3572
      %v3586 = vpack.c.b16 %v3575, %v3574
      %v3587 = vpack.c.b16 %v3577, %v3576
      %v3588 = vpack.c.b16 %v3579, %v3578
      %v3589 = vpack.c.b16 %v3581, %v3580
      %3598 = vmatprep.subr.bf16.mxu0 0
      %3599 = vmatpush1.bf16.msra.mxu0 %v3582
      %3600 = vmatprep.subr.bf16.mxu0 0
      %3601 = vmatpush1.bf16.msra.mxu0 %v3583
      %3602 = vmatprep.subr.bf16.mxu0 0
      %3603 = vmatpush1.bf16.msra.mxu0 %v3584
      %3604 = vmatprep.subr.bf16.mxu0 0
      %3605 = vmatpush1.bf16.msra.mxu0 %v3585
      %3606 = vmatprep.subr.bf16.mxu0 0
      %3607 = vmatpush1.bf16.msra.mxu0 %v3586
      %3608 = vmatprep.subr.bf16.mxu0 0
      %3609 = vmatpush1.bf16.msra.mxu0 %v3587
      %3610 = vmatprep.subr.bf16.mxu0 0
      %3611 = vmatpush1.bf16.msra.mxu0 %v3588
      %3612 = vmatprep.subr.bf16.mxu0 0
      %3613 = vmatpush1.bf16.msra.mxu0 %v3589
      %3614 = vmatprep.subr.bf16.mxu0 0
      %3615 = vmatpush1.bf16.msra.mxu0 0
      %3616 = vmatprep.subr.bf16.mxu0 0
      %3617 = vmatpush1.bf16.msra.mxu0 0
      %3618 = vmatprep.subr.bf16.mxu0 0
      %3619 = vmatpush1.bf16.msra.mxu0 0
      %3620 = vmatprep.subr.bf16.mxu0 0
      %3621 = vmatpush1.bf16.msra.mxu0 0
      %3622 = vmatprep.subr.bf16.mxu0 0
      %3623 = vmatpush1.bf16.msra.mxu0 0
      %3624 = vmatprep.subr.bf16.mxu0 0
      %3625 = vmatpush1.bf16.msra.mxu0 0
      %3626 = vmatprep.subr.bf16.mxu0 0
      %3627 = vmatpush1.bf16.msra.mxu0 0
      %3628 = vmatprep.subr.bf16.mxu0 0
      %3629 = vmatpush1.bf16.msra.mxu0 0
      %3630 = vmatprep.mubr.bf16.mxu0 0
      %3631 = vmatmul.mubr.bf16.gmra.mrb[0].mxu0 %v3518
      %v3632 = vpop.f32.mrb[0].mxu0
      %v3633 = vadd.f32 0.0, %v3632
      %v3634 = vpop.f32.mrb[0].mxu0
      %v3635 = vpop.f32.mrb[0].mxu0
      %v3636 = vadd.f32 0.0, %v3635
      %v3637 = vpop.f32.mrb[0].mxu0
      %3638 = vmatprep.mubr.bf16.mxu0 0
      %3639 = vmatmul.mubr.bf16.gmra.mrb[0].mxu0 %v3519
      %v3640 = vpop.f32.mrb[0].mxu0
      %v3641 = vadd.f32 0.0, %v3640
      %v3642 = vpop.f32.mrb[0].mxu0
      %v3643 = vpop.f32.mrb[0].mxu0
      %v3644 = vadd.f32 0.0, %v3643
      %v3645 = vpop.f32.mrb[0].mxu0
      %3646 = vmatprep.mubr.bf16.mxu0 0
      %3647 = vmatmul.mubr.bf16.gmra.mrb[0].mxu0 %v3520
      %v3648 = vpop.f32.mrb[0].mxu0
      %v3649 = vadd.f32 0.0, %v3648
      %v3650 = vpop.f32.mrb[0].mxu0
      %v3651 = vpop.f32.mrb[0].mxu0
      %v3652 = vadd.f32 0.0, %v3651
      %v3653 = vpop.f32.mrb[0].mxu0
      %3654 = vmatprep.mubr.bf16.mxu0 0
      %3655 = vmatmul.mubr.bf16.gmra.mrb[0].mxu0 %v3521
      %v3656 = vpop.f32.mrb[0].mxu0
      %v3657 = vadd.f32 0.0, %v3656
      %v3658 = vpop.f32.mrb[0].mxu0
      %v3659 = vpop.f32.mrb[0].mxu0
      %v3660 = vadd.f32 0.0, %v3659
      %v3661 = vpop.f32.mrb[0].mxu0
      %3662 = vmatprep.mubr.bf16.mxu0 0
      %3663 = vmatmul.mubr.bf16.gmra.mrb[0].mxu0 %v3522
      %v3664 = vpop.f32.mrb[0].mxu0
      %v3665 = vadd.f32 0.0, %v3664
      %v3666 = vpop.f32.mrb[0].mxu0
      %v3667 = vpop.f32.mrb[0].mxu0
      %v3668 = vadd.f32 0.0, %v3667
      %v3669 = vpop.f32.mrb[0].mxu0
      %3670 = vmatprep.mubr.bf16.mxu0 0
      %3671 = vmatmul.mubr.bf16.gmra.mrb[0].mxu0 %v3523
      %v3672 = vpop.f32.mrb[0].mxu0
      %v3673 = vadd.f32 0.0, %v3672
      %v3674 = vpop.f32.mrb[0].mxu0
      %v3675 = vpop.f32.mrb[0].mxu0
      %v3676 = vadd.f32 0.0, %v3675
      %v3677 = vpop.f32.mrb[0].mxu0
      %3678 = vmatprep.mubr.bf16.mxu0 0
      %3679 = vmatmul.mubr.bf16.gmra.mrb[0].mxu0 %v3524
      %v3680 = vpop.f32.mrb[0].mxu0
      %v3681 = vadd.f32 0.0, %v3680
      %v3682 = vpop.f32.mrb[0].mxu0
      %v3683 = vpop.f32.mrb[0].mxu0
      %v3684 = vadd.f32 0.0, %v3683
      %v3685 = vpop.f32.mrb[0].mxu0
      %3686 = vmatprep.mubr.bf16.mxu0 0
      %3687 = vmatmul.mubr.bf16.gmra.mrb[0].mxu0 %v3525
      %v3688 = vpop.f32.mrb[0].mxu0
      %v3689 = vadd.f32 0.0, %v3688
      %v3690 = vpop.f32.mrb[0].mxu0
      %v3691 = vpop.f32.mrb[0].mxu0
      %v3692 = vadd.f32 0.0, %v3691
      %v3693 = vpop.f32.mrb[0].mxu0
      %3694 = vmatprep.mubr.bf16.mxu0 0
      %3695 = vmatmul.mubr.bf16.gmra.mrb[0].mxu0 %v3526
      %v3696 = vpop.f32.mrb[0].mxu0
      %v3697 = vadd.f32 0.0, %v3696
      %v3698 = vpop.f32.mrb[0].mxu0
      %v3699 = vpop.f32.mrb[0].mxu0
      %v3700 = vadd.f32 0.0, %v3699
      %v3701 = vpop.f32.mrb[0].mxu0
      %3702 = vmatprep.mubr.bf16.mxu0 0
      %3703 = vmatmul.mubr.bf16.gmra.mrb[0].mxu0 %v3527
      %v3704 = vpop.f32.mrb[0].mxu0
      %v3705 = vadd.f32 0.0, %v3704
      %v3706 = vpop.f32.mrb[0].mxu0
      %v3707 = vpop.f32.mrb[0].mxu0
      %v3708 = vadd.f32 0.0, %v3707
      %v3709 = vpop.f32.mrb[0].mxu0
      %3710 = vmatprep.mubr.bf16.mxu0 0
      %3711 = vmatmul.mubr.bf16.gmra.mrb[0].mxu0 %v3528
      %v3712 = vpop.f32.mrb[0].mxu0
      %v3713 = vadd.f32 0.0, %v3712
      %v3714 = vpop.f32.mrb[0].mxu0
      %v3715 = vpop.f32.mrb[0].mxu0
      %v3716 = vadd.f32 0.0, %v3715
      %v3717 = vpop.f32.mrb[0].mxu0
      %3718 = vmatprep.mubr.bf16.mxu0 0
      %3719 = vmatmul.mubr.bf16.gmra.mrb[0].mxu0 %v3529
      %v3720 = vpop.f32.mrb[0].mxu0
      %v3721 = vadd.f32 0.0, %v3720
      %v3722 = vpop.f32.mrb[0].mxu0
      %v3723 = vpop.f32.mrb[0].mxu0
      %v3724 = vadd.f32 0.0, %v3723
      %v3725 = vpop.f32.mrb[0].mxu0
      %3726 = vmatprep.mubr.bf16.mxu0 0
      %3727 = vmatmul.mubr.bf16.gmra.mrb[0].mxu0 %v3530
      %v3728 = vpop.f32.mrb[0].mxu0
      %v3729 = vadd.f32 0.0, %v3728
      %v3730 = vpop.f32.mrb[0].mxu0
      %v3731 = vpop.f32.mrb[0].mxu0
      %v3732 = vadd.f32 0.0, %v3731
      %v3733 = vpop.f32.mrb[0].mxu0
      %3734 = vmatprep.mubr.bf16.mxu0 0
      %3735 = vmatmul.mubr.bf16.gmra.mrb[0].mxu0 %v3531
      %v3736 = vpop.f32.mrb[0].mxu0
      %v3737 = vadd.f32 0.0, %v3736
      %v3738 = vpop.f32.mrb[0].mxu0
      %v3739 = vpop.f32.mrb[0].mxu0
      %v3740 = vadd.f32 0.0, %v3739
      %v3741 = vpop.f32.mrb[0].mxu0
      %3742 = vmatprep.mubr.bf16.mxu0 0
      %3743 = vmatmul.mubr.bf16.gmra.mrb[0].mxu0 %v3532
      %v3744 = vpop.f32.mrb[0].mxu0
      %v3745 = vadd.f32 0.0, %v3744
      %v3746 = vpop.f32.mrb[0].mxu0
      %v3747 = vpop.f32.mrb[0].mxu0
      %v3748 = vadd.f32 0.0, %v3747
      %v3749 = vpop.f32.mrb[0].mxu0
      %3750 = vmatprep.mubr.bf16.mxu0 0
      %3751 = vmatmul.mubr.bf16.gmra.mrb[0].mxu0 %v3533
      %v3752 = vpop.f32.mrb[0].mxu0
      %v3753 = vadd.f32 0.0, %v3752
      %v3754 = vpop.f32.mrb[0].mxu0
      %v3755 = vpop.f32.mrb[0].mxu0
      %v3756 = vadd.f32 0.0, %v3755
      %v3757 = vpop.f32.mrb[0].mxu0
      %3758 = vdwg.mxu0
      %v3759 = vadd.f32 %v3369, %v3633
      %v3760 = vadd.f32 %v3370, %v3636
      %v3761 = vadd.f32 %v3371, %v3641
      %v3762 = vadd.f32 %v3372, %v3644
      %v3763 = vadd.f32 %v3373, %v3649
      %v3764 = vadd.f32 %v3374, %v3652
      %v3765 = vadd.f32 %v3375, %v3657
      %v3766 = vadd.f32 %v3376, %v3660
      %v3767 = vadd.f32 %v3377, %v3665
      %v3768 = vadd.f32 %v3378, %v3668
      %v3769 = vadd.f32 %v3379, %v3673
      %v3770 = vadd.f32 %v3380, %v3676
      %v3771 = vadd.f32 %v3381, %v3681
      %v3772 = vadd.f32 %v3382, %v3684
      %v3773 = vadd.f32 %v3383, %v3689
      %v3774 = vadd.f32 %v3384, %v3692
      %v3775 = vadd.f32 %v3385, %v3697
      %v3776 = vadd.f32 %v3386, %v3700
      %v3777 = vadd.f32 %v3387, %v3705
      %v3778 = vadd.f32 %v3388, %v3708
      %v3779 = vadd.f32 %v3389, %v3713
      %v3780 = vadd.f32 %v3390, %v3716
      %v3781 = vadd.f32 %v3391, %v3721
      %v3782 = vadd.f32 %v3392, %v3724
      %v3783 = vadd.f32 %v3393, %v3729
      %v3784 = vadd.f32 %v3394, %v3732
      %v3785 = vadd.f32 %v3395, %v3737
      %v3786 = vadd.f32 %v3396, %v3740
      %v3787 = vadd.f32 %v3397, %v3745
      %v3788 = vadd.f32 %v3398, %v3748
      %v3789 = vadd.f32 %v3399, %v3753
      %v3790 = vadd.f32 %v3400, %v3756
      %v3791 = vld [vmem:[%s3404] sm:$0xf]
      %v3792 = vld [vmem:[%s3404 + $0x4] sm:$0xf]
      %v3793 = vld [vmem:[%s3404 + $0x8] sm:$0x1]
      %v3794 = vld [vmem:[%s3404 + $0xc] sm:$0xf]
      %v3795 = vld [vmem:[%s3404 + $0x10] sm:$0xf]
      %v3796 = vld [vmem:[%s3404 + $0x14] sm:$0x1]
      %v3797 = vld [vmem:[%s3404 + $0x18] sm:$0xf]
      %v3798 = vld [vmem:[%s3404 + $0x1c] sm:$0xf]
      %v3799 = vld [vmem:[%s3404 + $0x20] sm:$0x1]
      %v3800 = vld [vmem:[%s3404 + $0x24] sm:$0xf]
      %v3801 = vld [vmem:[%s3404 + $0x28] sm:$0xf]
      %v3802 = vld [vmem:[%s3404 + $0x2c] sm:$0x1]
      %v3803 = vld [vmem:[%s3404 + $0x30] sm:$0xf]
      %v3804 = vld [vmem:[%s3404 + $0x34] sm:$0xf]
      %v3805 = vld [vmem:[%s3404 + $0x38] sm:$0x1]
      %v3806 = vld [vmem:[%s3404 + $0x3c] sm:$0xf]
      %v3807 = vld [vmem:[%s3404 + $0x40] sm:$0xf]
      %v3808 = vld [vmem:[%s3404 + $0x44] sm:$0x1]
      %v3809 = vld [vmem:[%s3404 + $0x48] sm:$0xf]
      %v3810 = vld [vmem:[%s3404 + $0x4c] sm:$0xf]
      %v3811 = vld [vmem:[%s3404 + $0x50] sm:$0x1]
      %v3812 = vld [vmem:[%s3404 + $0x54] sm:$0xf]
      %v3813 = vld [vmem:[%s3404 + $0x58] sm:$0xf]
      %v3814 = vld [vmem:[%s3404 + $0x5c] sm:$0x1]
      %v3815 = vld [vmem:[%s3404 + $0x60] sm:$0xf]
      %v3816 = vld [vmem:[%s3404 + $0x64] sm:$0xf]
      %v3817 = vld [vmem:[%s3404 + $0x68] sm:$0x1]
      %v3818 = vld [vmem:[%s3404 + $0x6c] sm:$0xf]
      %v3819 = vld [vmem:[%s3404 + $0x70] sm:$0xf]
      %v3820 = vld [vmem:[%s3404 + $0x74] sm:$0x1]
      %v3821 = vld [vmem:[%s3404 + $0x78] sm:$0xf]
      %v3822 = vld [vmem:[%s3404 + $0x7c] sm:$0xf]
      %v3823 = vld [vmem:[%s3404 + $0x80] sm:$0x1]
      %v3824 = vld [vmem:[%s3404 + $0x84] sm:$0xf]
      %v3825 = vld [vmem:[%s3404 + $0x88] sm:$0xf]
      %v3826 = vld [vmem:[%s3404 + $0x8c] sm:$0x1]
      %v3827 = vld [vmem:[%s3404 + $0x90] sm:$0xf]
      %v3828 = vld [vmem:[%s3404 + $0x94] sm:$0xf]
      %v3829 = vld [vmem:[%s3404 + $0x98] sm:$0x1]
      %v3830 = vld [vmem:[%s3404 + $0x9c] sm:$0xf]
      %v3831 = vld [vmem:[%s3404 + $0xa0] sm:$0xf]
      %v3832 = vld [vmem:[%s3404 + $0xa4] sm:$0x1]
      %v3833 = vld [vmem:[%s3404 + $0xa8] sm:$0xf]
      %v3834 = vld [vmem:[%s3404 + $0xac] sm:$0xf]
      %v3835 = vld [vmem:[%s3404 + $0xb0] sm:$0x1]
      %v3836 = vld [vmem:[%s3404 + $0xb4] sm:$0xf]
      %v3837 = vld [vmem:[%s3404 + $0xb8] sm:$0xf]
      %v3838 = vld [vmem:[%s3404 + $0xbc] sm:$0x1]
      %v3840 = vshrl.u32 %v3791, 16
      %v3842 = vrot.slane %v3840, 4
      %v3843 = vshll.u32 %v3791, 16
      %v3845 = vrot.slane %v3843, 5
      %v3846 = vor.u32 %v3842, %v3845
      %v3847 = vrot.slane %v3846, 4
      %v3849 = vshll.u32 %v3792, 16
      %v3851 = vrot.slane %v3849, 5
      %v3852 = vsel %vm294, %v3847, %v3851
      %v3853 = vshrl.u32 %v3792, 16
      %v3855 = vrot.slane %v3853, 4
      %v3856 = vor.u32 %v3855, %v3851
      %v3857 = vrot.slane %v3856, 4
      %v3859 = vshll.u32 %v3793, 16
      %v3861 = vrot.slane %v3859, 5
      %v3862 = vsel %vm294, %v3857, %v3861
      %v3864 = vshrl.u32 %v3794, 16
      %v3866 = vrot.slane %v3864, 4
      %v3867 = vshll.u32 %v3794, 16
      %v3869 = vrot.slane %v3867, 5
      %v3870 = vor.u32 %v3866, %v3869
      %v3871 = vrot.slane %v3870, 4
      %v3873 = vshll.u32 %v3795, 16
      %v3875 = vrot.slane %v3873, 5
      %v3876 = vsel %vm294, %v3871, %v3875
      %v3877 = vshrl.u32 %v3795, 16
      %v3879 = vrot.slane %v3877, 4
      %v3880 = vor.u32 %v3879, %v3875
      %v3881 = vrot.slane %v3880, 4
      %v3883 = vshll.u32 %v3796, 16
      %v3885 = vrot.slane %v3883, 5
      %v3886 = vsel %vm294, %v3881, %v3885
      %v3888 = vshrl.u32 %v3797, 16
      %v3890 = vrot.slane %v3888, 4
      %v3891 = vshll.u32 %v3797, 16
      %v3893 = vrot.slane %v3891, 5
      %v3894 = vor.u32 %v3890, %v3893
      %v3895 = vrot.slane %v3894, 4
      %v3897 = vshll.u32 %v3798, 16
      %v3899 = vrot.slane %v3897, 5
      %v3900 = vsel %vm294, %v3895, %v3899
      %v3901 = vshrl.u32 %v3798, 16
      %v3903 = vrot.slane %v3901, 4
      %v3904 = vor.u32 %v3903, %v3899
      %v3905 = vrot.slane %v3904, 4
      %v3907 = vshll.u32 %v3799, 16
      %v3909 = vrot.slane %v3907, 5
      %v3910 = vsel %vm294, %v3905, %v3909
      %v3912 = vshrl.u32 %v3800, 16
      %v3914 = vrot.slane %v3912, 4
      %v3915 = vshll.u32 %v3800, 16
      %v3917 = vrot.slane %v3915, 5
      %v3918 = vor.u32 %v3914, %v3917
      %v3919 = vrot.slane %v3918, 4
      %v3921 = vshll.u32 %v3801, 16
      %v3923 = vrot.slane %v3921, 5
      %v3924 = vsel %vm294, %v3919, %v3923
      %v3925 = vshrl.u32 %v3801, 16
      %v3927 = vrot.slane %v3925, 4
      %v3928 = vor.u32 %v3927, %v3923
      %v3929 = vrot.slane %v3928, 4
      %v3931 = vshll.u32 %v3802, 16
      %v3933 = vrot.slane %v3931, 5
      %v3934 = vsel %vm294, %v3929, %v3933
      %v3936 = vshrl.u32 %v3803, 16
      %v3938 = vrot.slane %v3936, 4
      %v3939 = vshll.u32 %v3803, 16
      %v3941 = vrot.slane %v3939, 5
      %v3942 = vor.u32 %v3938, %v3941
      %v3943 = vrot.slane %v3942, 4
      %v3945 = vshll.u32 %v3804, 16
      %v3947 = vrot.slane %v3945, 5
      %v3948 = vsel %vm294, %v3943, %v3947
      %v3949 = vshrl.u32 %v3804, 16
      %v3951 = vrot.slane %v3949, 4
      %v3952 = vor.u32 %v3951, %v3947
      %v3953 = vrot.slane %v3952, 4
      %v3955 = vshll.u32 %v3805, 16
      %v3957 = vrot.slane %v3955, 5
      %v3958 = vsel %vm294, %v3953, %v3957
      %v3960 = vshrl.u32 %v3806, 16
      %v3962 = vrot.slane %v3960, 4
      %v3963 = vshll.u32 %v3806, 16
      %v3965 = vrot.slane %v3963, 5
      %v3966 = vor.u32 %v3962, %v3965
      %v3967 = vrot.slane %v3966, 4
      %v3969 = vshll.u32 %v3807, 16
      %v3971 = vrot.slane %v3969, 5
      %v3972 = vsel %vm294, %v3967, %v3971
      %v3973 = vshrl.u32 %v3807, 16
      %v3975 = vrot.slane %v3973, 4
      %v3976 = vor.u32 %v3975, %v3971
      %v3977 = vrot.slane %v3976, 4
      %v3979 = vshll.u32 %v3808, 16
      %v3981 = vrot.slane %v3979, 5
      %v3982 = vsel %vm294, %v3977, %v3981
      %v3984 = vshrl.u32 %v3809, 16
      %v3986 = vrot.slane %v3984, 4
      %v3987 = vshll.u32 %v3809, 16
      %v3989 = vrot.slane %v3987, 5
      %v3990 = vor.u32 %v3986, %v3989
      %v3991 = vrot.slane %v3990, 4
      %v3993 = vshll.u32 %v3810, 16
      %v3995 = vrot.slane %v3993, 5
      %v3996 = vsel %vm294, %v3991, %v3995
      %v3997 = vshrl.u32 %v3810, 16
      %v3999 = vrot.slane %v3997, 4
      %v4000 = vor.u32 %v3999, %v3995
      %v4001 = vrot.slane %v4000, 4
      %v4003 = vshll.u32 %v3811, 16
      %v4005 = vrot.slane %v4003, 5
      %v4006 = vsel %vm294, %v4001, %v4005
      %v4008 = vshrl.u32 %v3812, 16
      %v4010 = vrot.slane %v4008, 4
      %v4011 = vshll.u32 %v3812, 16
      %v4013 = vrot.slane %v4011, 5
      %v4014 = vor.u32 %v4010, %v4013
      %v4015 = vrot.slane %v4014, 4
      %v4017 = vshll.u32 %v3813, 16
      %v4019 = vrot.slane %v4017, 5
      %v4020 = vsel %vm294, %v4015, %v4019
      %v4021 = vshrl.u32 %v3813, 16
      %v4023 = vrot.slane %v4021, 4
      %v4024 = vor.u32 %v4023, %v4019
      %v4025 = vrot.slane %v4024, 4
      %v4027 = vshll.u32 %v3814, 16
      %v4029 = vrot.slane %v4027, 5
      %v4030 = vsel %vm294, %v4025, %v4029
      %v4032 = vshrl.u32 %v3815, 16
      %v4034 = vrot.slane %v4032, 4
      %v4035 = vshll.u32 %v3815, 16
      %v4037 = vrot.slane %v4035, 5
      %v4038 = vor.u32 %v4034, %v4037
      %v4039 = vrot.slane %v4038, 4
      %v4041 = vshll.u32 %v3816, 16
      %v4043 = vrot.slane %v4041, 5
      %v4044 = vsel %vm294, %v4039, %v4043
      %v4045 = vshrl.u32 %v3816, 16
      %v4047 = vrot.slane %v4045, 4
      %v4048 = vor.u32 %v4047, %v4043
      %v4049 = vrot.slane %v4048, 4
      %v4051 = vshll.u32 %v3817, 16
      %v4053 = vrot.slane %v4051, 5
      %v4054 = vsel %vm294, %v4049, %v4053
      %v4056 = vshrl.u32 %v3818, 16
      %v4058 = vrot.slane %v4056, 4
      %v4059 = vshll.u32 %v3818, 16
      %v4061 = vrot.slane %v4059, 5
      %v4062 = vor.u32 %v4058, %v4061
      %v4063 = vrot.slane %v4062, 4
      %v4065 = vshll.u32 %v3819, 16
      %v4067 = vrot.slane %v4065, 5
      %v4068 = vsel %vm294, %v4063, %v4067
      %v4069 = vshrl.u32 %v3819, 16
      %v4071 = vrot.slane %v4069, 4
      %v4072 = vor.u32 %v4071, %v4067
      %v4073 = vrot.slane %v4072, 4
      %v4075 = vshll.u32 %v3820, 16
      %v4077 = vrot.slane %v4075, 5
      %v4078 = vsel %vm294, %v4073, %v4077
      %v4080 = vshrl.u32 %v3821, 16
      %v4082 = vrot.slane %v4080, 4
      %v4083 = vshll.u32 %v3821, 16
      %v4085 = vrot.slane %v4083, 5
      %v4086 = vor.u32 %v4082, %v4085
      %v4087 = vrot.slane %v4086, 4
      %v4089 = vshll.u32 %v3822, 16
      %v4091 = vrot.slane %v4089, 5
      %v4092 = vsel %vm294, %v4087, %v4091
      %v4093 = vshrl.u32 %v3822, 16
      %v4095 = vrot.slane %v4093, 4
      %v4096 = vor.u32 %v4095, %v4091
      %v4097 = vrot.slane %v4096, 4
      %v4099 = vshll.u32 %v3823, 16
      %v4101 = vrot.slane %v4099, 5
      %v4102 = vsel %vm294, %v4097, %v4101
      %v4104 = vshrl.u32 %v3824, 16
      %v4106 = vrot.slane %v4104, 4
      %v4107 = vshll.u32 %v3824, 16
      %v4109 = vrot.slane %v4107, 5
      %v4110 = vor.u32 %v4106, %v4109
      %v4111 = vrot.slane %v4110, 4
      %v4113 = vshll.u32 %v3825, 16
      %v4115 = vrot.slane %v4113, 5
      %v4116 = vsel %vm294, %v4111, %v4115
      %v4117 = vshrl.u32 %v3825, 16
      %v4119 = vrot.slane %v4117, 4
      %v4120 = vor.u32 %v4119, %v4115
      %v4121 = vrot.slane %v4120, 4
      %v4123 = vshll.u32 %v3826, 16
      %v4125 = vrot.slane %v4123, 5
      %v4126 = vsel %vm294, %v4121, %v4125
      %v4128 = vshrl.u32 %v3827, 16
      %v4130 = vrot.slane %v4128, 4
      %v4131 = vshll.u32 %v3827, 16
      %v4133 = vrot.slane %v4131, 5
      %v4134 = vor.u32 %v4130, %v4133
      %v4135 = vrot.slane %v4134, 4
      %v4137 = vshll.u32 %v3828, 16
      %v4139 = vrot.slane %v4137, 5
      %v4140 = vsel %vm294, %v4135, %v4139
      %v4141 = vshrl.u32 %v3828, 16
      %v4143 = vrot.slane %v4141, 4
      %v4144 = vor.u32 %v4143, %v4139
      %v4145 = vrot.slane %v4144, 4
      %v4147 = vshll.u32 %v3829, 16
      %v4149 = vrot.slane %v4147, 5
      %v4150 = vsel %vm294, %v4145, %v4149
      %v4152 = vshrl.u32 %v3830, 16
      %v4154 = vrot.slane %v4152, 4
      %v4155 = vshll.u32 %v3830, 16
      %v4157 = vrot.slane %v4155, 5
      %v4158 = vor.u32 %v4154, %v4157
      %v4159 = vrot.slane %v4158, 4
      %v4161 = vshll.u32 %v3831, 16
      %v4163 = vrot.slane %v4161, 5
      %v4164 = vsel %vm294, %v4159, %v4163
      %v4165 = vshrl.u32 %v3831, 16
      %v4167 = vrot.slane %v4165, 4
      %v4168 = vor.u32 %v4167, %v4163
      %v4169 = vrot.slane %v4168, 4
      %v4171 = vshll.u32 %v3832, 16
      %v4173 = vrot.slane %v4171, 5
      %v4174 = vsel %vm294, %v4169, %v4173
      %v4176 = vshrl.u32 %v3833, 16
      %v4178 = vrot.slane %v4176, 4
      %v4179 = vshll.u32 %v3833, 16
      %v4181 = vrot.slane %v4179, 5
      %v4182 = vor.u32 %v4178, %v4181
      %v4183 = vrot.slane %v4182, 4
      %v4185 = vshll.u32 %v3834, 16
      %v4187 = vrot.slane %v4185, 5
      %v4188 = vsel %vm294, %v4183, %v4187
      %v4189 = vshrl.u32 %v3834, 16
      %v4191 = vrot.slane %v4189, 4
      %v4192 = vor.u32 %v4191, %v4187
      %v4193 = vrot.slane %v4192, 4
      %v4195 = vshll.u32 %v3835, 16
      %v4197 = vrot.slane %v4195, 5
      %v4198 = vsel %vm294, %v4193, %v4197
      %v4200 = vshrl.u32 %v3836, 16
      %v4202 = vrot.slane %v4200, 4
      %v4203 = vshll.u32 %v3836, 16
      %v4205 = vrot.slane %v4203, 5
      %v4206 = vor.u32 %v4202, %v4205
      %v4207 = vrot.slane %v4206, 4
      %v4209 = vshll.u32 %v3837, 16
      %v4211 = vrot.slane %v4209, 5
      %v4212 = vsel %vm294, %v4207, %v4211
      %v4213 = vshrl.u32 %v3837, 16
      %v4215 = vrot.slane %v4213, 4
      %v4216 = vor.u32 %v4215, %v4211
      %v4217 = vrot.slane %v4216, 4
      %v4219 = vshll.u32 %v3838, 16
      %v4221 = vrot.slane %v4219, 5
      %v4222 = vsel %vm294, %v4217, %v4221
      %s4223 = scalar_lea.vmem %s1, 448
      %v4224 = vld [vmem:[%s4223] sm:$0xf]
      %v4225 = vld [vmem:[%s4223 + $0x4] sm:$0xf]
      %v4226 = vld [vmem:[%s4223 + $0x8] sm:$0xf]
      %v4227 = vld [vmem:[%s4223 + $0xc] sm:$0xf]
      %v4228 = vld [vmem:[%s4223 + $0x10] sm:$0xf]
      %v4229 = vld [vmem:[%s4223 + $0x14] sm:$0xf]
      %v4230 = vld [vmem:[%s4223 + $0x18] sm:$0xf]
      %v4231 = vld [vmem:[%s4223 + $0x1c] sm:$0xf]
      %v4232 = vld [vmem:[%s4223 + $0x20] sm:$0xf]
      %v4233 = vld [vmem:[%s4223 + $0x24] sm:$0xf]
      %v4234 = vld [vmem:[%s4223 + $0x28] sm:$0xf]
      %v4235 = vld [vmem:[%s4223 + $0x2c] sm:$0xf]
      %v4236 = vld [vmem:[%s4223 + $0x30] sm:$0xf]
      %v4237 = vld [vmem:[%s4223 + $0x34] sm:$0xf]
      %v4238 = vld [vmem:[%s4223 + $0x38] sm:$0xf]
      %v4239 = vld [vmem:[%s4223 + $0x3c] sm:$0xf]
      %v4240 = vunpack.c.l.b16 %v3852
      %v4241 = vunpack.c.l.b16 %v3862
      %v4242 = vunpack.c.l.b16 %v3876
      %v4243 = vunpack.c.l.b16 %v3886
      %v4244 = vunpack.c.l.b16 %v3900
      %v4245 = vunpack.c.l.b16 %v3910
      %v4246 = vunpack.c.l.b16 %v3924
      %v4247 = vunpack.c.l.b16 %v3934
      %v4248 = vunpack.c.l.b16 %v3948
      %v4249 = vunpack.c.l.b16 %v3958
      %v4250 = vunpack.c.l.b16 %v3972
      %v4251 = vunpack.c.l.b16 %v3982
      %v4252 = vunpack.c.l.b16 %v3996
      %v4253 = vunpack.c.l.b16 %v4006
      %v4254 = vunpack.c.l.b16 %v4020
      %v4255 = vunpack.c.l.b16 %v4030
      %v4256 = vunpack.c.l.b16 %v4044
      %v4257 = vunpack.c.l.b16 %v4054
      %v4258 = vunpack.c.l.b16 %v4068
      %v4259 = vunpack.c.l.b16 %v4078
      %v4260 = vunpack.c.l.b16 %v4092
      %v4261 = vunpack.c.l.b16 %v4102
      %v4262 = vunpack.c.l.b16 %v4116
      %v4263 = vunpack.c.l.b16 %v4126
      %v4264 = vunpack.c.l.b16 %v4140
      %v4265 = vunpack.c.l.b16 %v4150
      %v4266 = vunpack.c.l.b16 %v4164
      %v4267 = vunpack.c.l.b16 %v4174
      %v4268 = vunpack.c.l.b16 %v4188
      %v4269 = vunpack.c.l.b16 %v4198
      %v4270 = vunpack.c.l.b16 %v4212
      %v4271 = vunpack.c.l.b16 %v4222
      %v4272 = vpack.c.b16 %v4241, %v4240
      %v4273 = vpack.c.b16 %v4243, %v4242
      %v4274 = vpack.c.b16 %v4245, %v4244
      %v4275 = vpack.c.b16 %v4247, %v4246
      %v4276 = vpack.c.b16 %v4249, %v4248
      %v4277 = vpack.c.b16 %v4251, %v4250
      %v4278 = vpack.c.b16 %v4253, %v4252
      %v4279 = vpack.c.b16 %v4255, %v4254
      %v4280 = vpack.c.b16 %v4257, %v4256
      %v4281 = vpack.c.b16 %v4259, %v4258
      %v4282 = vpack.c.b16 %v4261, %v4260
      %v4283 = vpack.c.b16 %v4263, %v4262
      %v4284 = vpack.c.b16 %v4265, %v4264
      %v4285 = vpack.c.b16 %v4267, %v4266
      %v4286 = vpack.c.b16 %v4269, %v4268
      %v4287 = vpack.c.b16 %v4271, %v4270
      %v4320 = vunpack.c.l.b16 %v4224
      %v4321 = vunpack.c.l.b16 %v4225
      %v4322 = vunpack.c.l.b16 %v4226
      %v4323 = vunpack.c.l.b16 %v4227
      %v4324 = vunpack.c.l.b16 %v4228
      %v4325 = vunpack.c.l.b16 %v4229
      %v4326 = vunpack.c.l.b16 %v4230
      %v4327 = vunpack.c.l.b16 %v4231
      %v4328 = vunpack.c.l.b16 %v4232
      %v4329 = vunpack.c.l.b16 %v4233
      %v4330 = vunpack.c.l.b16 %v4234
      %v4331 = vunpack.c.l.b16 %v4235
      %v4332 = vunpack.c.l.b16 %v4236
      %v4333 = vunpack.c.l.b16 %v4237
      %v4334 = vunpack.c.l.b16 %v4238
      %v4335 = vunpack.c.l.b16 %v4239
      %v4336 = vpack.c.b16 %v4321, %v4320
      %v4337 = vpack.c.b16 %v4323, %v4322
      %v4338 = vpack.c.b16 %v4325, %v4324
      %v4339 = vpack.c.b16 %v4327, %v4326
      %v4340 = vpack.c.b16 %v4329, %v4328
      %v4341 = vpack.c.b16 %v4331, %v4330
      %v4342 = vpack.c.b16 %v4333, %v4332
      %v4343 = vpack.c.b16 %v4335, %v4334
      %4352 = vmatprep.subr.bf16.mxu0 0
      %4353 = vmatpush1.bf16.msra.mxu0 %v4336
      %4354 = vmatprep.subr.bf16.mxu0 0
      %4355 = vmatpush1.bf16.msra.mxu0 %v4337
      %4356 = vmatprep.subr.bf16.mxu0 0
      %4357 = vmatpush1.bf16.msra.mxu0 %v4338
      %4358 = vmatprep.subr.bf16.mxu0 0
      %4359 = vmatpush1.bf16.msra.mxu0 %v4339
      %4360 = vmatprep.subr.bf16.mxu0 0
      %4361 = vmatpush1.bf16.msra.mxu0 %v4340
      %4362 = vmatprep.subr.bf16.mxu0 0
      %4363 = vmatpush1.bf16.msra.mxu0 %v4341
      %4364 = vmatprep.subr.bf16.mxu0 0
      %4365 = vmatpush1.bf16.msra.mxu0 %v4342
      %4366 = vmatprep.subr.bf16.mxu0 0
      %4367 = vmatpush1.bf16.msra.mxu0 %v4343
      %4368 = vmatprep.subr.bf16.mxu0 0
      %4369 = vmatpush1.bf16.msra.mxu0 0
      %4370 = vmatprep.subr.bf16.mxu0 0
      %4371 = vmatpush1.bf16.msra.mxu0 0
      %4372 = vmatprep.subr.bf16.mxu0 0
      %4373 = vmatpush1.bf16.msra.mxu0 0
      %4374 = vmatprep.subr.bf16.mxu0 0
      %4375 = vmatpush1.bf16.msra.mxu0 0
      %4376 = vmatprep.subr.bf16.mxu0 0
      %4377 = vmatpush1.bf16.msra.mxu0 0
      %4378 = vmatprep.subr.bf16.mxu0 0
      %4379 = vmatpush1.bf16.msra.mxu0 0
      %4380 = vmatprep.subr.bf16.mxu0 0
      %4381 = vmatpush1.bf16.msra.mxu0 0
      %4382 = vmatprep.subr.bf16.mxu0 0
      %4383 = vmatpush1.bf16.msra.mxu0 0
      %4384 = vmatprep.mubr.bf16.mxu0 0
      %4385 = vmatmul.mubr.bf16.gmra.mrb[0].mxu0 %v4272
      %v4386 = vpop.f32.mrb[0].mxu0
      %v4387 = vadd.f32 0.0, %v4386
      %v4388 = vpop.f32.mrb[0].mxu0
      %v4389 = vpop.f32.mrb[0].mxu0
      %v4390 = vadd.f32 0.0, %v4389
      %v4391 = vpop.f32.mrb[0].mxu0
      %4392 = vmatprep.mubr.bf16.mxu0 0
      %4393 = vmatmul.mubr.bf16.gmra.mrb[0].mxu0 %v4273
      %v4394 = vpop.f32.mrb[0].mxu0
      %v4395 = vadd.f32 0.0, %v4394
      %v4396 = vpop.f32.mrb[0].mxu0
      %v4397 = vpop.f32.mrb[0].mxu0
      %v4398 = vadd.f32 0.0, %v4397
      %v4399 = vpop.f32.mrb[0].mxu0
      %4400 = vmatprep.mubr.bf16.mxu0 0
      %4401 = vmatmul.mubr.bf16.gmra.mrb[0].mxu0 %v4274
      %v4402 = vpop.f32.mrb[0].mxu0
      %v4403 = vadd.f32 0.0, %v4402
      %v4404 = vpop.f32.mrb[0].mxu0
      %v4405 = vpop.f32.mrb[0].mxu0
      %v4406 = vadd.f32 0.0, %v4405
      %v4407 = vpop.f32.mrb[0].mxu0
      %4408 = vmatprep.mubr.bf16.mxu0 0
      %4409 = vmatmul.mubr.bf16.gmra.mrb[0].mxu0 %v4275
      %v4410 = vpop.f32.mrb[0].mxu0
      %v4411 = vadd.f32 0.0, %v4410
      %v4412 = vpop.f32.mrb[0].mxu0
      %v4413 = vpop.f32.mrb[0].mxu0
      %v4414 = vadd.f32 0.0, %v4413
      %v4415 = vpop.f32.mrb[0].mxu0
      %4416 = vmatprep.mubr.bf16.mxu0 0
      %4417 = vmatmul.mubr.bf16.gmra.mrb[0].mxu0 %v4276
      %v4418 = vpop.f32.mrb[0].mxu0
      %v4419 = vadd.f32 0.0, %v4418
      %v4420 = vpop.f32.mrb[0].mxu0
      %v4421 = vpop.f32.mrb[0].mxu0
      %v4422 = vadd.f32 0.0, %v4421
      %v4423 = vpop.f32.mrb[0].mxu0
      %4424 = vmatprep.mubr.bf16.mxu0 0
      %4425 = vmatmul.mubr.bf16.gmra.mrb[0].mxu0 %v4277
      %v4426 = vpop.f32.mrb[0].mxu0
      %v4427 = vadd.f32 0.0, %v4426
      %v4428 = vpop.f32.mrb[0].mxu0
      %v4429 = vpop.f32.mrb[0].mxu0
      %v4430 = vadd.f32 0.0, %v4429
      %v4431 = vpop.f32.mrb[0].mxu0
      %4432 = vmatprep.mubr.bf16.mxu0 0
      %4433 = vmatmul.mubr.bf16.gmra.mrb[0].mxu0 %v4278
      %v4434 = vpop.f32.mrb[0].mxu0
      %v4435 = vadd.f32 0.0, %v4434
      %v4436 = vpop.f32.mrb[0].mxu0
      %v4437 = vpop.f32.mrb[0].mxu0
      %v4438 = vadd.f32 0.0, %v4437
      %v4439 = vpop.f32.mrb[0].mxu0
      %4440 = vmatprep.mubr.bf16.mxu0 0
      %4441 = vmatmul.mubr.bf16.gmra.mrb[0].mxu0 %v4279
      %v4442 = vpop.f32.mrb[0].mxu0
      %v4443 = vadd.f32 0.0, %v4442
      %v4444 = vpop.f32.mrb[0].mxu0
      %v4445 = vpop.f32.mrb[0].mxu0
      %v4446 = vadd.f32 0.0, %v4445
      %v4447 = vpop.f32.mrb[0].mxu0
      %4448 = vmatprep.mubr.bf16.mxu0 0
      %4449 = vmatmul.mubr.bf16.gmra.mrb[0].mxu0 %v4280
      %v4450 = vpop.f32.mrb[0].mxu0
      %v4451 = vadd.f32 0.0, %v4450
      %v4452 = vpop.f32.mrb[0].mxu0
      %v4453 = vpop.f32.mrb[0].mxu0
      %v4454 = vadd.f32 0.0, %v4453
      %v4455 = vpop.f32.mrb[0].mxu0
      %4456 = vmatprep.mubr.bf16.mxu0 0
      %4457 = vmatmul.mubr.bf16.gmra.mrb[0].mxu0 %v4281
      %v4458 = vpop.f32.mrb[0].mxu0
      %v4459 = vadd.f32 0.0, %v4458
      %v4460 = vpop.f32.mrb[0].mxu0
      %v4461 = vpop.f32.mrb[0].mxu0
      %v4462 = vadd.f32 0.0, %v4461
      %v4463 = vpop.f32.mrb[0].mxu0
      %4464 = vmatprep.mubr.bf16.mxu0 0
      %4465 = vmatmul.mubr.bf16.gmra.mrb[0].mxu0 %v4282
      %v4466 = vpop.f32.mrb[0].mxu0
      %v4467 = vadd.f32 0.0, %v4466
      %v4468 = vpop.f32.mrb[0].mxu0
      %v4469 = vpop.f32.mrb[0].mxu0
      %v4470 = vadd.f32 0.0, %v4469
      %v4471 = vpop.f32.mrb[0].mxu0
      %4472 = vmatprep.mubr.bf16.mxu0 0
      %4473 = vmatmul.mubr.bf16.gmra.mrb[0].mxu0 %v4283
      %v4474 = vpop.f32.mrb[0].mxu0
      %v4475 = vadd.f32 0.0, %v4474
      %v4476 = vpop.f32.mrb[0].mxu0
      %v4477 = vpop.f32.mrb[0].mxu0
      %v4478 = vadd.f32 0.0, %v4477
      %v4479 = vpop.f32.mrb[0].mxu0
      %4480 = vmatprep.mubr.bf16.mxu0 0
      %4481 = vmatmul.mubr.bf16.gmra.mrb[0].mxu0 %v4284
      %v4482 = vpop.f32.mrb[0].mxu0
      %v4483 = vadd.f32 0.0, %v4482
      %v4484 = vpop.f32.mrb[0].mxu0
      %v4485 = vpop.f32.mrb[0].mxu0
      %v4486 = vadd.f32 0.0, %v4485
      %v4487 = vpop.f32.mrb[0].mxu0
      %4488 = vmatprep.mubr.bf16.mxu0 0
      %4489 = vmatmul.mubr.bf16.gmra.mrb[0].mxu0 %v4285
      %v4490 = vpop.f32.mrb[0].mxu0
      %v4491 = vadd.f32 0.0, %v4490
      %v4492 = vpop.f32.mrb[0].mxu0
      %v4493 = vpop.f32.mrb[0].mxu0
      %v4494 = vadd.f32 0.0, %v4493
      %v4495 = vpop.f32.mrb[0].mxu0
      %4496 = vmatprep.mubr.bf16.mxu0 0
      %4497 = vmatmul.mubr.bf16.gmra.mrb[0].mxu0 %v4286
      %v4498 = vpop.f32.mrb[0].mxu0
      %v4499 = vadd.f32 0.0, %v4498
      %v4500 = vpop.f32.mrb[0].mxu0
      %v4501 = vpop.f32.mrb[0].mxu0
      %v4502 = vadd.f32 0.0, %v4501
      %v4503 = vpop.f32.mrb[0].mxu0
      %4504 = vmatprep.mubr.bf16.mxu0 0
      %4505 = vmatmul.mubr.bf16.gmra.mrb[0].mxu0 %v4287
      %v4506 = vpop.f32.mrb[0].mxu0
      %v4507 = vadd.f32 0.0, %v4506
      %v4508 = vpop.f32.mrb[0].mxu0
      %v4509 = vpop.f32.mrb[0].mxu0
      %v4510 = vadd.f32 0.0, %v4509
      %v4511 = vpop.f32.mrb[0].mxu0
      %4512 = vdwg.mxu0
      %v4513 = vadd.f32 %v3759, %v4387
      %v4514 = vadd.f32 %v3760, %v4390
      %v4515 = vadd.f32 %v3761, %v4395
      %v4516 = vadd.f32 %v3762, %v4398
      %v4517 = vadd.f32 %v3763, %v4403
      %v4518 = vadd.f32 %v3764, %v4406
      %v4519 = vadd.f32 %v3765, %v4411
      %v4520 = vadd.f32 %v3766, %v4414
      %v4521 = vadd.f32 %v3767, %v4419
      %v4522 = vadd.f32 %v3768, %v4422
      %v4523 = vadd.f32 %v3769, %v4427
      %v4524 = vadd.f32 %v3770, %v4430
      %v4525 = vadd.f32 %v3771, %v4435
      %v4526 = vadd.f32 %v3772, %v4438
      %v4527 = vadd.f32 %v3773, %v4443
      %v4528 = vadd.f32 %v3774, %v4446
      %v4529 = vadd.f32 %v3775, %v4451
      %v4530 = vadd.f32 %v3776, %v4454
      %v4531 = vadd.f32 %v3777, %v4459
      %v4532 = vadd.f32 %v3778, %v4462
      %v4533 = vadd.f32 %v3779, %v4467
      %v4534 = vadd.f32 %v3780, %v4470
      %v4535 = vadd.f32 %v3781, %v4475
      %v4536 = vadd.f32 %v3782, %v4478
      %v4537 = vadd.f32 %v3783, %v4483
      %v4538 = vadd.f32 %v3784, %v4486
      %v4539 = vadd.f32 %v3785, %v4491
      %v4540 = vadd.f32 %v3786, %v4494
      %v4541 = vadd.f32 %v3787, %v4499
      %v4542 = vadd.f32 %v3788, %v4502
      %v4543 = vadd.f32 %v3789, %v4507
      %v4544 = vadd.f32 %v3790, %v4510
      %v4545 = vld [vmem:[%s3404] sm:$0xe]
      %v4546 = vld [vmem:[%s3404 + $0xc] sm:$0xe]
      %v4547 = vld [vmem:[%s3404 + $0x18] sm:$0xe]
      %v4548 = vld [vmem:[%s3404 + $0x24] sm:$0xe]
      %v4549 = vld [vmem:[%s3404 + $0x30] sm:$0xe]
      %v4550 = vld [vmem:[%s3404 + $0x3c] sm:$0xe]
      %v4551 = vld [vmem:[%s3404 + $0x48] sm:$0xe]
      %v4552 = vld [vmem:[%s3404 + $0x54] sm:$0xe]
      %v4553 = vld [vmem:[%s3404 + $0x60] sm:$0xe]
      %v4554 = vld [vmem:[%s3404 + $0x6c] sm:$0xe]
      %v4555 = vld [vmem:[%s3404 + $0x78] sm:$0xe]
      %v4556 = vld [vmem:[%s3404 + $0x84] sm:$0xe]
      %v4557 = vld [vmem:[%s3404 + $0x90] sm:$0xe]
      %v4558 = vld [vmem:[%s3404 + $0x9c] sm:$0xe]
      %v4559 = vld [vmem:[%s3404 + $0xa8] sm:$0xe]
      %v4560 = vld [vmem:[%s3404 + $0xb4] sm:$0xe]
      %v4609 = vrot.slane %v4545, 5
      %v4610 = vrot.slane %v4609, 4
      %v4611 = vrot.slane %v3792, 5
      %v4612 = vsel %vm1324, %v4610, %v4611
      %v4613 = vrot.slane %v4611, 4
      %v4614 = vrot.slane %v3793, 5
      %v4615 = vsel %vm1324, %v4613, %v4614
      %v4616 = vrot.slane %v4546, 5
      %v4617 = vrot.slane %v4616, 4
      %v4618 = vrot.slane %v3795, 5
      %v4619 = vsel %vm1324, %v4617, %v4618
      %v4620 = vrot.slane %v4618, 4
      %v4621 = vrot.slane %v3796, 5
      %v4622 = vsel %vm1324, %v4620, %v4621
      %v4623 = vrot.slane %v4547, 5
      %v4624 = vrot.slane %v4623, 4
      %v4625 = vrot.slane %v3798, 5
      %v4626 = vsel %vm1324, %v4624, %v4625
      %v4627 = vrot.slane %v4625, 4
      %v4628 = vrot.slane %v3799, 5
      %v4629 = vsel %vm1324, %v4627, %v4628
      %v4630 = vrot.slane %v4548, 5
      %v4631 = vrot.slane %v4630, 4
      %v4632 = vrot.slane %v3801, 5
      %v4633 = vsel %vm1324, %v4631, %v4632
      %v4634 = vrot.slane %v4632, 4
      %v4635 = vrot.slane %v3802, 5
      %v4636 = vsel %vm1324, %v4634, %v4635
      %v4637 = vrot.slane %v4549, 5
      %v4638 = vrot.slane %v4637, 4
      %v4639 = vrot.slane %v3804, 5
      %v4640 = vsel %vm1324, %v4638, %v4639
      %v4641 = vrot.slane %v4639, 4
      %v4642 = vrot.slane %v3805, 5
      %v4643 = vsel %vm1324, %v4641, %v4642
      %v4644 = vrot.slane %v4550, 5
      %v4645 = vrot.slane %v4644, 4
      %v4646 = vrot.slane %v3807, 5
      %v4647 = vsel %vm1324, %v4645, %v4646
      %v4648 = vrot.slane %v4646, 4
      %v4649 = vrot.slane %v3808, 5
      %v4650 = vsel %vm1324, %v4648, %v4649
      %v4651 = vrot.slane %v4551, 5
      %v4652 = vrot.slane %v4651, 4
      %v4653 = vrot.slane %v3810, 5
      %v4654 = vsel %vm1324, %v4652, %v4653
      %v4655 = vrot.slane %v4653, 4
      %v4656 = vrot.slane %v3811, 5
      %v4657 = vsel %vm1324, %v4655, %v4656
      %v4658 = vrot.slane %v4552, 5
      %v4659 = vrot.slane %v4658, 4
      %v4660 = vrot.slane %v3813, 5
      %v4661 = vsel %vm1324, %v4659, %v4660
      %v4662 = vrot.slane %v4660, 4
      %v4663 = vrot.slane %v3814, 5
      %v4664 = vsel %vm1324, %v4662, %v4663
      %v4665 = vrot.slane %v4553, 5
      %v4666 = vrot.slane %v4665, 4
      %v4667 = vrot.slane %v3816, 5
      %v4668 = vsel %vm1324, %v4666, %v4667
      %v4669 = vrot.slane %v4667, 4
      %v4670 = vrot.slane %v3817, 5
      %v4671 = vsel %vm1324, %v4669, %v4670
      %v4672 = vrot.slane %v4554, 5
      %v4673 = vrot.slane %v4672, 4
      %v4674 = vrot.slane %v3819, 5
      %v4675 = vsel %vm1324, %v4673, %v4674
      %v4676 = vrot.slane %v4674, 4
      %v4677 = vrot.slane %v3820, 5
      %v4678 = vsel %vm1324, %v4676, %v4677
      %v4679 = vrot.slane %v4555, 5
      %v4680 = vrot.slane %v4679, 4
      %v4681 = vrot.slane %v3822, 5
      %v4682 = vsel %vm1324, %v4680, %v4681
      %v4683 = vrot.slane %v4681, 4
      %v4684 = vrot.slane %v3823, 5
      %v4685 = vsel %vm1324, %v4683, %v4684
      %v4686 = vrot.slane %v4556, 5
      %v4687 = vrot.slane %v4686, 4
      %v4688 = vrot.slane %v3825, 5
      %v4689 = vsel %vm1324, %v4687, %v4688
      %v4690 = vrot.slane %v4688, 4
      %v4691 = vrot.slane %v3826, 5
      %v4692 = vsel %vm1324, %v4690, %v4691
      %v4693 = vrot.slane %v4557, 5
      %v4694 = vrot.slane %v4693, 4
      %v4695 = vrot.slane %v3828, 5
      %v4696 = vsel %vm1324, %v4694, %v4695
      %v4697 = vrot.slane %v4695, 4
      %v4698 = vrot.slane %v3829, 5
      %v4699 = vsel %vm1324, %v4697, %v4698
      %v4700 = vrot.slane %v4558, 5
      %v4701 = vrot.slane %v4700, 4
      %v4702 = vrot.slane %v3831, 5
      %v4703 = vsel %vm1324, %v4701, %v4702
      %v4704 = vrot.slane %v4702, 4
      %v4705 = vrot.slane %v3832, 5
      %v4706 = vsel %vm1324, %v4704, %v4705
      %v4707 = vrot.slane %v4559, 5
      %v4708 = vrot.slane %v4707, 4
      %v4709 = vrot.slane %v3834, 5
      %v4710 = vsel %vm1324, %v4708, %v4709
      %v4711 = vrot.slane %v4709, 4
      %v4712 = vrot.slane %v3835, 5
      %v4713 = vsel %vm1324, %v4711, %v4712
      %v4714 = vrot.slane %v4560, 5
      %v4715 = vrot.slane %v4714, 4
      %v4716 = vrot.slane %v3837, 5
      %v4717 = vsel %vm1324, %v4715, %v4716
      %v4718 = vrot.slane %v4716, 4
      %v4719 = vrot.slane %v3838, 5
      %v4720 = vsel %vm1324, %v4718, %v4719
      %s4721 = scalar_lea.vmem %s1, 512
      %v4722 = vld [vmem:[%s4721] sm:$0xf]
      %v4723 = vld [vmem:[%s4721 + $0x4] sm:$0xf]
      %v4724 = vld [vmem:[%s4721 + $0x8] sm:$0xf]
      %v4725 = vld [vmem:[%s4721 + $0xc] sm:$0xf]
      %v4726 = vld [vmem:[%s4721 + $0x10] sm:$0xf]
      %v4727 = vld [vmem:[%s4721 + $0x14] sm:$0xf]
      %v4728 = vld [vmem:[%s4721 + $0x18] sm:$0xf]
      %v4729 = vld [vmem:[%s4721 + $0x1c] sm:$0xf]
      %v4730 = vld [vmem:[%s4721 + $0x20] sm:$0xf]
      %v4731 = vld [vmem:[%s4721 + $0x24] sm:$0xf]
      %v4732 = vld [vmem:[%s4721 + $0x28] sm:$0xf]
      %v4733 = vld [vmem:[%s4721 + $0x2c] sm:$0xf]
      %v4734 = vld [vmem:[%s4721 + $0x30] sm:$0xf]
      %v4735 = vld [vmem:[%s4721 + $0x34] sm:$0xf]
      %v4736 = vld [vmem:[%s4721 + $0x38] sm:$0xf]
      %v4737 = vld [vmem:[%s4721 + $0x3c] sm:$0xf]
      %v4738 = vunpack.c.l.b16 %v4612
      %v4739 = vunpack.c.l.b16 %v4615
      %v4740 = vunpack.c.l.b16 %v4619
      %v4741 = vunpack.c.l.b16 %v4622
      %v4742 = vunpack.c.l.b16 %v4626
      %v4743 = vunpack.c.l.b16 %v4629
      %v4744 = vunpack.c.l.b16 %v4633
      %v4745 = vunpack.c.l.b16 %v4636
      %v4746 = vunpack.c.l.b16 %v4640
      %v4747 = vunpack.c.l.b16 %v4643
      %v4748 = vunpack.c.l.b16 %v4647
      %v4749 = vunpack.c.l.b16 %v4650
      %v4750 = vunpack.c.l.b16 %v4654
      %v4751 = vunpack.c.l.b16 %v4657
      %v4752 = vunpack.c.l.b16 %v4661
      %v4753 = vunpack.c.l.b16 %v4664
      %v4754 = vunpack.c.l.b16 %v4668
      %v4755 = vunpack.c.l.b16 %v4671
      %v4756 = vunpack.c.l.b16 %v4675
      %v4757 = vunpack.c.l.b16 %v4678
      %v4758 = vunpack.c.l.b16 %v4682
      %v4759 = vunpack.c.l.b16 %v4685
      %v4760 = vunpack.c.l.b16 %v4689
      %v4761 = vunpack.c.l.b16 %v4692
      %v4762 = vunpack.c.l.b16 %v4696
      %v4763 = vunpack.c.l.b16 %v4699
      %v4764 = vunpack.c.l.b16 %v4703
      %v4765 = vunpack.c.l.b16 %v4706
      %v4766 = vunpack.c.l.b16 %v4710
      %v4767 = vunpack.c.l.b16 %v4713
      %v4768 = vunpack.c.l.b16 %v4717
      %v4769 = vunpack.c.l.b16 %v4720
      %v4770 = vpack.c.b16 %v4739, %v4738
      %v4771 = vpack.c.b16 %v4741, %v4740
      %v4772 = vpack.c.b16 %v4743, %v4742
      %v4773 = vpack.c.b16 %v4745, %v4744
      %v4774 = vpack.c.b16 %v4747, %v4746
      %v4775 = vpack.c.b16 %v4749, %v4748
      %v4776 = vpack.c.b16 %v4751, %v4750
      %v4777 = vpack.c.b16 %v4753, %v4752
      %v4778 = vpack.c.b16 %v4755, %v4754
      %v4779 = vpack.c.b16 %v4757, %v4756
      %v4780 = vpack.c.b16 %v4759, %v4758
      %v4781 = vpack.c.b16 %v4761, %v4760
      %v4782 = vpack.c.b16 %v4763, %v4762
      %v4783 = vpack.c.b16 %v4765, %v4764
      %v4784 = vpack.c.b16 %v4767, %v4766
      %v4785 = vpack.c.b16 %v4769, %v4768
      %v4818 = vunpack.c.l.b16 %v4722
      %v4819 = vunpack.c.l.b16 %v4723
      %v4820 = vunpack.c.l.b16 %v4724
      %v4821 = vunpack.c.l.b16 %v4725
      %v4822 = vunpack.c.l.b16 %v4726
      %v4823 = vunpack.c.l.b16 %v4727
      %v4824 = vunpack.c.l.b16 %v4728
      %v4825 = vunpack.c.l.b16 %v4729
      %v4826 = vunpack.c.l.b16 %v4730
      %v4827 = vunpack.c.l.b16 %v4731
      %v4828 = vunpack.c.l.b16 %v4732
      %v4829 = vunpack.c.l.b16 %v4733
      %v4830 = vunpack.c.l.b16 %v4734
      %v4831 = vunpack.c.l.b16 %v4735
      %v4832 = vunpack.c.l.b16 %v4736
      %v4833 = vunpack.c.l.b16 %v4737
      %v4834 = vpack.c.b16 %v4819, %v4818
      %v4835 = vpack.c.b16 %v4821, %v4820
      %v4836 = vpack.c.b16 %v4823, %v4822
      %v4837 = vpack.c.b16 %v4825, %v4824
      %v4838 = vpack.c.b16 %v4827, %v4826
      %v4839 = vpack.c.b16 %v4829, %v4828
      %v4840 = vpack.c.b16 %v4831, %v4830
      %v4841 = vpack.c.b16 %v4833, %v4832
      %4850 = vmatprep.subr.bf16.mxu0 0
      %4851 = vmatpush1.bf16.msra.mxu0 %v4834
      %4852 = vmatprep.subr.bf16.mxu0 0
      %4853 = vmatpush1.bf16.msra.mxu0 %v4835
      %4854 = vmatprep.subr.bf16.mxu0 0
      %4855 = vmatpush1.bf16.msra.mxu0 %v4836
      %4856 = vmatprep.subr.bf16.mxu0 0
      %4857 = vmatpush1.bf16.msra.mxu0 %v4837
      %4858 = vmatprep.subr.bf16.mxu0 0
      %4859 = vmatpush1.bf16.msra.mxu0 %v4838
      %4860 = vmatprep.subr.bf16.mxu0 0
      %4861 = vmatpush1.bf16.msra.mxu0 %v4839
      %4862 = vmatprep.subr.bf16.mxu0 0
      %4863 = vmatpush1.bf16.msra.mxu0 %v4840
      %4864 = vmatprep.subr.bf16.mxu0 0
      %4865 = vmatpush1.bf16.msra.mxu0 %v4841
      %4866 = vmatprep.subr.bf16.mxu0 0
      %4867 = vmatpush1.bf16.msra.mxu0 0
      %4868 = vmatprep.subr.bf16.mxu0 0
      %4869 = vmatpush1.bf16.msra.mxu0 0
      %4870 = vmatprep.subr.bf16.mxu0 0
      %4871 = vmatpush1.bf16.msra.mxu0 0
      %4872 = vmatprep.subr.bf16.mxu0 0
      %4873 = vmatpush1.bf16.msra.mxu0 0
      %4874 = vmatprep.subr.bf16.mxu0 0
      %4875 = vmatpush1.bf16.msra.mxu0 0
      %4876 = vmatprep.subr.bf16.mxu0 0
      %4877 = vmatpush1.bf16.msra.mxu0 0
      %4878 = vmatprep.subr.bf16.mxu0 0
      %4879 = vmatpush1.bf16.msra.mxu0 0
      %4880 = vmatprep.subr.bf16.mxu0 0
      %4881 = vmatpush1.bf16.msra.mxu0 0
      %4882 = vmatprep.mubr.bf16.mxu0 0
      %4883 = vmatmul.mubr.bf16.gmra.mrb[0].mxu0 %v4770
      %v4884 = vpop.f32.mrb[0].mxu0
      %v4885 = vadd.f32 0.0, %v4884
      %v4886 = vpop.f32.mrb[0].mxu0
      %v4887 = vpop.f32.mrb[0].mxu0
      %v4888 = vadd.f32 0.0, %v4887
      %v4889 = vpop.f32.mrb[0].mxu0
      %4890 = vmatprep.mubr.bf16.mxu0 0
      %4891 = vmatmul.mubr.bf16.gmra.mrb[0].mxu0 %v4771
      %v4892 = vpop.f32.mrb[0].mxu0
      %v4893 = vadd.f32 0.0, %v4892
      %v4894 = vpop.f32.mrb[0].mxu0
      %v4895 = vpop.f32.mrb[0].mxu0
      %v4896 = vadd.f32 0.0, %v4895
      %v4897 = vpop.f32.mrb[0].mxu0
      %4898 = vmatprep.mubr.bf16.mxu0 0
      %4899 = vmatmul.mubr.bf16.gmra.mrb[0].mxu0 %v4772
      %v4900 = vpop.f32.mrb[0].mxu0
      %v4901 = vadd.f32 0.0, %v4900
      %v4902 = vpop.f32.mrb[0].mxu0
      %v4903 = vpop.f32.mrb[0].mxu0
      %v4904 = vadd.f32 0.0, %v4903
      %v4905 = vpop.f32.mrb[0].mxu0
      %4906 = vmatprep.mubr.bf16.mxu0 0
      %4907 = vmatmul.mubr.bf16.gmra.mrb[0].mxu0 %v4773
      %v4908 = vpop.f32.mrb[0].mxu0
      %v4909 = vadd.f32 0.0, %v4908
      %v4910 = vpop.f32.mrb[0].mxu0
      %v4911 = vpop.f32.mrb[0].mxu0
      %v4912 = vadd.f32 0.0, %v4911
      %v4913 = vpop.f32.mrb[0].mxu0
      %4914 = vmatprep.mubr.bf16.mxu0 0
      %4915 = vmatmul.mubr.bf16.gmra.mrb[0].mxu0 %v4774
      %v4916 = vpop.f32.mrb[0].mxu0
      %v4917 = vadd.f32 0.0, %v4916
      %v4918 = vpop.f32.mrb[0].mxu0
      %v4919 = vpop.f32.mrb[0].mxu0
      %v4920 = vadd.f32 0.0, %v4919
      %v4921 = vpop.f32.mrb[0].mxu0
      %4922 = vmatprep.mubr.bf16.mxu0 0
      %4923 = vmatmul.mubr.bf16.gmra.mrb[0].mxu0 %v4775
      %v4924 = vpop.f32.mrb[0].mxu0
      %v4925 = vadd.f32 0.0, %v4924
      %v4926 = vpop.f32.mrb[0].mxu0
      %v4927 = vpop.f32.mrb[0].mxu0
      %v4928 = vadd.f32 0.0, %v4927
      %v4929 = vpop.f32.mrb[0].mxu0
      %4930 = vmatprep.mubr.bf16.mxu0 0
      %4931 = vmatmul.mubr.bf16.gmra.mrb[0].mxu0 %v4776
      %v4932 = vpop.f32.mrb[0].mxu0
      %v4933 = vadd.f32 0.0, %v4932
      %v4934 = vpop.f32.mrb[0].mxu0
      %v4935 = vpop.f32.mrb[0].mxu0
      %v4936 = vadd.f32 0.0, %v4935
      %v4937 = vpop.f32.mrb[0].mxu0
      %4938 = vmatprep.mubr.bf16.mxu0 0
      %4939 = vmatmul.mubr.bf16.gmra.mrb[0].mxu0 %v4777
      %v4940 = vpop.f32.mrb[0].mxu0
      %v4941 = vadd.f32 0.0, %v4940
      %v4942 = vpop.f32.mrb[0].mxu0
      %v4943 = vpop.f32.mrb[0].mxu0
      %v4944 = vadd.f32 0.0, %v4943
      %v4945 = vpop.f32.mrb[0].mxu0
      %4946 = vmatprep.mubr.bf16.mxu0 0
      %4947 = vmatmul.mubr.bf16.gmra.mrb[0].mxu0 %v4778
      %v4948 = vpop.f32.mrb[0].mxu0
      %v4949 = vadd.f32 0.0, %v4948
      %v4950 = vpop.f32.mrb[0].mxu0
      %v4951 = vpop.f32.mrb[0].mxu0
      %v4952 = vadd.f32 0.0, %v4951
      %v4953 = vpop.f32.mrb[0].mxu0
      %4954 = vmatprep.mubr.bf16.mxu0 0
      %4955 = vmatmul.mubr.bf16.gmra.mrb[0].mxu0 %v4779
      %v4956 = vpop.f32.mrb[0].mxu0
      %v4957 = vadd.f32 0.0, %v4956
      %v4958 = vpop.f32.mrb[0].mxu0
      %v4959 = vpop.f32.mrb[0].mxu0
      %v4960 = vadd.f32 0.0, %v4959
      %v4961 = vpop.f32.mrb[0].mxu0
      %4962 = vmatprep.mubr.bf16.mxu0 0
      %4963 = vmatmul.mubr.bf16.gmra.mrb[0].mxu0 %v4780
      %v4964 = vpop.f32.mrb[0].mxu0
      %v4965 = vadd.f32 0.0, %v4964
      %v4966 = vpop.f32.mrb[0].mxu0
      %v4967 = vpop.f32.mrb[0].mxu0
      %v4968 = vadd.f32 0.0, %v4967
      %v4969 = vpop.f32.mrb[0].mxu0
      %4970 = vmatprep.mubr.bf16.mxu0 0
      %4971 = vmatmul.mubr.bf16.gmra.mrb[0].mxu0 %v4781
      %v4972 = vpop.f32.mrb[0].mxu0
      %v4973 = vadd.f32 0.0, %v4972
      %v4974 = vpop.f32.mrb[0].mxu0
      %v4975 = vpop.f32.mrb[0].mxu0
      %v4976 = vadd.f32 0.0, %v4975
      %v4977 = vpop.f32.mrb[0].mxu0
      %4978 = vmatprep.mubr.bf16.mxu0 0
      %4979 = vmatmul.mubr.bf16.gmra.mrb[0].mxu0 %v4782
      %v4980 = vpop.f32.mrb[0].mxu0
      %v4981 = vadd.f32 0.0, %v4980
      %v4982 = vpop.f32.mrb[0].mxu0
      %v4983 = vpop.f32.mrb[0].mxu0
      %v4984 = vadd.f32 0.0, %v4983
      %v4985 = vpop.f32.mrb[0].mxu0
      %4986 = vmatprep.mubr.bf16.mxu0 0
      %4987 = vmatmul.mubr.bf16.gmra.mrb[0].mxu0 %v4783
      %v4988 = vpop.f32.mrb[0].mxu0
      %v4989 = vadd.f32 0.0, %v4988
      %v4990 = vpop.f32.mrb[0].mxu0
      %v4991 = vpop.f32.mrb[0].mxu0
      %v4992 = vadd.f32 0.0, %v4991
      %v4993 = vpop.f32.mrb[0].mxu0
      %4994 = vmatprep.mubr.bf16.mxu0 0
      %4995 = vmatmul.mubr.bf16.gmra.mrb[0].mxu0 %v4784
      %v4996 = vpop.f32.mrb[0].mxu0
      %v4997 = vadd.f32 0.0, %v4996
      %v4998 = vpop.f32.mrb[0].mxu0
      %v4999 = vpop.f32.mrb[0].mxu0
      %v5000 = vadd.f32 0.0, %v4999
      %v5001 = vpop.f32.mrb[0].mxu0
      %5002 = vmatprep.mubr.bf16.mxu0 0
      %5003 = vmatmul.mubr.bf16.gmra.mrb[0].mxu0 %v4785
      %v5004 = vpop.f32.mrb[0].mxu0
      %v5005 = vadd.f32 0.0, %v5004
      %v5006 = vpop.f32.mrb[0].mxu0
      %v5007 = vpop.f32.mrb[0].mxu0
      %v5008 = vadd.f32 0.0, %v5007
      %v5009 = vpop.f32.mrb[0].mxu0
      %5010 = vdwg.mxu0
      %v5011 = vadd.f32 %v4513, %v4885
      %v5012 = vadd.f32 %v4514, %v4888
      %v5013 = vadd.f32 %v4515, %v4893
      %v5014 = vadd.f32 %v4516, %v4896
      %v5015 = vadd.f32 %v4517, %v4901
      %v5016 = vadd.f32 %v4518, %v4904
      %v5017 = vadd.f32 %v4519, %v4909
      %v5018 = vadd.f32 %v4520, %v4912
      %v5019 = vadd.f32 %v4521, %v4917
      %v5020 = vadd.f32 %v4522, %v4920
      %v5021 = vadd.f32 %v4523, %v4925
      %v5022 = vadd.f32 %v4524, %v4928
      %v5023 = vadd.f32 %v4525, %v4933
      %v5024 = vadd.f32 %v4526, %v4936
      %v5025 = vadd.f32 %v4527, %v4941
      %v5026 = vadd.f32 %v4528, %v4944
      %v5027 = vadd.f32 %v4529, %v4949
      %v5028 = vadd.f32 %v4530, %v4952
      %v5029 = vadd.f32 %v4531, %v4957
      %v5030 = vadd.f32 %v4532, %v4960
      %v5031 = vadd.f32 %v4533, %v4965
      %v5032 = vadd.f32 %v4534, %v4968
      %v5033 = vadd.f32 %v4535, %v4973
      %v5034 = vadd.f32 %v4536, %v4976
      %v5035 = vadd.f32 %v4537, %v4981
      %v5036 = vadd.f32 %v4538, %v4984
      %v5037 = vadd.f32 %v4539, %v4989
      %v5038 = vadd.f32 %v4540, %v4992
      %v5039 = vadd.f32 %v4541, %v4997
      %v5040 = vadd.f32 %v4542, %v5000
      %v5041 = vadd.f32 %v4543, %v5005
      %v5042 = vadd.f32 %v4544, %v5008
      %v5043 = vld [vmem:[%s2] sm:$0x1]
      %v5045 = vlaneseq
      %v5046 = vshrl.u32 %v5045, 7
      %v5047 = vsub.s32 0, %v5046
      %v5048 = vrot.slane %v5043, %v5047
      %v5050 = vmul.f32 %v5011, %v5048
      %v5051 = vmul.f32 %v5012, %v5048
      %v5052 = vmul.f32 %v5013, %v5048
      %v5053 = vmul.f32 %v5014, %v5048
      %v5054 = vmul.f32 %v5015, %v5048
      %v5055 = vmul.f32 %v5016, %v5048
      %v5056 = vmul.f32 %v5017, %v5048
      %v5057 = vmul.f32 %v5018, %v5048
      %v5058 = vmul.f32 %v5019, %v5048
      %v5059 = vmul.f32 %v5020, %v5048
      %v5060 = vmul.f32 %v5021, %v5048
      %v5061 = vmul.f32 %v5022, %v5048
      %v5062 = vmul.f32 %v5023, %v5048
      %v5063 = vmul.f32 %v5024, %v5048
      %v5064 = vmul.f32 %v5025, %v5048
      %v5065 = vmul.f32 %v5026, %v5048
      %v5066 = vmul.f32 %v5027, %v5048
      %v5067 = vmul.f32 %v5028, %v5048
      %v5068 = vmul.f32 %v5029, %v5048
      %v5069 = vmul.f32 %v5030, %v5048
      %v5070 = vmul.f32 %v5031, %v5048
      %v5071 = vmul.f32 %v5032, %v5048
      %v5072 = vmul.f32 %v5033, %v5048
      %v5073 = vmul.f32 %v5034, %v5048
      %v5074 = vmul.f32 %v5035, %v5048
      %v5075 = vmul.f32 %v5036, %v5048
      %v5076 = vmul.f32 %v5037, %v5048
      %v5077 = vmul.f32 %v5038, %v5048
      %v5078 = vmul.f32 %v5039, %v5048
      %v5079 = vmul.f32 %v5040, %v5048
      %v5080 = vmul.f32 %v5041, %v5048
      %v5081 = vmul.f32 %v5042, %v5048
      %v5082 = vld [vmem:[%s3] sm:$0x1]
      %v5084 = vlaneseq
      %v5085 = vshrl.u32 %v5084, 7
      %v5086 = vsub.s32 0, %v5085
      %v5087 = vrot.slane %v5082, %v5086
      %v5089 = vadd.f32 %v5050, %v5087
      %v5090 = vadd.f32 %v5051, %v5087
      %v5091 = vadd.f32 %v5052, %v5087
      %v5092 = vadd.f32 %v5053, %v5087
      %v5093 = vadd.f32 %v5054, %v5087
      %v5094 = vadd.f32 %v5055, %v5087
      %v5095 = vadd.f32 %v5056, %v5087
      %v5096 = vadd.f32 %v5057, %v5087
      %v5097 = vadd.f32 %v5058, %v5087
      %v5098 = vadd.f32 %v5059, %v5087
      %v5099 = vadd.f32 %v5060, %v5087
      %v5100 = vadd.f32 %v5061, %v5087
      %v5101 = vadd.f32 %v5062, %v5087
      %v5102 = vadd.f32 %v5063, %v5087
      %v5103 = vadd.f32 %v5064, %v5087
      %v5104 = vadd.f32 %v5065, %v5087
      %v5105 = vadd.f32 %v5066, %v5087
      %v5106 = vadd.f32 %v5067, %v5087
      %v5107 = vadd.f32 %v5068, %v5087
      %v5108 = vadd.f32 %v5069, %v5087
      %v5109 = vadd.f32 %v5070, %v5087
      %v5110 = vadd.f32 %v5071, %v5087
      %v5111 = vadd.f32 %v5072, %v5087
      %v5112 = vadd.f32 %v5073, %v5087
      %v5113 = vadd.f32 %v5074, %v5087
      %v5114 = vadd.f32 %v5075, %v5087
      %v5115 = vadd.f32 %v5076, %v5087
      %v5116 = vadd.f32 %v5077, %v5087
      %v5117 = vadd.f32 %v5078, %v5087
      %v5118 = vadd.f32 %v5079, %v5087
      %v5119 = vadd.f32 %v5080, %v5087
      %v5120 = vadd.f32 %v5081, %v5087
      %5121 = vst [vmem:[%s221] sm:$0xff] %v5089
      %5122 = vst [vmem:[%s221 + $0x8] sm:$0xff] %v5090
      %5123 = vst [vmem:[%s221 + $0x10] sm:$0xff] %v5091
      %5124 = vst [vmem:[%s221 + $0x18] sm:$0xff] %v5092
      %5125 = vst [vmem:[%s221 + $0x20] sm:$0xff] %v5093
      %5126 = vst [vmem:[%s221 + $0x28] sm:$0xff] %v5094
      %5127 = vst [vmem:[%s221 + $0x30] sm:$0xff] %v5095
      %5128 = vst [vmem:[%s221 + $0x38] sm:$0xff] %v5096
      %5129 = vst [vmem:[%s221 + $0x40] sm:$0xff] %v5097
      %5130 = vst [vmem:[%s221 + $0x48] sm:$0xff] %v5098
      %5131 = vst [vmem:[%s221 + $0x50] sm:$0xff] %v5099
      %5132 = vst [vmem:[%s221 + $0x58] sm:$0xff] %v5100
      %5133 = vst [vmem:[%s221 + $0x60] sm:$0xff] %v5101
      %5134 = vst [vmem:[%s221 + $0x68] sm:$0xff] %v5102
      %5135 = vst [vmem:[%s221 + $0x70] sm:$0xff] %v5103
      %5136 = vst [vmem:[%s221 + $0x78] sm:$0xff] %v5104
      %5137 = vst [vmem:[%s221 + $0x80] sm:$0xff] %v5105
      %5138 = vst [vmem:[%s221 + $0x88] sm:$0xff] %v5106
      %5139 = vst [vmem:[%s221 + $0x90] sm:$0xff] %v5107
      %5140 = vst [vmem:[%s221 + $0x98] sm:$0xff] %v5108
      %5141 = vst [vmem:[%s221 + $0xa0] sm:$0xff] %v5109
      %5142 = vst [vmem:[%s221 + $0xa8] sm:$0xff] %v5110
      %5143 = vst [vmem:[%s221 + $0xb0] sm:$0xff] %v5111
      %5144 = vst [vmem:[%s221 + $0xb8] sm:$0xff] %v5112
      %5145 = vst [vmem:[%s221 + $0xc0] sm:$0xff] %v5113
      %5146 = vst [vmem:[%s221 + $0xc8] sm:$0xff] %v5114
      %5147 = vst [vmem:[%s221 + $0xd0] sm:$0xff] %v5115
      %5148 = vst [vmem:[%s221 + $0xd8] sm:$0xff] %v5116
      %5149 = vst [vmem:[%s221 + $0xe0] sm:$0xff] %v5117
      %5150 = vst [vmem:[%s221 + $0xe8] sm:$0xff] %v5118
      %5151 = vst [vmem:[%s221 + $0xf0] sm:$0xff] %v5119
      %5152 = vst [vmem:[%s221 + $0xf8] sm:$0xff] %v5120
      %s5153 = smul.u32 16, %s20
      %p5154 = scmp.lt.s32.totalorder %s19, 1
      %s5155 = scalar_select %p5154, %s19, 1
      %p5156 = scmp.lt.s32.totalorder %s5153, 15
      %s5157 = scalar_select %p5156, %s5153, 15
      %s5158 = smul.addr %s5157, 2
      %s5159 = smul.addr %s5155, 32
      %s5160 = sadd.s32 %s5158, %s5159
      %s5161 = smul.addr %s5160, 8
      %s5162 = scalar_lea.vmem %s4, %s5161
      // Predicated region
      $region37: #{basic_conv2d.1} parent=35 // pred_check
        %p5163 = pneg %p136
      $region38: #{basic_conv2d.1} parent=35 // pred_check_branch
        %5165 = sbr.rel (%p5163) target = $region40
      $region39: #{basic_conv2d.1} parent=35 // pred_region
        %s5166 = smul.u32 16, %s20
      $region40: #{basic_conv2d.1} parent=35 // pred_fallthru
        _
    $region36: #{basic_conv2d.1} parent=5 // pred_fallthru
      _
    %p5167 = scmp.le.s32.totalorder 2, %s10
    // Predicated region
    $region41: #{basic_conv2d.1} parent=5 // pred_check
      %p5168 = pneg %p5167
    $region42: #{basic_conv2d.1} parent=5 // pred_check_branch
      %5170 = sbr.rel (%p5168) target = $region44
    $region43: #{basic_conv2d.1} parent=5 // pred_region
      %s5171 = ssub.s32 %s10, 2
      // Predicated region
      $region45: #{basic_conv2d.1} parent=43 // pred_check
        %p5172 = pneg %p142
      $region46: #{basic_conv2d.1} parent=43 // pred_check_branch
        %5174 = sbr.rel (%p5172) target = $region48
      $region47: #{basic_conv2d.1} parent=43 // pred_region
        %s5175 = smul.u32 16, %s22
        %p5176 = scmp.lt.s32.totalorder %s21, 1
        %s5177 = scalar_select %p5176, %s21, 1
        %p5178 = scmp.lt.s32.totalorder %s5175, 15
        %s5179 = scalar_select %p5178, %s5175, 15
        %s5180 = smul.addr %s5179, 2
        %s5181 = smul.addr %s5177, 32
        %s5182 = sadd.s32 %s5180, %s5181
        %s5183 = smul.addr %s5182, 8
        %s5184 = scalar_lea.vmem %s4, %s5183
      $region48: #{basic_conv2d.1} parent=43 // pred_fallthru
        _
    $region44: #{basic_conv2d.1} parent=5 // pred_fallthru
      _
  $region6: #{basic_conv2d.1} parent=0 // loop_footer
    %s14 = sadd.s32 1, %s10
  $region7: #{basic_conv2d.1} parent=0 // loop_footer_branch
    %9 = sbr.rel target = $region3
  $region8: #{basic_conv2d.1} parent=0 // loop_exit
    _

</llo_original>
